<compile_context>
chip_gen: v7x
topology: tpu7x:2x2x1
jax: 0.10.0
libtpu: 0.0.40
codegen_flags: <defaults>
</compile_context>

<pallas_src>
import functools
import math

import jax
import jax.numpy as jnp
from jax.experimental import pallas as pl
from jax.experimental.pallas import tpu as pltpu


# ----------------------------------------------------------------------------
# In-kernel math helpers
# ----------------------------------------------------------------------------

def _erf_approx(z):
    # lax.erf has no guaranteed Mosaic lowering; Abramowitz & Stegun 7.1.26
    # rational approximation (max abs err ~1.5e-7, i.e. f32-level exact GELU).
    t = 1.0 / (1.0 + 0.3275911 * jnp.abs(z))
    poly = ((((1.061405429 * t - 1.453152027) * t + 1.421413741) * t
             - 0.284496736) * t + 0.254829592) * t
    y = 1.0 - poly * jnp.exp(-z * z)
    return jnp.where(z >= 0.0, y, -y)


def _gelu_exact(x):
    # nn.GELU() default (erf-based, approximate='none')
    return 0.5 * x * (1.0 + _erf_approx(x * 0.7071067811865476))


def _layernorm(v, w, b):
    mu = jnp.mean(v, axis=-1, keepdims=True)
    c = v - mu
    var = jnp.mean(c * c, axis=-1, keepdims=True)
    return c * jax.lax.rsqrt(var + 1e-5) * w + b


# ----------------------------------------------------------------------------
# Fused forward kernel: emb2hid + num_layers transformer blocks + action head
# ----------------------------------------------------------------------------

def _fused_forward_kernel(x_ref, weT_ref, be_ref,
                          ln1w_ref, ln1b_ref,
                          wqkv_ref, bqkv_ref, wo_ref, bo_ref,
                          ln2w_ref, ln2b_ref,
                          w1_ref, b1_ref, w2_ref, b2_ref,
                          wah_ref, bah_ref,
                          o_ref,
                          act_ref,
                          *, num_heads):
    layer = pl.program_id(1)
    n_layers = pl.num_programs(1)
    T, H = act_ref.shape
    hd = H // num_heads
    scale = 1.0 / math.sqrt(hd)

    # --- layer 0: emb2hid projection into the VMEM-resident activation -------
    @pl.when(layer == 0)
    def _():
        x_in = x_ref[0]                                              # (T, E)
        act_ref[...] = (jnp.dot(x_in, weT_ref[...],
                                preferred_element_type=jnp.float32)
                        + be_ref[...])

    x = act_ref[...]                                                 # (T, H)

    # --- attention sublayer (pre-LN, causal) ---------------------------------
    nx = _layernorm(x, ln1w_ref[0], ln1b_ref[0])
    qkv = (jnp.dot(nx, wqkv_ref[0], preferred_element_type=jnp.float32)
           + bqkv_ref[0])                                            # (T, 3H)
    q = qkv[:, 0:H]
    k = qkv[:, H:2 * H]
    v = qkv[:, 2 * H:3 * H]

    qi = jax.lax.broadcasted_iota(jnp.int32, (T, T), 0)
    ki = jax.lax.broadcasted_iota(jnp.int32, (T, T), 1)
    allow = ki <= qi                                                 # causal mask

    heads = []
    for h in range(num_heads):          # static, tiny; only inherently per-head math
        sl = slice(h * hd, (h + 1) * hd)
        qh, kh, vh = q[:, sl], k[:, sl], v[:, sl]
        s = jax.lax.dot_general(qh, kh, (((1,), (1,)), ((), ())),
                                preferred_element_type=jnp.float32) * scale
        s = jnp.where(allow, s, -1e30)
        s = s - jnp.max(s, axis=-1, keepdims=True)
        e = jnp.exp(s)
        p = e * pl.reciprocal(jnp.sum(e, axis=-1, keepdims=True), approx=True)
        heads.append(jnp.dot(p, vh, preferred_element_type=jnp.float32))
    attn_cat = jnp.concatenate(heads, axis=-1)                       # (T, H)
    attn = (jnp.dot(attn_cat, wo_ref[0], preferred_element_type=jnp.float32)
            + bo_ref[0])
    x = x + attn                       # residual (residual_dropout = 0 / eval)

    # --- MLP sublayer ---------------------------------------------------------
    nx2 = _layernorm(x, ln2w_ref[0], ln2b_ref[0])
    h1 = jnp.dot(nx2, w1_ref[0], preferred_element_type=jnp.float32) + b1_ref[0]
    h1 = _gelu_exact(h1)
    h2 = jnp.dot(h1, w2_ref[0], preferred_element_type=jnp.float32) + b2_ref[0]
    x = x + h2

    act_ref[...] = x                   # carry to next layer grid step

    # --- last layer: action head on state-token positions (rows 0::3) --------
    @pl.when(layer == n_layers - 1)
    def _():
        L = T // 3
        ri = jax.lax.broadcasted_iota(jnp.int32, (L, T), 0)
        ci = jax.lax.broadcasted_iota(jnp.int32, (L, T), 1)
        sel = (ci == 3 * ri).astype(jnp.float32)                     # (L, T) 0/1 gather
        st = jnp.dot(sel, x, preferred_element_type=jnp.float32)     # (L, H)
        logits = (jnp.dot(st, wah_ref[...], preferred_element_type=jnp.float32)
                  + bah_ref[...])                                    # (L, NA_pad)
        o_ref[0] = logits.astype(o_ref.dtype)


# ----------------------------------------------------------------------------
# One-time parameter preparation (hoisted out of the forward path)
# ----------------------------------------------------------------------------

def positional_encoding(max_len, dim):
    position = jnp.arange(max_len, dtype=jnp.float32)[:, None]
    div_term = jnp.exp(jnp.arange(0, dim, 2, dtype=jnp.float32)
                       * (-math.log(10000.0) / dim))
    pe = jnp.zeros((max_len, dim), jnp.float32)
    pe = pe.at[:, 0::2].set(jnp.sin(position * div_term))
    pe = pe.at[:, 1::2].set(jnp.cos(position * div_term))
    return pe


def init_params(key, num_states, num_actions, E, H, num_layers):
    """Parameters in PyTorch layout (weight: (out_features, in_features))."""
    keys = iter(jax.random.split(key, 64))
    nrm = lambda shape: 0.02 * jax.random.normal(next(keys), shape, jnp.float32)
    params = {
        'state_emb': nrm((num_states, E)),
        'action_emb': nrm((num_actions, E)),
        'reward_w': nrm((E, 1)), 'reward_b': jnp.zeros((E,), jnp.float32),
        'emb2hid_w': nrm((H, E)), 'emb2hid_b': jnp.zeros((H,), jnp.float32),
        'action_head_w': nrm((num_actions, H)),
        'action_head_b': jnp.zeros((num_actions,), jnp.float32),
        'blocks': [],
    }
    for _ in range(num_layers):
        params['blocks'].append({
            'ln1_w': jnp.ones((H,), jnp.float32), 'ln1_b': jnp.zeros((H,), jnp.float32),
            'in_proj_w': nrm((3 * H, H)), 'in_proj_b': jnp.zeros((3 * H,), jnp.float32),
            'out_proj_w': nrm((H, H)), 'out_proj_b': jnp.zeros((H,), jnp.float32),
            'ln2_w': jnp.ones((H,), jnp.float32), 'ln2_b': jnp.zeros((H,), jnp.float32),
            'mlp_w1': nrm((4 * H, H)), 'mlp_b1': jnp.zeros((4 * H,), jnp.float32),
            'mlp_w2': nrm((H, 4 * H)), 'mlp_b2': jnp.zeros((H,), jnp.float32),
        })
    return params


def prepare_params(params, seq_len, lane_pad=128):
    """Stack / transpose / pad all weights ONCE into kernel-ready layout."""
    H, E = params['emb2hid_w'].shape
    NA = params['action_head_w'].shape[0]
    NA_pad = max(lane_pad, NA)
    blocks = params['blocks']
    stack = lambda fn: jnp.stack([fn(bp) for bp in blocks], axis=0)

    # TODO(synk): bf16 weight storage + pl.Buffered(1) on constant-index weight
    # BlockSpecs are worthwhile once H grows; at H=32 everything fits in VMEM.
    prep = {
        'state_emb': params['state_emb'],
        'action_emb': params['action_emb'],
        'reward_w_vec': params['reward_w'][:, 0],            # (E,)
        'reward_b': params['reward_b'],                      # (E,)
        'pos_emb': positional_encoding(3 * seq_len, E),      # (3L, E)
        'weT': params['emb2hid_w'].T,                        # (E, H)
        'be': params['emb2hid_b'].reshape(1, H),
        'ln1_w': stack(lambda p: p['ln1_w'].reshape(1, H)),  # (nl, 1, H)
        'ln1_b': stack(lambda p: p['ln1_b'].reshape(1, H)),
        'w_qkv_T': stack(lambda p: p['in_proj_w'].T),        # (nl, H, 3H)
        'b_qkv': stack(lambda p: p['in_proj_b'].reshape(1, 3 * H)),
        'w_o_T': stack(lambda p: p['out_proj_w'].T),         # (nl, H, H)
        'b_o': stack(lambda p: p['out_proj_b'].reshape(1, H)),
        'ln2_w': stack(lambda p: p['ln2_w'].reshape(1, H)),
        'ln2_b': stack(lambda p: p['ln2_b'].reshape(1, H)),
        'w1_T': stack(lambda p: p['mlp_w1'].T),              # (nl, H, 4H)
        'b1': stack(lambda p: p['mlp_b1'].reshape(1, 4 * H)),
        'w2_T': stack(lambda p: p['mlp_w2'].T),              # (nl, 4H, H)
        'b2': stack(lambda p: p['mlp_b2'].reshape(1, H)),
        # action head padded to a lane-dense 128-wide output
        'wah_T': jnp.zeros((H, NA_pad), jnp.float32).at[:, :NA].set(
            params['action_head_w'].T),
        'bah': jnp.zeros((1, NA_pad), jnp.float32).at[0, :NA].set(
            params['action_head_b']),
        'num_actions': NA,
    }
    return prep


# ----------------------------------------------------------------------------
# Forward pass (embeddings + PE in plain JAX, everything dense in ONE kernel)
# ----------------------------------------------------------------------------

def ad_transformer_forward(prep, states, actions, rewards, *, num_heads):
    # states, actions: (B, L) int32; rewards: (B, L) float32
    B, L = states.shape
    E = prep['state_emb'].shape[1]
    H = prep['weT'].shape[1]
    n_layers = prep['w_qkv_T'].shape[0]
    NA_pad = prep['wah_T'].shape[1]
    T = 3 * L

    s_emb = prep['state_emb'][states]                                  # (B, L, E)
    a_emb = prep['action_emb'][actions]                                # (B, L, E)
    r_emb = rewards[..., None] * prep['reward_w_vec'] + prep['reward_b']  # (B, L, E)

    # interleave (s_t, a_t, r_t) along time and add positional encoding
    seq = jnp.stack([s_emb, a_emb, r_emb], axis=2).reshape(B, T, E)
    seq = seq + prep['pos_emb'][None, :T]

    cm2 = lambda b, l: (0, 0)            # constant weights
    lm3 = lambda b, l: (l, 0, 0)         # per-layer stacked weights
    kernel = functools.partial(_fused_forward_kernel, num_heads=num_heads)

    logits_pad = pl.pallas_call(
        kernel,
        out_shape=jax.ShapeDtypeStruct((B, L, NA_pad), jnp.float32),
        grid=(B, n_layers),
        in_specs=[
            pl.BlockSpec((1, T, E), lambda b, l: (b, 0, 0)),                 # seq
            pl.BlockSpec((E, H), cm2), pl.BlockSpec((1, H), cm2),            # emb2hid
            pl.BlockSpec((1, 1, H), lm3), pl.BlockSpec((1, 1, H), lm3),      # ln1 w,b
            pl.BlockSpec((1, H, 3 * H), lm3), pl.BlockSpec((1, 1, 3 * H), lm3),  # qkv
            pl.BlockSpec((1, H, H), lm3), pl.BlockSpec((1, 1, H), lm3),      # out proj
            pl.BlockSpec((1, 1, H), lm3), pl.BlockSpec((1, 1, H), lm3),      # ln2 w,b
            pl.BlockSpec((1, H, 4 * H), lm3), pl.BlockSpec((1, 1, 4 * H), lm3),  # mlp1
            pl.BlockSpec((1, 4 * H, H), lm3), pl.BlockSpec((1, 1, H), lm3),  # mlp2
            pl.BlockSpec((H, NA_pad), cm2), pl.BlockSpec((1, NA_pad), cm2),  # head
        ],
        out_specs=pl.BlockSpec((1, L, NA_pad), lambda b, l: (b, 0, 0)),
        scratch_shapes=[pltpu.VMEM((T, H), jnp.float32)],
        compiler_params=pltpu.CompilerParams(
            dimension_semantics=("parallel", "arbitrary")),
    )(seq, prep['weT'], prep['be'],
      prep['ln1_w'], prep['ln1_b'], prep['w_qkv_T'], prep['b_qkv'],
      prep['w_o_T'], prep['b_o'], prep['ln2_w'], prep['ln2_b'],
      prep['w1_T'], prep['b1'], prep['w2_T'], prep['b2'],
      prep['wah_T'], prep['bah'])

    # TODO(synk): padding_mask (key_padding_mask) path not implemented; forward supports None.
    return logits_pad[:, :, :prep['num_actions']]                     # (B, L, num_actions)


# ----------------------------------------------------------------------------
# Main
# ----------------------------------------------------------------------------

if __name__ == "__main__":
    NUM_STATES, NUM_ACTIONS = 10, 5
    SEQ_LEN, EMB_DIM, HID_DIM = 8, 16, 32
    NUM_LAYERS, NUM_HEADS = 2, 4
    B = 2

    key = jax.random.PRNGKey(0)
    kp, ks, ka, kr = jax.random.split(key, 4)
    params = init_params(kp, NUM_STATES, NUM_ACTIONS, EMB_DIM, HID_DIM, NUM_LAYERS)
    prep = prepare_params(params, SEQ_LEN)          # one-time, hoisted out of fwd path

    states = jax.random.randint(ks, (B, SEQ_LEN), 0, NUM_STATES, dtype=jnp.int32)
    actions = jax.random.randint(ka, (B, SEQ_LEN), 0, NUM_ACTIONS, dtype=jnp.int32)
    rewards = jax.random.uniform(kr, (B, SEQ_LEN), jnp.float32)

    out = ad_transformer_forward(prep, states, actions, rewards, num_heads=NUM_HEADS)
    out = jax.block_until_ready(out)
    assert out.shape == (B, SEQ_LEN, NUM_ACTIONS), out.shape
    assert bool(jnp.all(jnp.isfinite(out)))
    print("KERNEL_OK")
</pallas_src>

<mosaic_0001>
module attributes {stable_mosaic.version = 11 : i64} {
  func.func @_fused_forward_kernel(%arg0: i32, %arg1: i32, %arg2: memref<1x24x16xf32, #tpu.memory_space<vmem>>, %arg3: memref<16x32xf32, #tpu.memory_space<vmem>>, %arg4: memref<1x32xf32, #tpu.memory_space<vmem>>, %arg5: memref<1x1x32xf32, #tpu.memory_space<vmem>>, %arg6: memref<1x1x32xf32, #tpu.memory_space<vmem>>, %arg7: memref<1x32x96xf32, #tpu.memory_space<vmem>>, %arg8: memref<1x1x96xf32, #tpu.memory_space<vmem>>, %arg9: memref<1x32x32xf32, #tpu.memory_space<vmem>>, %arg10: memref<1x1x32xf32, #tpu.memory_space<vmem>>, %arg11: memref<1x1x32xf32, #tpu.memory_space<vmem>>, %arg12: memref<1x1x32xf32, #tpu.memory_space<vmem>>, %arg13: memref<1x32x128xf32, #tpu.memory_space<vmem>>, %arg14: memref<1x1x128xf32, #tpu.memory_space<vmem>>, %arg15: memref<1x128x32xf32, #tpu.memory_space<vmem>>, %arg16: memref<1x1x32xf32, #tpu.memory_space<vmem>>, %arg17: memref<32x128xf32, #tpu.memory_space<vmem>>, %arg18: memref<1x128xf32, #tpu.memory_space<vmem>>, %arg19: memref<1x8x128xf32, #tpu.memory_space<vmem>>, %arg20: memref<24x32xf32, #tpu.memory_space<vmem>>) attributes {dimension_semantics = [#tpu.dimension_semantics<parallel>, #tpu.dimension_semantics<arbitrary>], iteration_bounds = array<i64: 2, 2>, scalar_prefetch = 0 : i64, scratch_operands = 1 : i64, tpu.core_type = #tpu.core_type<tc>, window_params = [{transform_indices = @transform_0, window_bounds = array<i64: 1, 24, 16>}, {pipeline_mode = #tpu.pipeline_mode<synchronous>, transform_indices = @transform_1, window_bounds = array<i64: 16, 32>}, {pipeline_mode = #tpu.pipeline_mode<synchronous>, transform_indices = @transform_2, window_bounds = array<i64: 1, 32>}, {transform_indices = @transform_3, window_bounds = array<i64: 1, 1, 32>}, {transform_indices = @transform_4, window_bounds = array<i64: 1, 1, 32>}, {transform_indices = @transform_5, window_bounds = array<i64: 1, 32, 96>}, {transform_indices = @transform_6, window_bounds = array<i64: 1, 1, 96>}, {transform_indices = @transform_7, window_bounds = array<i64: 1, 32, 32>}, {transform_indices = @transform_8, window_bounds = array<i64: 1, 1, 32>}, {transform_indices = @transform_9, window_bounds = array<i64: 1, 1, 32>}, {transform_indices = @transform_10, window_bounds = array<i64: 1, 1, 32>}, {transform_indices = @transform_11, window_bounds = array<i64: 1, 32, 128>}, {transform_indices = @transform_12, window_bounds = array<i64: 1, 1, 128>}, {transform_indices = @transform_13, window_bounds = array<i64: 1, 128, 32>}, {transform_indices = @transform_14, window_bounds = array<i64: 1, 1, 32>}, {pipeline_mode = #tpu.pipeline_mode<synchronous>, transform_indices = @transform_15, window_bounds = array<i64: 32, 128>}, {pipeline_mode = #tpu.pipeline_mode<synchronous>, transform_indices = @transform_16, window_bounds = array<i64: 1, 128>}, {transform_indices = @transform_17, window_bounds = array<i64: 1, 8, 128>}]} {
    %c0_i32 = arith.constant 0 : i32
    %0 = arith.cmpi eq, %arg1, %c0_i32 : i32
    %1 = arith.extui %0 : i1 to i32
    %c0_i32_0 = arith.constant 0 : i32
    %2 = arith.cmpi ne, %1, %c0_i32_0 : i32
    scf.if %2 {
      %c0_93 = arith.constant 0 : index
      %c0_94 = arith.constant 0 : index
      %c0_95 = arith.constant 0 : index
      %209 = vector.load %arg2[%c0_93, %c0_94, %c0_95] : memref<1x24x16xf32, #tpu.memory_space<vmem>>, vector<1x24x16xf32>
      %210 = vector.shape_cast %209 : vector<1x24x16xf32> to vector<24x16xf32>
      %c0_96 = arith.constant 0 : index
      %c0_97 = arith.constant 0 : index
      %211 = vector.load %arg3[%c0_96, %c0_97] : memref<16x32xf32, #tpu.memory_space<vmem>>, vector<16x32xf32>
      %cst_98 = arith.constant dense<0.000000e+00> : vector<24x32xf32>
      %212 = tpu.matmul %210, %211, %cst_98 {dimension_numbers = #tpu.dot_dimension_numbers<[1], [0], [0], [1], [0, 0, 1, 1], [], []>} : vector<24x16xf32>, vector<16x32xf32>, vector<24x32xf32> -> vector<24x32xf32>
      %c0_99 = arith.constant 0 : index
      %c0_100 = arith.constant 0 : index
      %213 = vector.load %arg4[%c0_99, %c0_100] : memref<1x32xf32, #tpu.memory_space<vmem>>, vector<1x32xf32>
      %214 = vector.broadcast %213 : vector<1x32xf32> to vector<24x32xf32>
      %215 = arith.addf %212, %214 : vector<24x32xf32>
      %c0_101 = arith.constant 0 : index
      %c0_102 = arith.constant 0 : index
      %216 = vector.load %arg20[%c0_101, %c0_102] : memref<24x32xf32, #tpu.memory_space<vmem>>, vector<24x32xf32>
      tpu.vector_store %arg20[%c0_101, %c0_102], %215 {strides = array<i32>} : memref<24x32xf32, #tpu.memory_space<vmem>>, vector<24x32xf32>,
    } else {
    }
    %c0 = arith.constant 0 : index
    %c0_1 = arith.constant 0 : index
    %3 = vector.load %arg20[%c0, %c0_1] : memref<24x32xf32, #tpu.memory_space<vmem>>, vector<24x32xf32>
    %c0_2 = arith.constant 0 : index
    %c0_3 = arith.constant 0 : index
    %c0_4 = arith.constant 0 : index
    %4 = vector.load %arg5[%c0_2, %c0_3, %c0_4] : memref<1x1x32xf32, #tpu.memory_space<vmem>>, vector<1x1x32xf32>
    %5 = vector.shape_cast %4 : vector<1x1x32xf32> to vector<1x32xf32>
    %c0_5 = arith.constant 0 : index
    %c0_6 = arith.constant 0 : index
    %c0_7 = arith.constant 0 : index
    %6 = vector.load %arg6[%c0_5, %c0_6, %c0_7] : memref<1x1x32xf32, #tpu.memory_space<vmem>>, vector<1x1x32xf32>
    %7 = vector.shape_cast %6 : vector<1x1x32xf32> to vector<1x32xf32>
    %cst = arith.constant dense<0.000000e+00> : vector<24xf32>
    %8 = vector.multi_reduction <add>, %3, %cst [1] : vector<24x32xf32> to vector<24xf32>
    %9 = vector.shape_cast %8 : vector<24xf32> to vector<24x1xf32>
    %cst_8 = arith.constant 3.200000e+01 : f32
    %10 = vector.broadcast %cst_8 : f32 to vector<24x1xf32>
    %11 = arith.divf %9, %10 : vector<24x1xf32>
    %12 = vector.broadcast %11 : vector<24x1xf32> to vector<24x32xf32>
    %13 = arith.subf %3, %12 : vector<24x32xf32>
    %14 = arith.mulf %13, %13 : vector<24x32xf32>
    %cst_9 = arith.constant dense<0.000000e+00> : vector<24xf32>
    %15 = vector.multi_reduction <add>, %14, %cst_9 [1] : vector<24x32xf32> to vector<24xf32>
    %16 = vector.shape_cast %15 : vector<24xf32> to vector<24x1xf32>
    %cst_10 = arith.constant 3.200000e+01 : f32
    %17 = vector.broadcast %cst_10 : f32 to vector<24x1xf32>
    %18 = arith.divf %16, %17 : vector<24x1xf32>
    %cst_11 = arith.constant 9.99999974E-6 : f32
    %19 = vector.broadcast %cst_11 : f32 to vector<24x1xf32>
    %20 = arith.addf %18, %19 : vector<24x1xf32>
    %21 = math.rsqrt %20 : vector<24x1xf32>
    %22 = vector.broadcast %21 : vector<24x1xf32> to vector<24x32xf32>
    %23 = arith.mulf %13, %22 : vector<24x32xf32>
    %24 = vector.broadcast %5 : vector<1x32xf32> to vector<24x32xf32>
    %25 = arith.mulf %23, %24 : vector<24x32xf32>
    %26 = vector.broadcast %7 : vector<1x32xf32> to vector<24x32xf32>
    %27 = arith.addf %25, %26 : vector<24x32xf32>
    %c0_12 = arith.constant 0 : index
    %c0_13 = arith.constant 0 : index
    %c0_14 = arith.constant 0 : index
    %28 = vector.load %arg7[%c0_12, %c0_13, %c0_14] : memref<1x32x96xf32, #tpu.memory_space<vmem>>, vector<1x32x96xf32>
    %29 = vector.shape_cast %28 : vector<1x32x96xf32> to vector<32x96xf32>
    %cst_15 = arith.constant dense<0.000000e+00> : vector<24x96xf32>
    %30 = tpu.matmul %27, %29, %cst_15 {dimension_numbers = #tpu.dot_dimension_numbers<[1], [0], [0], [1], [0, 0, 1, 1], [], []>} : vector<24x32xf32>, vector<32x96xf32>, vector<24x96xf32> -> vector<24x96xf32>
    %c0_16 = arith.constant 0 : index
    %c0_17 = arith.constant 0 : index
    %c0_18 = arith.constant 0 : index
    %31 = vector.load %arg8[%c0_16, %c0_17, %c0_18] : memref<1x1x96xf32, #tpu.memory_space<vmem>>, vector<1x1x96xf32>
    %32 = vector.shape_cast %31 : vector<1x1x96xf32> to vector<1x96xf32>
    %33 = vector.broadcast %32 : vector<1x96xf32> to vector<24x96xf32>
    %34 = arith.addf %30, %33 : vector<24x96xf32>
    %35 = vector.extract_strided_slice %34 {offsets = [0, 0], sizes = [24, 32], strides = [1, 1]} : vector<24x96xf32> to vector<24x32xf32>
    %36 = vector.extract_strided_slice %34 {offsets = [0, 32], sizes = [24, 32], strides = [1, 1]} : vector<24x96xf32> to vector<24x32xf32>
    %37 = vector.extract_strided_slice %34 {offsets = [0, 64], sizes = [24, 32], strides = [1, 1]} : vector<24x96xf32> to vector<24x32xf32>
    %38 = tpu.iota {dimensions = array<i32: 0>} : vector<24x24xi32>
    %39 = tpu.iota {dimensions = array<i32: 1>} : vector<24x24xi32>
    %40 = arith.cmpi sle, %39, %38 : vector<24x24xi32>
    %41 = vector.extract_strided_slice %35 {offsets = [0, 0], sizes = [24, 8], strides = [1, 1]} : vector<24x32xf32> to vector<24x8xf32>
    %42 = vector.extract_strided_slice %36 {offsets = [0, 0], sizes = [24, 8], strides = [1, 1]} : vector<24x32xf32> to vector<24x8xf32>
    %43 = vector.extract_strided_slice %37 {offsets = [0, 0], sizes = [24, 8], strides = [1, 1]} : vector<24x32xf32> to vector<24x8xf32>
    %cst_19 = arith.constant dense<0.000000e+00> : vector<24x24xf32>
    %44 = tpu.matmul %41, %42, %cst_19 {dimension_numbers = #tpu.dot_dimension_numbers<[1], [1], [0], [0], [0, 0, 1, 0], [], []>} : vector<24x8xf32>, vector<24x8xf32>, vector<24x24xf32> -> vector<24x24xf32>
    %cst_20 = arith.constant 0.353553385 : f32
    %45 = vector.broadcast %cst_20 : f32 to vector<24x24xf32>
    %46 = arith.mulf %44, %45 : vector<24x24xf32>
    %cst_21 = arith.constant -1.000000e+30 : f32
    %47 = vector.broadcast %cst_21 : f32 to vector<24x24xf32>
    %48 = arith.select %40, %46, %47 : vector<24x24xi1>, vector<24x24xf32>
    %cst_22 = arith.constant dense<0xFF800000> : vector<24xf32>
    %49 = vector.multi_reduction <maximumf>, %48, %cst_22 [1] : vector<24x24xf32> to vector<24xf32>
    %50 = vector.shape_cast %49 : vector<24xf32> to vector<24x1xf32>
    %51 = vector.broadcast %50 : vector<24x1xf32> to vector<24x24xf32>
    %52 = arith.subf %48, %51 : vector<24x24xf32>
    %53 = math.exp %52 : vector<24x24xf32>
    %cst_23 = arith.constant dense<0.000000e+00> : vector<24xf32>
    %54 = vector.multi_reduction <add>, %53, %cst_23 [1] : vector<24x24xf32> to vector<24xf32>
    %55 = vector.shape_cast %54 : vector<24xf32> to vector<24x1xf32>
    %56 = tpu.reciprocal %55 {approx = true} : vector<24x1xf32> -> vector<24x1xf32>
    %57 = vector.broadcast %56 : vector<24x1xf32> to vector<24x24xf32>
    %58 = arith.mulf %53, %57 : vector<24x24xf32>
    %cst_24 = arith.constant dense<0.000000e+00> : vector<24x8xf32>
    %59 = tpu.matmul %58, %43, %cst_24 {dimension_numbers = #tpu.dot_dimension_numbers<[1], [0], [0], [1], [0, 0, 1, 1], [], []>} : vector<24x24xf32>, vector<24x8xf32>, vector<24x8xf32> -> vector<24x8xf32>
    %60 = vector.extract_strided_slice %35 {offsets = [0, 8], sizes = [24, 8], strides = [1, 1]} : vector<24x32xf32> to vector<24x8xf32>
    %61 = vector.extract_strided_slice %36 {offsets = [0, 8], sizes = [24, 8], strides = [1, 1]} : vector<24x32xf32> to vector<24x8xf32>
    %62 = vector.extract_strided_slice %37 {offsets = [0, 8], sizes = [24, 8], strides = [1, 1]} : vector<24x32xf32> to vector<24x8xf32>
    %cst_25 = arith.constant dense<0.000000e+00> : vector<24x24xf32>
    %63 = tpu.matmul %60, %61, %cst_25 {dimension_numbers = #tpu.dot_dimension_numbers<[1], [1], [0], [0], [0, 0, 1, 0], [], []>} : vector<24x8xf32>, vector<24x8xf32>, vector<24x24xf32> -> vector<24x24xf32>
    %cst_26 = arith.constant 0.353553385 : f32
    %64 = vector.broadcast %cst_26 : f32 to vector<24x24xf32>
    %65 = arith.mulf %63, %64 : vector<24x24xf32>
    %cst_27 = arith.constant -1.000000e+30 : f32
    %66 = vector.broadcast %cst_27 : f32 to vector<24x24xf32>
    %67 = arith.select %40, %65, %66 : vector<24x24xi1>, vector<24x24xf32>
    %cst_28 = arith.constant dense<0xFF800000> : vector<24xf32>
    %68 = vector.multi_reduction <maximumf>, %67, %cst_28 [1] : vector<24x24xf32> to vector<24xf32>
    %69 = vector.shape_cast %68 : vector<24xf32> to vector<24x1xf32>
    %70 = vector.broadcast %69 : vector<24x1xf32> to vector<24x24xf32>
    %71 = arith.subf %67, %70 : vector<24x24xf32>
    %72 = math.exp %71 : vector<24x24xf32>
    %cst_29 = arith.constant dense<0.000000e+00> : vector<24xf32>
    %73 = vector.multi_reduction <add>, %72, %cst_29 [1] : vector<24x24xf32> to vector<24xf32>
    %74 = vector.shape_cast %73 : vector<24xf32> to vector<24x1xf32>
    %75 = tpu.reciprocal %74 {approx = true} : vector<24x1xf32> -> vector<24x1xf32>
    %76 = vector.broadcast %75 : vector<24x1xf32> to vector<24x24xf32>
    %77 = arith.mulf %72, %76 : vector<24x24xf32>
    %cst_30 = arith.constant dense<0.000000e+00> : vector<24x8xf32>
    %78 = tpu.matmul %77, %62, %cst_30 {dimension_numbers = #tpu.dot_dimension_numbers<[1], [0], [0], [1], [0, 0, 1, 1], [], []>} : vector<24x24xf32>, vector<24x8xf32>, vector<24x8xf32> -> vector<24x8xf32>
    %79 = vector.extract_strided_slice %35 {offsets = [0, 16], sizes = [24, 8], strides = [1, 1]} : vector<24x32xf32> to vector<24x8xf32>
    %80 = vector.extract_strided_slice %36 {offsets = [0, 16], sizes = [24, 8], strides = [1, 1]} : vector<24x32xf32> to vector<24x8xf32>
    %81 = vector.extract_strided_slice %37 {offsets = [0, 16], sizes = [24, 8], strides = [1, 1]} : vector<24x32xf32> to vector<24x8xf32>
    %cst_31 = arith.constant dense<0.000000e+00> : vector<24x24xf32>
    %82 = tpu.matmul %79, %80, %cst_31 {dimension_numbers = #tpu.dot_dimension_numbers<[1], [1], [0], [0], [0, 0, 1, 0], [], []>} : vector<24x8xf32>, vector<24x8xf32>, vector<24x24xf32> -> vector<24x24xf32>
    %cst_32 = arith.constant 0.353553385 : f32
    %83 = vector.broadcast %cst_32 : f32 to vector<24x24xf32>
    %84 = arith.mulf %82, %83 : vector<24x24xf32>
    %cst_33 = arith.constant -1.000000e+30 : f32
    %85 = vector.broadcast %cst_33 : f32 to vector<24x24xf32>
    %86 = arith.select %40, %84, %85 : vector<24x24xi1>, vector<24x24xf32>
    %cst_34 = arith.constant dense<0xFF800000> : vector<24xf32>
    %87 = vector.multi_reduction <maximumf>, %86, %cst_34 [1] : vector<24x24xf32> to vector<24xf32>
    %88 = vector.shape_cast %87 : vector<24xf32> to vector<24x1xf32>
    %89 = vector.broadcast %88 : vector<24x1xf32> to vector<24x24xf32>
    %90 = arith.subf %86, %89 : vector<24x24xf32>
    %91 = math.exp %90 : vector<24x24xf32>
    %cst_35 = arith.constant dense<0.000000e+00> : vector<24xf32>
    %92 = vector.multi_reduction <add>, %91, %cst_35 [1] : vector<24x24xf32> to vector<24xf32>
    %93 = vector.shape_cast %92 : vector<24xf32> to vector<24x1xf32>
    %94 = tpu.reciprocal %93 {approx = true} : vector<24x1xf32> -> vector<24x1xf32>
    %95 = vector.broadcast %94 : vector<24x1xf32> to vector<24x24xf32>
    %96 = arith.mulf %91, %95 : vector<24x24xf32>
    %cst_36 = arith.constant dense<0.000000e+00> : vector<24x8xf32>
    %97 = tpu.matmul %96, %81, %cst_36 {dimension_numbers = #tpu.dot_dimension_numbers<[1], [0], [0], [1], [0, 0, 1, 1], [], []>} : vector<24x24xf32>, vector<24x8xf32>, vector<24x8xf32> -> vector<24x8xf32>
    %98 = vector.extract_strided_slice %35 {offsets = [0, 24], sizes = [24, 8], strides = [1, 1]} : vector<24x32xf32> to vector<24x8xf32>
    %99 = vector.extract_strided_slice %36 {offsets = [0, 24], sizes = [24, 8], strides = [1, 1]} : vector<24x32xf32> to vector<24x8xf32>
    %100 = vector.extract_strided_slice %37 {offsets = [0, 24], sizes = [24, 8], strides = [1, 1]} : vector<24x32xf32> to vector<24x8xf32>
    %cst_37 = arith.constant dense<0.000000e+00> : vector<24x24xf32>
    %101 = tpu.matmul %98, %99, %cst_37 {dimension_numbers = #tpu.dot_dimension_numbers<[1], [1], [0], [0], [0, 0, 1, 0], [], []>} : vector<24x8xf32>, vector<24x8xf32>, vector<24x24xf32> -> vector<24x24xf32>
    %cst_38 = arith.constant 0.353553385 : f32
    %102 = vector.broadcast %cst_38 : f32 to vector<24x24xf32>
    %103 = arith.mulf %101, %102 : vector<24x24xf32>
    %cst_39 = arith.constant -1.000000e+30 : f32
    %104 = vector.broadcast %cst_39 : f32 to vector<24x24xf32>
    %105 = arith.select %40, %103, %104 : vector<24x24xi1>, vector<24x24xf32>
    %cst_40 = arith.constant dense<0xFF800000> : vector<24xf32>
    %106 = vector.multi_reduction <maximumf>, %105, %cst_40 [1] : vector<24x24xf32> to vector<24xf32>
    %107 = vector.shape_cast %106 : vector<24xf32> to vector<24x1xf32>
    %108 = vector.broadcast %107 : vector<24x1xf32> to vector<24x24xf32>
    %109 = arith.subf %105, %108 : vector<24x24xf32>
    %110 = math.exp %109 : vector<24x24xf32>
    %cst_41 = arith.constant dense<0.000000e+00> : vector<24xf32>
    %111 = vector.multi_reduction <add>, %110, %cst_41 [1] : vector<24x24xf32> to vector<24xf32>
    %112 = vector.shape_cast %111 : vector<24xf32> to vector<24x1xf32>
    %113 = tpu.reciprocal %112 {approx = true} : vector<24x1xf32> -> vector<24x1xf32>
    %114 = vector.broadcast %113 : vector<24x1xf32> to vector<24x24xf32>
    %115 = arith.mulf %110, %114 : vector<24x24xf32>
    %cst_42 = arith.constant dense<0.000000e+00> : vector<24x8xf32>
    %116 = tpu.matmul %115, %100, %cst_42 {dimension_numbers = #tpu.dot_dimension_numbers<[1], [0], [0], [1], [0, 0, 1, 1], [], []>} : vector<24x24xf32>, vector<24x8xf32>, vector<24x8xf32> -> vector<24x8xf32>
    %117 = tpu.concatenate %59, %78, %97, %116 in 1 : vector<24x8xf32>, vector<24x8xf32>, vector<24x8xf32>, vector<24x8xf32> -> vector<24x32xf32>
    %c0_43 = arith.constant 0 : index
    %c0_44 = arith.constant 0 : index
    %c0_45 = arith.constant 0 : index
    %118 = vector.load %arg9[%c0_43, %c0_44, %c0_45] : memref<1x32x32xf32, #tpu.memory_space<vmem>>, vector<1x32x32xf32>
    %119 = vector.shape_cast %118 : vector<1x32x32xf32> to vector<32x32xf32>
    %cst_46 = arith.constant dense<0.000000e+00> : vector<24x32xf32>
    %120 = tpu.matmul %117, %119, %cst_46 {dimension_numbers = #tpu.dot_dimension_numbers<[1], [0], [0], [1], [0, 0, 1, 1], [], []>} : vector<24x32xf32>, vector<32x32xf32>, vector<24x32xf32> -> vector<24x32xf32>
    %c0_47 = arith.constant 0 : index
    %c0_48 = arith.constant 0 : index
    %c0_49 = arith.constant 0 : index
    %121 = vector.load %arg10[%c0_47, %c0_48, %c0_49] : memref<1x1x32xf32, #tpu.memory_space<vmem>>, vector<1x1x32xf32>
    %122 = vector.shape_cast %121 : vector<1x1x32xf32> to vector<1x32xf32>
    %123 = vector.broadcast %122 : vector<1x32xf32> to vector<24x32xf32>
    %124 = arith.addf %120, %123 : vector<24x32xf32>
    %125 = arith.addf %3, %124 : vector<24x32xf32>
    %c0_50 = arith.constant 0 : index
    %c0_51 = arith.constant 0 : index
    %c0_52 = arith.constant 0 : index
    %126 = vector.load %arg11[%c0_50, %c0_51, %c0_52] : memref<1x1x32xf32, #tpu.memory_space<vmem>>, vector<1x1x32xf32>
    %127 = vector.shape_cast %126 : vector<1x1x32xf32> to vector<1x32xf32>
    %c0_53 = arith.constant 0 : index
    %c0_54 = arith.constant 0 : index
    %c0_55 = arith.constant 0 : index
    %128 = vector.load %arg12[%c0_53, %c0_54, %c0_55] : memref<1x1x32xf32, #tpu.memory_space<vmem>>, vector<1x1x32xf32>
    %129 = vector.shape_cast %128 : vector<1x1x32xf32> to vector<1x32xf32>
    %cst_56 = arith.constant dense<0.000000e+00> : vector<24xf32>
    %130 = vector.multi_reduction <add>, %125, %cst_56 [1] : vector<24x32xf32> to vector<24xf32>
    %131 = vector.shape_cast %130 : vector<24xf32> to vector<24x1xf32>
    %cst_57 = arith.constant 3.200000e+01 : f32
    %132 = vector.broadcast %cst_57 : f32 to vector<24x1xf32>
    %133 = arith.divf %131, %132 : vector<24x1xf32>
    %134 = vector.broadcast %133 : vector<24x1xf32> to vector<24x32xf32>
    %135 = arith.subf %125, %134 : vector<24x32xf32>
    %136 = arith.mulf %135, %135 : vector<24x32xf32>
    %cst_58 = arith.constant dense<0.000000e+00> : vector<24xf32>
    %137 = vector.multi_reduction <add>, %136, %cst_58 [1] : vector<24x32xf32> to vector<24xf32>
    %138 = vector.shape_cast %137 : vector<24xf32> to vector<24x1xf32>
    %cst_59 = arith.constant 3.200000e+01 : f32
    %139 = vector.broadcast %cst_59 : f32 to vector<24x1xf32>
    %140 = arith.divf %138, %139 : vector<24x1xf32>
    %cst_60 = arith.constant 9.99999974E-6 : f32
    %141 = vector.broadcast %cst_60 : f32 to vector<24x1xf32>
    %142 = arith.addf %140, %141 : vector<24x1xf32>
    %143 = math.rsqrt %142 : vector<24x1xf32>
    %144 = vector.broadcast %143 : vector<24x1xf32> to vector<24x32xf32>
    %145 = arith.mulf %135, %144 : vector<24x32xf32>
    %146 = vector.broadcast %127 : vector<1x32xf32> to vector<24x32xf32>
    %147 = arith.mulf %145, %146 : vector<24x32xf32>
    %148 = vector.broadcast %129 : vector<1x32xf32> to vector<24x32xf32>
    %149 = arith.addf %147, %148 : vector<24x32xf32>
    %c0_61 = arith.constant 0 : index
    %c0_62 = arith.constant 0 : index
    %c0_63 = arith.constant 0 : index
    %150 = vector.load %arg13[%c0_61, %c0_62, %c0_63] : memref<1x32x128xf32, #tpu.memory_space<vmem>>, vector<1x32x128xf32>
    %151 = vector.shape_cast %150 : vector<1x32x128xf32> to vector<32x128xf32>
    %cst_64 = arith.constant dense<0.000000e+00> : vector<24x128xf32>
    %152 = tpu.matmul %149, %151, %cst_64 {dimension_numbers = #tpu.dot_dimension_numbers<[1], [0], [0], [1], [0, 0, 1, 1], [], []>} : vector<24x32xf32>, vector<32x128xf32>, vector<24x128xf32> -> vector<24x128xf32>
    %c0_65 = arith.constant 0 : index
    %c0_66 = arith.constant 0 : index
    %c0_67 = arith.constant 0 : index
    %153 = vector.load %arg14[%c0_65, %c0_66, %c0_67] : memref<1x1x128xf32, #tpu.memory_space<vmem>>, vector<1x1x128xf32>
    %154 = vector.shape_cast %153 : vector<1x1x128xf32> to vector<1x128xf32>
    %155 = vector.broadcast %154 : vector<1x128xf32> to vector<24x128xf32>
    %156 = arith.addf %152, %155 : vector<24x128xf32>
    %cst_68 = arith.constant 5.000000e-01 : f32
    %157 = vector.broadcast %cst_68 : f32 to vector<24x128xf32>
    %158 = arith.mulf %157, %156 : vector<24x128xf32>
    %cst_69 = arith.constant 0.707106769 : f32
    %159 = vector.broadcast %cst_69 : f32 to vector<24x128xf32>
    %160 = arith.mulf %156, %159 : vector<24x128xf32>
    %161 = math.absf %160 : vector<24x128xf32>
    %cst_70 = arith.constant 0.327591091 : f32
    %162 = vector.broadcast %cst_70 : f32 to vector<24x128xf32>
    %163 = arith.mulf %162, %161 : vector<24x128xf32>
    %cst_71 = arith.constant 1.000000e+00 : f32
    %164 = vector.broadcast %cst_71 : f32 to vector<24x128xf32>
    %165 = arith.addf %164, %163 : vector<24x128xf32>
    %cst_72 = arith.constant 1.000000e+00 : f32
    %166 = vector.broadcast %cst_72 : f32 to vector<24x128xf32>
    %167 = arith.divf %166, %165 : vector<24x128xf32>
    %cst_73 = arith.constant 1.06140542 : f32
    %168 = vector.broadcast %cst_73 : f32 to vector<24x128xf32>
    %169 = arith.mulf %168, %167 : vector<24x128xf32>
    %cst_74 = arith.constant 1.45315206 : f32
    %170 = vector.broadcast %cst_74 : f32 to vector<24x128xf32>
    %171 = arith.subf %169, %170 : vector<24x128xf32>
    %172 = arith.mulf %171, %167 : vector<24x128xf32>
    %cst_75 = arith.constant 1.42141378 : f32
    %173 = vector.broadcast %cst_75 : f32 to vector<24x128xf32>
    %174 = arith.addf %172, %173 : vector<24x128xf32>
    %175 = arith.mulf %174, %167 : vector<24x128xf32>
    %cst_76 = arith.constant 0.284496725 : f32
    %176 = vector.broadcast %cst_76 : f32 to vector<24x128xf32>
    %177 = arith.subf %175, %176 : vector<24x128xf32>
    %178 = arith.mulf %177, %167 : vector<24x128xf32>
    %cst_77 = arith.constant 0.254829586 : f32
    %179 = vector.broadcast %cst_77 : f32 to vector<24x128xf32>
    %180 = arith.addf %178, %179 : vector<24x128xf32>
    %181 = arith.mulf %180, %167 : vector<24x128xf32>
    %cst_78 = arith.constant 0.000000e+00 : f32
    %182 = vector.broadcast %cst_78 : f32 to vector<24x128xf32>
    %183 = arith.subf %182, %160 : vector<24x128xf32>
    %184 = arith.mulf %183, %160 : vector<24x128xf32>
    %185 = math.exp %184 : vector<24x128xf32>
    %186 = arith.mulf %181, %185 : vector<24x128xf32>
    %cst_79 = arith.constant 1.000000e+00 : f32
    %187 = vector.broadcast %cst_79 : f32 to vector<24x128xf32>
    %188 = arith.subf %187, %186 : vector<24x128xf32>
    %cst_80 = arith.constant 0.000000e+00 : f32
    %189 = vector.broadcast %cst_80 : f32 to vector<24x128xf32>
    %190 = arith.cmpf oge, %160, %189 : vector<24x128xf32>
    %cst_81 = arith.constant 0.000000e+00 : f32
    %191 = vector.broadcast %cst_81 : f32 to vector<24x128xf32>
    %192 = arith.subf %191, %188 : vector<24x128xf32>
    %193 = arith.select %190, %188, %192 : vector<24x128xi1>, vector<24x128xf32>
    %cst_82 = arith.constant 1.000000e+00 : f32
    %194 = vector.broadcast %cst_82 : f32 to vector<24x128xf32>
    %195 = arith.addf %194, %193 : vector<24x128xf32>
    %196 = arith.mulf %158, %195 : vector<24x128xf32>
    %c0_83 = arith.constant 0 : index
    %c0_84 = arith.constant 0 : index
    %c0_85 = arith.constant 0 : index
    %197 = vector.load %arg15[%c0_83, %c0_84, %c0_85] : memref<1x128x32xf32, #tpu.memory_space<vmem>>, vector<1x128x32xf32>
    %198 = vector.shape_cast %197 : vector<1x128x32xf32> to vector<128x32xf32>
    %cst_86 = arith.constant dense<0.000000e+00> : vector<24x32xf32>
    %199 = tpu.matmul %196, %198, %cst_86 {dimension_numbers = #tpu.dot_dimension_numbers<[1], [0], [0], [1], [0, 0, 1, 1], [], []>} : vector<24x128xf32>, vector<128x32xf32>, vector<24x32xf32> -> vector<24x32xf32>
    %c0_87 = arith.constant 0 : index
    %c0_88 = arith.constant 0 : index
    %c0_89 = arith.constant 0 : index
    %200 = vector.load %arg16[%c0_87, %c0_88, %c0_89] : memref<1x1x32xf32, #tpu.memory_space<vmem>>, vector<1x1x32xf32>
    %201 = vector.shape_cast %200 : vector<1x1x32xf32> to vector<1x32xf32>
    %202 = vector.broadcast %201 : vector<1x32xf32> to vector<24x32xf32>
    %203 = arith.addf %199, %202 : vector<24x32xf32>
    %204 = arith.addf %125, %203 : vector<24x32xf32>
    %c0_90 = arith.constant 0 : index
    %c0_91 = arith.constant 0 : index
    %205 = vector.load %arg20[%c0_90, %c0_91] : memref<24x32xf32, #tpu.memory_space<vmem>>, vector<24x32xf32>
    tpu.vector_store %arg20[%c0_90, %c0_91], %204 {strides = array<i32>} : memref<24x32xf32, #tpu.memory_space<vmem>>, vector<24x32xf32>,
    %c1_i32 = arith.constant 1 : i32
    %206 = arith.cmpi eq, %arg1, %c1_i32 : i32
    %207 = arith.extui %206 : i1 to i32
    %c0_i32_92 = arith.constant 0 : i32
    %208 = arith.cmpi ne, %207, %c0_i32_92 : i32
    scf.if %208 {
      %209 = tpu.iota {dimensions = array<i32: 0>} : vector<8x24xi32>
      %210 = tpu.iota {dimensions = array<i32: 1>} : vector<8x24xi32>
      %c3_i32 = arith.constant 3 : i32
      %211 = vector.broadcast %c3_i32 : i32 to vector<8x24xi32>
      %212 = arith.muli %211, %209 : vector<8x24xi32>
      %213 = arith.cmpi eq, %210, %212 : vector<8x24xi32>
      %214 = arith.extui %213 : vector<8x24xi1> to vector<8x24xi32>
      %215 = arith.sitofp %214 : vector<8x24xi32> to vector<8x24xf32>
      %cst_93 = arith.constant dense<0.000000e+00> : vector<8x32xf32>
      %216 = tpu.matmul %215, %204, %cst_93 {dimension_numbers = #tpu.dot_dimension_numbers<[1], [0], [0], [1], [0, 0, 1, 1], [], []>} : vector<8x24xf32>, vector<24x32xf32>, vector<8x32xf32> -> vector<8x32xf32>
      %c0_94 = arith.constant 0 : index
      %c0_95 = arith.constant 0 : index
      %217 = vector.load %arg17[%c0_94, %c0_95] : memref<32x128xf32, #tpu.memory_space<vmem>>, vector<32x128xf32>
      %cst_96 = arith.constant dense<0.000000e+00> : vector<8x128xf32>
      %218 = tpu.matmul %216, %217, %cst_96 {dimension_numbers = #tpu.dot_dimension_numbers<[1], [0], [0], [1], [0, 0, 1, 1], [], []>} : vector<8x32xf32>, vector<32x128xf32>, vector<8x128xf32> -> vector<8x128xf32>
      %c0_97 = arith.constant 0 : index
      %c0_98 = arith.constant 0 : index
      %219 = vector.load %arg18[%c0_97, %c0_98] : memref<1x128xf32, #tpu.memory_space<vmem>>, vector<1x128xf32>
      %220 = vector.broadcast %219 : vector<1x128xf32> to vector<8x128xf32>
      %221 = arith.addf %218, %220 : vector<8x128xf32>
      %c0_99 = arith.constant 0 : index
      %c0_100 = arith.constant 0 : index
      %c0_101 = arith.constant 0 : index
      %222 = vector.load %arg19[%c0_99, %c0_100, %c0_101] : memref<1x8x128xf32, #tpu.memory_space<vmem>>, vector<1x8x128xf32>
      %223 = vector.shape_cast %222 : vector<1x8x128xf32> to vector<8x128xf32>
      %224 = vector.shape_cast %221 : vector<8x128xf32> to vector<1x8x128xf32>
      tpu.vector_store %arg19[%c0_99, %c0_100, %c0_101], %224 {strides = array<i32>} : memref<1x8x128xf32, #tpu.memory_space<vmem>>, vector<1x8x128xf32>,
    } else {
    }
    return
  }
  func.func @transform_0(%arg0: i32, %arg1: i32) -> (i32, i32, i32) {
    %c0_i32 = arith.constant 0 : i32
    %c0_i32_0 = arith.constant 0 : i32
    %c0_i32_1 = arith.constant 0 : i32
    return %arg0, %c0_i32, %c0_i32_0 : i32, i32, i32
  }
  func.func @transform_1(%arg0: i32, %arg1: i32) -> (i32, i32) {
    %c0_i32 = arith.constant 0 : i32
    %c0_i32_0 = arith.constant 0 : i32
    %c0_i32_1 = arith.constant 0 : i32
    return %c0_i32, %c0_i32_0 : i32, i32
  }
  func.func @transform_2(%arg0: i32, %arg1: i32) -> (i32, i32) {
    %c0_i32 = arith.constant 0 : i32
    %c0_i32_0 = arith.constant 0 : i32
    %c0_i32_1 = arith.constant 0 : i32
    return %c0_i32, %c0_i32_0 : i32, i32
  }
  func.func @transform_3(%arg0: i32, %arg1: i32) -> (i32, i32, i32) {
    %c0_i32 = arith.constant 0 : i32
    %c0_i32_0 = arith.constant 0 : i32
    %c0_i32_1 = arith.constant 0 : i32
    return %arg1, %c0_i32, %c0_i32_0 : i32, i32, i32
  }
  func.func @transform_4(%arg0: i32, %arg1: i32) -> (i32, i32, i32) {
    %c0_i32 = arith.constant 0 : i32
    %c0_i32_0 = arith.constant 0 : i32
    %c0_i32_1 = arith.constant 0 : i32
    return %arg1, %c0_i32, %c0_i32_0 : i32, i32, i32
  }
  func.func @transform_5(%arg0: i32, %arg1: i32) -> (i32, i32, i32) {
    %c0_i32 = arith.constant 0 : i32
    %c0_i32_0 = arith.constant 0 : i32
    %c0_i32_1 = arith.constant 0 : i32
    return %arg1, %c0_i32, %c0_i32_0 : i32, i32, i32
  }
  func.func @transform_6(%arg0: i32, %arg1: i32) -> (i32, i32, i32) {
    %c0_i32 = arith.constant 0 : i32
    %c0_i32_0 = arith.constant 0 : i32
    %c0_i32_1 = arith.constant 0 : i32
    return %arg1, %c0_i32, %c0_i32_0 : i32, i32, i32
  }
  func.func @transform_7(%arg0: i32, %arg1: i32) -> (i32, i32, i32) {
    %c0_i32 = arith.constant 0 : i32
    %c0_i32_0 = arith.constant 0 : i32
    %c0_i32_1 = arith.constant 0 : i32
    return %arg1, %c0_i32, %c0_i32_0 : i32, i32, i32
  }
  func.func @transform_8(%arg0: i32, %arg1: i32) -> (i32, i32, i32) {
    %c0_i32 = arith.constant 0 : i32
    %c0_i32_0 = arith.constant 0 : i32
    %c0_i32_1 = arith.constant 0 : i32
    return %arg1, %c0_i32, %c0_i32_0 : i32, i32, i32
  }
  func.func @transform_9(%arg0: i32, %arg1: i32) -> (i32, i32, i32) {
    %c0_i32 = arith.constant 0 : i32
    %c0_i32_0 = arith.constant 0 : i32
    %c0_i32_1 = arith.constant 0 : i32
    return %arg1, %c0_i32, %c0_i32_0 : i32, i32, i32
  }
  func.func @transform_10(%arg0: i32, %arg1: i32) -> (i32, i32, i32) {
    %c0_i32 = arith.constant 0 : i32
    %c0_i32_0 = arith.constant 0 : i32
    %c0_i32_1 = arith.constant 0 : i32
    return %arg1, %c0_i32, %c0_i32_0 : i32, i32, i32
  }
  func.func @transform_11(%arg0: i32, %arg1: i32) -> (i32, i32, i32) {
    %c0_i32 = arith.constant 0 : i32
    %c0_i32_0 = arith.constant 0 : i32
    %c0_i32_1 = arith.constant 0 : i32
    return %arg1, %c0_i32, %c0_i32_0 : i32, i32, i32
  }
  func.func @transform_12(%arg0: i32, %arg1: i32) -> (i32, i32, i32) {
    %c0_i32 = arith.constant 0 : i32
    %c0_i32_0 = arith.constant 0 : i32
    %c0_i32_1 = arith.constant 0 : i32
    return %arg1, %c0_i32, %c0_i32_0 : i32, i32, i32
  }
  func.func @transform_13(%arg0: i32, %arg1: i32) -> (i32, i32, i32) {
    %c0_i32 = arith.constant 0 : i32
    %c0_i32_0 = arith.constant 0 : i32
    %c0_i32_1 = arith.constant 0 : i32
    return %arg1, %c0_i32, %c0_i32_0 : i32, i32, i32
  }
  func.func @transform_14(%arg0: i32, %arg1: i32) -> (i32, i32, i32) {
    %c0_i32 = arith.constant 0 : i32
    %c0_i32_0 = arith.constant 0 : i32
    %c0_i32_1 = arith.constant 0 : i32
    return %arg1, %c0_i32, %c0_i32_0 : i32, i32, i32
  }
  func.func @transform_15(%arg0: i32, %arg1: i32) -> (i32, i32) {
    %c0_i32 = arith.constant 0 : i32
    %c0_i32_0 = arith.constant 0 : i32
    %c0_i32_1 = arith.constant 0 : i32
    return %c0_i32, %c0_i32_0 : i32, i32
  }
  func.func @transform_16(%arg0: i32, %arg1: i32) -> (i32, i32) {
    %c0_i32 = arith.constant 0 : i32
    %c0_i32_0 = arith.constant 0 : i32
    %c0_i32_1 = arith.constant 0 : i32
    return %c0_i32, %c0_i32_0 : i32, i32
  }
  func.func @transform_17(%arg0: i32, %arg1: i32) -> (i32, i32, i32) {
    %c0_i32 = arith.constant 0 : i32
    %c0_i32_0 = arith.constant 0 : i32
    %c0_i32_1 = arith.constant 0 : i32
    return %arg0, %c0_i32, %c0_i32_0 : i32, i32, i32
  }
}

</mosaic_0001>

<llo_original>
// kernel: tpu_custom_call.1
$region0: #{tpu_custom_call.1}
  #allocation0 [shape = 'u32[]', space=smem, size = 0x4, offset = 0x4, fixed_abs, tag = 'smem constant byte address 0x4 - core index']
  #allocation1 [shape = 'u32[144,128]{1,0:T(1,128)}', space=vmem, size = 0x12000, scoped, tag = 'internal scratch']
  #allocation2 [shape = 'f32[24,32]{1,0:T(8,128)}', space=vmem, size = 0x3000, scoped, tag = 'scratch operand']
  %s0 = inlined_call_operand.vmem [shape: f32[2,24,16], index: 0, kind: input, shape index: {}]
  %s1 = inlined_call_operand.vmem [shape: f32[16,32], index: 1, kind: input, shape index: {}]
  %s2 = inlined_call_operand.vmem [shape: f32[1,32], index: 2, kind: input, shape index: {}]
  %s3 = inlined_call_operand.vmem [shape: f32[2,1,32], index: 3, kind: input, shape index: {}]
  %s4 = inlined_call_operand.vmem [shape: f32[2,1,32], index: 4, kind: input, shape index: {}]
  %s5 = inlined_call_operand.vmem [shape: f32[2,32,96], index: 5, kind: input, shape index: {}]
  %s6 = inlined_call_operand.vmem [shape: f32[2,1,96], index: 6, kind: input, shape index: {}]
  %s7 = inlined_call_operand.vmem [shape: f32[2,32,32], index: 7, kind: input, shape index: {}]
  %s8 = inlined_call_operand.vmem [shape: f32[2,1,32], index: 8, kind: input, shape index: {}]
  %s9 = inlined_call_operand.vmem [shape: f32[2,1,32], index: 9, kind: input, shape index: {}]
  %s10 = inlined_call_operand.vmem [shape: f32[2,1,32], index: 10, kind: input, shape index: {}]
  %s11 = inlined_call_operand.vmem [shape: f32[2,32,128], index: 11, kind: input, shape index: {}]
  %s12 = inlined_call_operand.vmem [shape: f32[2,1,128], index: 12, kind: input, shape index: {}]
  %s13 = inlined_call_operand.vmem [shape: f32[2,128,32], index: 13, kind: input, shape index: {}]
  %s14 = inlined_call_operand.vmem [shape: f32[2,1,32], index: 14, kind: input, shape index: {}]
  %s15 = inlined_call_operand.vmem [shape: f32[32,128], index: 15, kind: input, shape index: {}]
  %s16 = inlined_call_operand.vmem [shape: f32[1,128], index: 16, kind: input, shape index: {}]
  %s17 = inlined_call_operand.hbm [shape: f32[2,8,128], index: 17, kind: output, shape index: {}]
  %s18 = sld [smem:[#allocation0]]
  $region109: #{tpu_custom_call.1} parent=0
    _
  %s20 = ssub.s32 1, %s18
  %s21 = scalar_select 0, %s20, %s18
  $region1: #{tpu_custom_call.1} parent=0
    #allocation3 [shape = 'u8[8192]{0}', space=vmem, size = 0x2000, scoped, tag = 'output window, operand 0']
    #allocation4 [shape = 's32[2]{0}', space=sflag, size = 0x8, scoped, tag = 'scoped memory for tpu_custom_call.1']
    %22 = vsyncpa [#allocation4], 0
    %s23 = scalar_lea.sflag [#allocation4], 1
    %24 = vsyncpa %s23, 0
    loop: start=0, step=1, limit=6
    $region2: #{tpu_custom_call.1} parent=1 // loop_pre_header
      _
    $region3: #{tpu_custom_call.1} parent=1 // loop_header
      %s26 = sphi 0, %s30
      %p27 = scmp.ge.s32.totalorder %s26, 6
      %s33 = sphi 0, %s45
      %s34 = sphi 0, %s41
      %s35 = sphi 0, %s33
      %s36 = sphi 0, %s34
      %s37 = sphi 0, %s35
      %s38 = sphi 0, %s36
      %s48 = sphi 0, %s50
      %s51 = sphi 0, %s48
      %s52 = sphi 0, %s51
      %s68 = sphi 0, %s52
      %s72 = sphi 0, %s72
      %s74 = sphi 0, %s72
      %s75 = sphi 0, %s74
      %s89 = sphi 0, %s75
      %s93 = sphi 0, %s93
      %s95 = sphi 0, %s93
      %s96 = sphi 0, %s95
      %s110 = sphi 0, %s96
      %s116 = sphi 0, %s118
      %s119 = sphi 0, %s116
      %s120 = sphi 0, %s119
      %s136 = sphi 0, %s120
      %s142 = sphi 0, %s144
      %s145 = sphi 0, %s142
      %s146 = sphi 0, %s145
      %s162 = sphi 0, %s146
      %s168 = sphi 0, %s170
      %s171 = sphi 0, %s168
      %s172 = sphi 0, %s171
      %s188 = sphi 0, %s172
      %s194 = sphi 0, %s196
      %s197 = sphi 0, %s194
      %s198 = sphi 0, %s197
      %s214 = sphi 0, %s198
      %s220 = sphi 0, %s222
      %s223 = sphi 0, %s220
      %s224 = sphi 0, %s223
      %s240 = sphi 0, %s224
      %s246 = sphi 0, %s248
      %s249 = sphi 0, %s246
      %s250 = sphi 0, %s249
      %s266 = sphi 0, %s250
      %s272 = sphi 0, %s274
      %s275 = sphi 0, %s272
      %s276 = sphi 0, %s275
      %s292 = sphi 0, %s276
      %s298 = sphi 0, %s300
      %s301 = sphi 0, %s298
      %s302 = sphi 0, %s301
      %s318 = sphi 0, %s302
      %s324 = sphi 0, %s326
      %s327 = sphi 0, %s324
      %s328 = sphi 0, %s327
      %s344 = sphi 0, %s328
      %s350 = sphi 0, %s352
      %s353 = sphi 0, %s350
      %s354 = sphi 0, %s353
      %s370 = sphi 0, %s354
      %s376 = sphi 0, %s378
      %s379 = sphi 0, %s376
      %s380 = sphi 0, %s379
      %s396 = sphi 0, %s380
      %s402 = sphi 0, %s404
      %s405 = sphi 0, %s402
      %s406 = sphi 0, %s405
      %s422 = sphi 0, %s406
      %s426 = sphi 0, %s426
      %s428 = sphi 0, %s426
      %s429 = sphi 0, %s428
      %s443 = sphi 0, %s429
      %s447 = sphi 0, %s447
      %s449 = sphi 0, %s447
      %s450 = sphi 0, %s449
      %s464 = sphi 0, %s450
      %s470 = sphi 0, %s472
      %s473 = sphi 0, %s470
      %s474 = sphi 0, %s473
      %s490 = sphi 0, %s474
    $region4: #{tpu_custom_call.1} parent=1 // loop_header_branch
      %29 = sbr.rel (%p27) target = $region8
    $region5: #{tpu_custom_call.1} parent=1 // loop_body
      %s31 = ssub.s32 %s26, 1
      %s32 = ssub.s32 %s26, 2
      %s39 = sadd.s32 1, %s34
      %p40 = scmp.ge.s32.totalorder %s39, 2
      %s41 = scalar_select %p40, 0, %s39
      %s42 = sadd.s32 1, %s33
      %s43 = scalar_select %p40, %s42, %s33
      %p44 = scmp.ge.s32.totalorder %s43, 2
      %s45 = scalar_select %p44, 0, %s43
      %s46 = ssub.s32 %s33, %s45
      %p47 = scmp.eq.s32.totalorder %s46, 0
      %s49 = sadd.s32 %s48, 1
      %s50 = scalar_select %p47, %s48, %s49
      %p53 = pneg %p47
      %p54 = scmp.eq.s32.totalorder %s26, 3
      %p55 = por %p53, %p54
      %p56 = scmp.ne.s32.totalorder %s48, %s51
      %p57 = scmp.eq.s32.totalorder %s26, 0
      %p58 = por %p56, %p57
      %p59 = scmp.ne.s32.totalorder %s48, %s51
      %p60 = scmp.eq.s32.totalorder %s31, 3
      %p61 = por %p59, %p60
      %p62 = scmp.ne.s32.totalorder %s51, %s52
      %p63 = scmp.eq.s32.totalorder %s31, 0
      %p64 = por %p62, %p63
      %p65 = scmp.ne.s32.totalorder %s51, %s52
      %p66 = scmp.eq.s32.totalorder %s32, 3
      %p67 = por %p65, %p66
      %p69 = scmp.ne.s32.totalorder %s52, %s68
      %p70 = scmp.eq.s32.totalorder %s32, 0
      %p71 = por %p69, %p70
      %s73 = sadd.s32 %s72, 1
      %p76 = scmp.eq.s32.totalorder %s26, 3
      %p77 = scmp.ne.s32.totalorder %s72, %s74
      %p78 = scmp.eq.s32.totalorder %s26, 0
      %p79 = por %p77, %p78
      %p80 = scmp.ne.s32.totalorder %s72, %s74
      %p81 = scmp.eq.s32.totalorder %s31, 3
      %p82 = por %p80, %p81
      %p83 = scmp.ne.s32.totalorder %s74, %s75
      %p84 = scmp.eq.s32.totalorder %s31, 0
      %p85 = por %p83, %p84
      %p86 = scmp.ne.s32.totalorder %s74, %s75
      %p87 = scmp.eq.s32.totalorder %s32, 3
      %p88 = por %p86, %p87
      %p90 = scmp.ne.s32.totalorder %s75, %s89
      %p91 = scmp.eq.s32.totalorder %s32, 0
      %p92 = por %p90, %p91
      %s94 = sadd.s32 %s93, 1
      %p97 = scmp.eq.s32.totalorder %s26, 3
      %p98 = scmp.ne.s32.totalorder %s93, %s95
      %p99 = scmp.eq.s32.totalorder %s26, 0
      %p100 = por %p98, %p99
      %p101 = scmp.ne.s32.totalorder %s93, %s95
      %p102 = scmp.eq.s32.totalorder %s31, 3
      %p103 = por %p101, %p102
      %p104 = scmp.ne.s32.totalorder %s95, %s96
      %p105 = scmp.eq.s32.totalorder %s31, 0
      %p106 = por %p104, %p105
      %p107 = scmp.ne.s32.totalorder %s95, %s96
      %p108 = scmp.eq.s32.totalorder %s32, 3
      %p109 = por %p107, %p108
      %p111 = scmp.ne.s32.totalorder %s96, %s110
      %p112 = scmp.eq.s32.totalorder %s32, 0
      %p113 = por %p111, %p112
      %s114 = ssub.s32 %s34, %s41
      %p115 = scmp.eq.s32.totalorder %s114, 0
      %s117 = sadd.s32 %s116, 1
      %s118 = scalar_select %p115, %s116, %s117
      %p121 = pneg %p115
      %p122 = scmp.eq.s32.totalorder %s26, 3
      %p123 = por %p121, %p122
      %p124 = scmp.ne.s32.totalorder %s116, %s119
      %p125 = scmp.eq.s32.totalorder %s26, 0
      %p126 = por %p124, %p125
      %p127 = scmp.ne.s32.totalorder %s116, %s119
      %p128 = scmp.eq.s32.totalorder %s31, 3
      %p129 = por %p127, %p128
      %p130 = scmp.ne.s32.totalorder %s119, %s120
      %p131 = scmp.eq.s32.totalorder %s31, 0
      %p132 = por %p130, %p131
      %p133 = scmp.ne.s32.totalorder %s119, %s120
      %p134 = scmp.eq.s32.totalorder %s32, 3
      %p135 = por %p133, %p134
      %p137 = scmp.ne.s32.totalorder %s120, %s136
      %p138 = scmp.eq.s32.totalorder %s32, 0
      %p139 = por %p137, %p138
      %s140 = ssub.s32 %s34, %s41
      %p141 = scmp.eq.s32.totalorder %s140, 0
      %s143 = sadd.s32 %s142, 1
      %s144 = scalar_select %p141, %s142, %s143
      %p147 = pneg %p141
      %p148 = scmp.eq.s32.totalorder %s26, 3
      %p149 = por %p147, %p148
      %p150 = scmp.ne.s32.totalorder %s142, %s145
      %p151 = scmp.eq.s32.totalorder %s26, 0
      %p152 = por %p150, %p151
      %p153 = scmp.ne.s32.totalorder %s142, %s145
      %p154 = scmp.eq.s32.totalorder %s31, 3
      %p155 = por %p153, %p154
      %p156 = scmp.ne.s32.totalorder %s145, %s146
      %p157 = scmp.eq.s32.totalorder %s31, 0
      %p158 = por %p156, %p157
      %p159 = scmp.ne.s32.totalorder %s145, %s146
      %p160 = scmp.eq.s32.totalorder %s32, 3
      %p161 = por %p159, %p160
      %p163 = scmp.ne.s32.totalorder %s146, %s162
      %p164 = scmp.eq.s32.totalorder %s32, 0
      %p165 = por %p163, %p164
      %s166 = ssub.s32 %s34, %s41
      %p167 = scmp.eq.s32.totalorder %s166, 0
      %s169 = sadd.s32 %s168, 1
      %s170 = scalar_select %p167, %s168, %s169
      %p173 = pneg %p167
      %p174 = scmp.eq.s32.totalorder %s26, 3
      %p175 = por %p173, %p174
      %p176 = scmp.ne.s32.totalorder %s168, %s171
      %p177 = scmp.eq.s32.totalorder %s26, 0
      %p178 = por %p176, %p177
      %p179 = scmp.ne.s32.totalorder %s168, %s171
      %p180 = scmp.eq.s32.totalorder %s31, 3
      %p181 = por %p179, %p180
      %p182 = scmp.ne.s32.totalorder %s171, %s172
      %p183 = scmp.eq.s32.totalorder %s31, 0
      %p184 = por %p182, %p183
      %p185 = scmp.ne.s32.totalorder %s171, %s172
      %p186 = scmp.eq.s32.totalorder %s32, 3
      %p187 = por %p185, %p186
      %p189 = scmp.ne.s32.totalorder %s172, %s188
      %p190 = scmp.eq.s32.totalorder %s32, 0
      %p191 = por %p189, %p190
      %s192 = ssub.s32 %s34, %s41
      %p193 = scmp.eq.s32.totalorder %s192, 0
      %s195 = sadd.s32 %s194, 1
      %s196 = scalar_select %p193, %s194, %s195
      %p199 = pneg %p193
      %p200 = scmp.eq.s32.totalorder %s26, 3
      %p201 = por %p199, %p200
      %p202 = scmp.ne.s32.totalorder %s194, %s197
      %p203 = scmp.eq.s32.totalorder %s26, 0
      %p204 = por %p202, %p203
      %p205 = scmp.ne.s32.totalorder %s194, %s197
      %p206 = scmp.eq.s32.totalorder %s31, 3
      %p207 = por %p205, %p206
      %p208 = scmp.ne.s32.totalorder %s197, %s198
      %p209 = scmp.eq.s32.totalorder %s31, 0
      %p210 = por %p208, %p209
      %p211 = scmp.ne.s32.totalorder %s197, %s198
      %p212 = scmp.eq.s32.totalorder %s32, 3
      %p213 = por %p211, %p212
      %p215 = scmp.ne.s32.totalorder %s198, %s214
      %p216 = scmp.eq.s32.totalorder %s32, 0
      %p217 = por %p215, %p216
      %s218 = ssub.s32 %s34, %s41
      %p219 = scmp.eq.s32.totalorder %s218, 0
      %s221 = sadd.s32 %s220, 1
      %s222 = scalar_select %p219, %s220, %s221
      %p225 = pneg %p219
      %p226 = scmp.eq.s32.totalorder %s26, 3
      %p227 = por %p225, %p226
      %p228 = scmp.ne.s32.totalorder %s220, %s223
      %p229 = scmp.eq.s32.totalorder %s26, 0
      %p230 = por %p228, %p229
      %p231 = scmp.ne.s32.totalorder %s220, %s223
      %p232 = scmp.eq.s32.totalorder %s31, 3
      %p233 = por %p231, %p232
      %p234 = scmp.ne.s32.totalorder %s223, %s224
      %p235 = scmp.eq.s32.totalorder %s31, 0
      %p236 = por %p234, %p235
      %p237 = scmp.ne.s32.totalorder %s223, %s224
      %p238 = scmp.eq.s32.totalorder %s32, 3
      %p239 = por %p237, %p238
      %p241 = scmp.ne.s32.totalorder %s224, %s240
      %p242 = scmp.eq.s32.totalorder %s32, 0
      %p243 = por %p241, %p242
      %s244 = ssub.s32 %s34, %s41
      %p245 = scmp.eq.s32.totalorder %s244, 0
      %s247 = sadd.s32 %s246, 1
      %s248 = scalar_select %p245, %s246, %s247
      %p251 = pneg %p245
      %p252 = scmp.eq.s32.totalorder %s26, 3
      %p253 = por %p251, %p252
      %p254 = scmp.ne.s32.totalorder %s246, %s249
      %p255 = scmp.eq.s32.totalorder %s26, 0
      %p256 = por %p254, %p255
      %p257 = scmp.ne.s32.totalorder %s246, %s249
      %p258 = scmp.eq.s32.totalorder %s31, 3
      %p259 = por %p257, %p258
      %p260 = scmp.ne.s32.totalorder %s249, %s250
      %p261 = scmp.eq.s32.totalorder %s31, 0
      %p262 = por %p260, %p261
      %p263 = scmp.ne.s32.totalorder %s249, %s250
      %p264 = scmp.eq.s32.totalorder %s32, 3
      %p265 = por %p263, %p264
      %p267 = scmp.ne.s32.totalorder %s250, %s266
      %p268 = scmp.eq.s32.totalorder %s32, 0
      %p269 = por %p267, %p268
      %s270 = ssub.s32 %s34, %s41
      %p271 = scmp.eq.s32.totalorder %s270, 0
      %s273 = sadd.s32 %s272, 1
      %s274 = scalar_select %p271, %s272, %s273
      %p277 = pneg %p271
      %p278 = scmp.eq.s32.totalorder %s26, 3
      %p279 = por %p277, %p278
      %p280 = scmp.ne.s32.totalorder %s272, %s275
      %p281 = scmp.eq.s32.totalorder %s26, 0
      %p282 = por %p280, %p281
      %p283 = scmp.ne.s32.totalorder %s272, %s275
      %p284 = scmp.eq.s32.totalorder %s31, 3
      %p285 = por %p283, %p284
      %p286 = scmp.ne.s32.totalorder %s275, %s276
      %p287 = scmp.eq.s32.totalorder %s31, 0
      %p288 = por %p286, %p287
      %p289 = scmp.ne.s32.totalorder %s275, %s276
      %p290 = scmp.eq.s32.totalorder %s32, 3
      %p291 = por %p289, %p290
      %p293 = scmp.ne.s32.totalorder %s276, %s292
      %p294 = scmp.eq.s32.totalorder %s32, 0
      %p295 = por %p293, %p294
      %s296 = ssub.s32 %s34, %s41
      %p297 = scmp.eq.s32.totalorder %s296, 0
      %s299 = sadd.s32 %s298, 1
      %s300 = scalar_select %p297, %s298, %s299
      %p303 = pneg %p297
      %p304 = scmp.eq.s32.totalorder %s26, 3
      %p305 = por %p303, %p304
      %p306 = scmp.ne.s32.totalorder %s298, %s301
      %p307 = scmp.eq.s32.totalorder %s26, 0
      %p308 = por %p306, %p307
      %p309 = scmp.ne.s32.totalorder %s298, %s301
      %p310 = scmp.eq.s32.totalorder %s31, 3
      %p311 = por %p309, %p310
      %p312 = scmp.ne.s32.totalorder %s301, %s302
      %p313 = scmp.eq.s32.totalorder %s31, 0
      %p314 = por %p312, %p313
      %p315 = scmp.ne.s32.totalorder %s301, %s302
      %p316 = scmp.eq.s32.totalorder %s32, 3
      %p317 = por %p315, %p316
      %p319 = scmp.ne.s32.totalorder %s302, %s318
      %p320 = scmp.eq.s32.totalorder %s32, 0
      %p321 = por %p319, %p320
      %s322 = ssub.s32 %s34, %s41
      %p323 = scmp.eq.s32.totalorder %s322, 0
      %s325 = sadd.s32 %s324, 1
      %s326 = scalar_select %p323, %s324, %s325
      %p329 = pneg %p323
      %p330 = scmp.eq.s32.totalorder %s26, 3
      %p331 = por %p329, %p330
      %p332 = scmp.ne.s32.totalorder %s324, %s327
      %p333 = scmp.eq.s32.totalorder %s26, 0
      %p334 = por %p332, %p333
      %p335 = scmp.ne.s32.totalorder %s324, %s327
      %p336 = scmp.eq.s32.totalorder %s31, 3
      %p337 = por %p335, %p336
      %p338 = scmp.ne.s32.totalorder %s327, %s328
      %p339 = scmp.eq.s32.totalorder %s31, 0
      %p340 = por %p338, %p339
      %p341 = scmp.ne.s32.totalorder %s327, %s328
      %p342 = scmp.eq.s32.totalorder %s32, 3
      %p343 = por %p341, %p342
      %p345 = scmp.ne.s32.totalorder %s328, %s344
      %p346 = scmp.eq.s32.totalorder %s32, 0
      %p347 = por %p345, %p346
      %s348 = ssub.s32 %s34, %s41
      %p349 = scmp.eq.s32.totalorder %s348, 0
      %s351 = sadd.s32 %s350, 1
      %s352 = scalar_select %p349, %s350, %s351
      %p355 = pneg %p349
      %p356 = scmp.eq.s32.totalorder %s26, 3
      %p357 = por %p355, %p356
      %p358 = scmp.ne.s32.totalorder %s350, %s353
      %p359 = scmp.eq.s32.totalorder %s26, 0
      %p360 = por %p358, %p359
      %p361 = scmp.ne.s32.totalorder %s350, %s353
      %p362 = scmp.eq.s32.totalorder %s31, 3
      %p363 = por %p361, %p362
      %p364 = scmp.ne.s32.totalorder %s353, %s354
      %p365 = scmp.eq.s32.totalorder %s31, 0
      %p366 = por %p364, %p365
      %p367 = scmp.ne.s32.totalorder %s353, %s354
      %p368 = scmp.eq.s32.totalorder %s32, 3
      %p369 = por %p367, %p368
      %p371 = scmp.ne.s32.totalorder %s354, %s370
      %p372 = scmp.eq.s32.totalorder %s32, 0
      %p373 = por %p371, %p372
      %s374 = ssub.s32 %s34, %s41
      %p375 = scmp.eq.s32.totalorder %s374, 0
      %s377 = sadd.s32 %s376, 1
      %s378 = scalar_select %p375, %s376, %s377
      %p381 = pneg %p375
      %p382 = scmp.eq.s32.totalorder %s26, 3
      %p383 = por %p381, %p382
      %p384 = scmp.ne.s32.totalorder %s376, %s379
      %p385 = scmp.eq.s32.totalorder %s26, 0
      %p386 = por %p384, %p385
      %p387 = scmp.ne.s32.totalorder %s376, %s379
      %p388 = scmp.eq.s32.totalorder %s31, 3
      %p389 = por %p387, %p388
      %p390 = scmp.ne.s32.totalorder %s379, %s380
      %p391 = scmp.eq.s32.totalorder %s31, 0
      %p392 = por %p390, %p391
      %p393 = scmp.ne.s32.totalorder %s379, %s380
      %p394 = scmp.eq.s32.totalorder %s32, 3
      %p395 = por %p393, %p394
      %p397 = scmp.ne.s32.totalorder %s380, %s396
      %p398 = scmp.eq.s32.totalorder %s32, 0
      %p399 = por %p397, %p398
      %s400 = ssub.s32 %s34, %s41
      %p401 = scmp.eq.s32.totalorder %s400, 0
      %s403 = sadd.s32 %s402, 1
      %s404 = scalar_select %p401, %s402, %s403
      %p407 = pneg %p401
      %p408 = scmp.eq.s32.totalorder %s26, 3
      %p409 = por %p407, %p408
      %p410 = scmp.ne.s32.totalorder %s402, %s405
      %p411 = scmp.eq.s32.totalorder %s26, 0
      %p412 = por %p410, %p411
      %p413 = scmp.ne.s32.totalorder %s402, %s405
      %p414 = scmp.eq.s32.totalorder %s31, 3
      %p415 = por %p413, %p414
      %p416 = scmp.ne.s32.totalorder %s405, %s406
      %p417 = scmp.eq.s32.totalorder %s31, 0
      %p418 = por %p416, %p417
      %p419 = scmp.ne.s32.totalorder %s405, %s406
      %p420 = scmp.eq.s32.totalorder %s32, 3
      %p421 = por %p419, %p420
      %p423 = scmp.ne.s32.totalorder %s406, %s422
      %p424 = scmp.eq.s32.totalorder %s32, 0
      %p425 = por %p423, %p424
      %s427 = sadd.s32 %s426, 1
      %p430 = scmp.eq.s32.totalorder %s26, 3
      %p431 = scmp.ne.s32.totalorder %s426, %s428
      %p432 = scmp.eq.s32.totalorder %s26, 0
      %p433 = por %p431, %p432
      %p434 = scmp.ne.s32.totalorder %s426, %s428
      %p435 = scmp.eq.s32.totalorder %s31, 3
      %p436 = por %p434, %p435
      %p437 = scmp.ne.s32.totalorder %s428, %s429
      %p438 = scmp.eq.s32.totalorder %s31, 0
      %p439 = por %p437, %p438
      %p440 = scmp.ne.s32.totalorder %s428, %s429
      %p441 = scmp.eq.s32.totalorder %s32, 3
      %p442 = por %p440, %p441
      %p444 = scmp.ne.s32.totalorder %s429, %s443
      %p445 = scmp.eq.s32.totalorder %s32, 0
      %p446 = por %p444, %p445
      %s448 = sadd.s32 %s447, 1
      %p451 = scmp.eq.s32.totalorder %s26, 3
      %p452 = scmp.ne.s32.totalorder %s447, %s449
      %p453 = scmp.eq.s32.totalorder %s26, 0
      %p454 = por %p452, %p453
      %p455 = scmp.ne.s32.totalorder %s447, %s449
      %p456 = scmp.eq.s32.totalorder %s31, 3
      %p457 = por %p455, %p456
      %p458 = scmp.ne.s32.totalorder %s449, %s450
      %p459 = scmp.eq.s32.totalorder %s31, 0
      %p460 = por %p458, %p459
      %p461 = scmp.ne.s32.totalorder %s449, %s450
      %p462 = scmp.eq.s32.totalorder %s32, 3
      %p463 = por %p461, %p462
      %p465 = scmp.ne.s32.totalorder %s450, %s464
      %p466 = scmp.eq.s32.totalorder %s32, 0
      %p467 = por %p465, %p466
      %s468 = ssub.s32 %s33, %s45
      %p469 = scmp.eq.s32.totalorder %s468, 0
      %s471 = sadd.s32 %s470, 1
      %s472 = scalar_select %p469, %s470, %s471
      %p475 = pneg %p469
      %p476 = scmp.eq.s32.totalorder %s26, 3
      %p477 = por %p475, %p476
      %p478 = scmp.ne.s32.totalorder %s470, %s473
      %p479 = scmp.eq.s32.totalorder %s26, 0
      %p480 = por %p478, %p479
      %p481 = scmp.ne.s32.totalorder %s470, %s473
      %p482 = scmp.eq.s32.totalorder %s31, 3
      %p483 = por %p481, %p482
      %p484 = scmp.ne.s32.totalorder %s473, %s474
      %p485 = scmp.eq.s32.totalorder %s31, 0
      %p486 = por %p484, %p485
      %p487 = scmp.ne.s32.totalorder %s473, %s474
      %p488 = scmp.eq.s32.totalorder %s32, 3
      %p489 = por %p487, %p488
      %p491 = scmp.ne.s32.totalorder %s474, %s490
      %p492 = scmp.eq.s32.totalorder %s32, 0
      %p493 = por %p491, %p492
      %p494 = scmp.le.s32.totalorder 1, %s26
      %p495 = scmp.lt.s32.totalorder %s26, 5
      %p496 = pnand %p494, %p495
      %p497 = pneg %p496
      // Predicated region
      $region9: #{tpu_custom_call.1} parent=5 // pred_check
        _
      $region10: #{tpu_custom_call.1} parent=5 // pred_check_branch
        %499 = sbr.rel (%p496) target = $region12
      $region11: #{tpu_custom_call.1} parent=5 // pred_region
        %s500 = ssub.s32 %s26, 1
        // Predicated region
        $region13: #{tpu_custom_call.1} parent=11 // pred_check
          %p501 = pneg %p85
        $region14: #{tpu_custom_call.1} parent=11 // pred_check_branch
          %503 = sbr.rel (%p501) target = $region16
        $region15: #{tpu_custom_call.1} parent=11 // pred_region
          _
        $region16: #{tpu_custom_call.1} parent=11 // pred_fallthru
          _
        // Predicated region
        $region17: #{tpu_custom_call.1} parent=11 // pred_check
          %p504 = pneg %p106
        $region18: #{tpu_custom_call.1} parent=11 // pred_check_branch
          %506 = sbr.rel (%p504) target = $region20
        $region19: #{tpu_custom_call.1} parent=11 // pred_region
          _
        $region20: #{tpu_custom_call.1} parent=11 // pred_fallthru
          _
        // Predicated region
        $region21: #{tpu_custom_call.1} parent=11 // pred_check
          %p507 = pneg %p439
        $region22: #{tpu_custom_call.1} parent=11 // pred_check_branch
          %509 = sbr.rel (%p507) target = $region24
        $region23: #{tpu_custom_call.1} parent=11 // pred_region
          _
        $region24: #{tpu_custom_call.1} parent=11 // pred_fallthru
          _
        // Predicated region
        $region25: #{tpu_custom_call.1} parent=11 // pred_check
          %p510 = pneg %p460
        $region26: #{tpu_custom_call.1} parent=11 // pred_check_branch
          %512 = sbr.rel (%p510) target = $region28
        $region27: #{tpu_custom_call.1} parent=11 // pred_region
          _
        $region28: #{tpu_custom_call.1} parent=11 // pred_fallthru
          _
      $region12: #{tpu_custom_call.1} parent=5 // pred_fallthru
        _
      %p513 = scmp.lt.s32.totalorder %s26, 4
      // Predicated region
      $region29: #{tpu_custom_call.1} parent=5 // pred_check
        %p514 = pneg %p513
      $region30: #{tpu_custom_call.1} parent=5 // pred_check_branch
        %516 = sbr.rel (%p514) target = $region32
      $region31: #{tpu_custom_call.1} parent=5 // pred_region
        // Predicated region
        $region33: #{tpu_custom_call.1} parent=31 // pred_check
          %p517 = pneg %p58
        $region34: #{tpu_custom_call.1} parent=31 // pred_check_branch
          %519 = sbr.rel (%p517) target = $region36
        $region35: #{tpu_custom_call.1} parent=31 // pred_region
          %p520 = scmp.lt.s32.totalorder %s33, 1
          %s521 = scalar_select %p520, %s33, 1
          %s522 = smul.addr %s521, 3
          %s523 = smul.addr %s522, 8
          %s524 = scalar_lea.vmem %s0, %s523
        $region36: #{tpu_custom_call.1} parent=31 // pred_fallthru
          _
        // Predicated region
        $region37: #{tpu_custom_call.1} parent=31 // pred_check
          %p525 = pneg %p126
        $region38: #{tpu_custom_call.1} parent=31 // pred_check_branch
          %527 = sbr.rel (%p525) target = $region40
        $region39: #{tpu_custom_call.1} parent=31 // pred_region
          %p528 = scmp.lt.s32.totalorder %s34, 1
          %s529 = scalar_select %p528, %s34, 1
          %s530 = scalar_lea.vmem %s3, %s529
        $region40: #{tpu_custom_call.1} parent=31 // pred_fallthru
          _
        // Predicated region
        $region41: #{tpu_custom_call.1} parent=31 // pred_check
          %p531 = pneg %p152
        $region42: #{tpu_custom_call.1} parent=31 // pred_check_branch
          %533 = sbr.rel (%p531) target = $region44
        $region43: #{tpu_custom_call.1} parent=31 // pred_region
          %p534 = scmp.lt.s32.totalorder %s34, 1
          %s535 = scalar_select %p534, %s34, 1
          %s536 = scalar_lea.vmem %s4, %s535
        $region44: #{tpu_custom_call.1} parent=31 // pred_fallthru
          _
        // Predicated region
        $region45: #{tpu_custom_call.1} parent=31 // pred_check
          %p537 = pneg %p178
        $region46: #{tpu_custom_call.1} parent=31 // pred_check_branch
          %539 = sbr.rel (%p537) target = $region48
        $region47: #{tpu_custom_call.1} parent=31 // pred_region
          %p540 = scmp.lt.s32.totalorder %s34, 1
          %s541 = scalar_select %p540, %s34, 1
          %s542 = smul.addr %s541, 4
          %s543 = smul.addr %s542, 8
          %s544 = scalar_lea.vmem %s5, %s543
        $region48: #{tpu_custom_call.1} parent=31 // pred_fallthru
          _
        // Predicated region
        $region49: #{tpu_custom_call.1} parent=31 // pred_check
          %p545 = pneg %p204
        $region50: #{tpu_custom_call.1} parent=31 // pred_check_branch
          %547 = sbr.rel (%p545) target = $region52
        $region51: #{tpu_custom_call.1} parent=31 // pred_region
          %p548 = scmp.lt.s32.totalorder %s34, 1
          %s549 = scalar_select %p548, %s34, 1
          %s550 = scalar_lea.vmem %s6, %s549
        $region52: #{tpu_custom_call.1} parent=31 // pred_fallthru
          _
        // Predicated region
        $region53: #{tpu_custom_call.1} parent=31 // pred_check
          %p551 = pneg %p230
        $region54: #{tpu_custom_call.1} parent=31 // pred_check_branch
          %553 = sbr.rel (%p551) target = $region56
        $region55: #{tpu_custom_call.1} parent=31 // pred_region
          %p554 = scmp.lt.s32.totalorder %s34, 1
          %s555 = scalar_select %p554, %s34, 1
          %s556 = smul.addr %s555, 4
          %s557 = smul.addr %s556, 8
          %s558 = scalar_lea.vmem %s7, %s557
        $region56: #{tpu_custom_call.1} parent=31 // pred_fallthru
          _
        // Predicated region
        $region57: #{tpu_custom_call.1} parent=31 // pred_check
          %p559 = pneg %p256
        $region58: #{tpu_custom_call.1} parent=31 // pred_check_branch
          %561 = sbr.rel (%p559) target = $region60
        $region59: #{tpu_custom_call.1} parent=31 // pred_region
          %p562 = scmp.lt.s32.totalorder %s34, 1
          %s563 = scalar_select %p562, %s34, 1
          %s564 = scalar_lea.vmem %s8, %s563
        $region60: #{tpu_custom_call.1} parent=31 // pred_fallthru
          _
        // Predicated region
        $region61: #{tpu_custom_call.1} parent=31 // pred_check
          %p565 = pneg %p282
        $region62: #{tpu_custom_call.1} parent=31 // pred_check_branch
          %567 = sbr.rel (%p565) target = $region64
        $region63: #{tpu_custom_call.1} parent=31 // pred_region
          %p568 = scmp.lt.s32.totalorder %s34, 1
          %s569 = scalar_select %p568, %s34, 1
          %s570 = scalar_lea.vmem %s9, %s569
        $region64: #{tpu_custom_call.1} parent=31 // pred_fallthru
          _
        // Predicated region
        $region65: #{tpu_custom_call.1} parent=31 // pred_check
          %p571 = pneg %p308
        $region66: #{tpu_custom_call.1} parent=31 // pred_check_branch
          %573 = sbr.rel (%p571) target = $region68
        $region67: #{tpu_custom_call.1} parent=31 // pred_region
          %p574 = scmp.lt.s32.totalorder %s34, 1
          %s575 = scalar_select %p574, %s34, 1
          %s576 = scalar_lea.vmem %s10, %s575
        $region68: #{tpu_custom_call.1} parent=31 // pred_fallthru
          _
        // Predicated region
        $region69: #{tpu_custom_call.1} parent=31 // pred_check
          %p577 = pneg %p334
        $region70: #{tpu_custom_call.1} parent=31 // pred_check_branch
          %579 = sbr.rel (%p577) target = $region72
        $region71: #{tpu_custom_call.1} parent=31 // pred_region
          %p580 = scmp.lt.s32.totalorder %s34, 1
          %s581 = scalar_select %p580, %s34, 1
          %s582 = smul.addr %s581, 4
          %s583 = smul.addr %s582, 8
          %s584 = scalar_lea.vmem %s11, %s583
        $region72: #{tpu_custom_call.1} parent=31 // pred_fallthru
          _
        // Predicated region
        $region73: #{tpu_custom_call.1} parent=31 // pred_check
          %p585 = pneg %p360
        $region74: #{tpu_custom_call.1} parent=31 // pred_check_branch
          %587 = sbr.rel (%p585) target = $region76
        $region75: #{tpu_custom_call.1} parent=31 // pred_region
          %p588 = scmp.lt.s32.totalorder %s34, 1
          %s589 = scalar_select %p588, %s34, 1
          %s590 = scalar_lea.vmem %s12, %s589
        $region76: #{tpu_custom_call.1} parent=31 // pred_fallthru
          _
        // Predicated region
        $region77: #{tpu_custom_call.1} parent=31 // pred_check
          %p591 = pneg %p386
        $region78: #{tpu_custom_call.1} parent=31 // pred_check_branch
          %593 = sbr.rel (%p591) target = $region80
        $region79: #{tpu_custom_call.1} parent=31 // pred_region
          %p594 = scmp.lt.s32.totalorder %s34, 1
          %s595 = scalar_select %p594, %s34, 1
          %s596 = smul.addr %s595, 16
          %s597 = smul.addr %s596, 8
          %s598 = scalar_lea.vmem %s13, %s597
        $region80: #{tpu_custom_call.1} parent=31 // pred_fallthru
          _
        // Predicated region
        $region81: #{tpu_custom_call.1} parent=31 // pred_check
          %p599 = pneg %p412
        $region82: #{tpu_custom_call.1} parent=31 // pred_check_branch
          %601 = sbr.rel (%p599) target = $region84
        $region83: #{tpu_custom_call.1} parent=31 // pred_region
          %p602 = scmp.lt.s32.totalorder %s34, 1
          %s603 = scalar_select %p602, %s34, 1
          %s604 = scalar_lea.vmem %s14, %s603
        $region84: #{tpu_custom_call.1} parent=31 // pred_fallthru
          _
      $region32: #{tpu_custom_call.1} parent=5 // pred_fallthru
        _
      %p605 = scmp.le.s32.totalorder 1, %s26
      %p606 = scmp.lt.s32.totalorder %s26, 5
      %p607 = pnand %p605, %p606
      %p608 = pneg %p607
      // Predicated region
      $region85: #{tpu_custom_call.1} parent=5 // pred_check
        _
      $region86: #{tpu_custom_call.1} parent=5 // pred_check_branch
        %610 = sbr.rel (%p607) target = $region88
      $region87: #{tpu_custom_call.1} parent=5 // pred_region
        %s611 = ssub.s32 %s26, 1
        %p612 = scmp.lt.s32.totalorder %s35, 1
        %s613 = scalar_select %p612, %s35, 1
        %s614 = smul.addr %s613, 3
        %s615 = smul.addr %s614, 8
        %s616 = scalar_lea.vmem %s0, %s615
        %p617 = pneg %p64
        %p618 = pneg %p61
        %p619 = pneg %p85
        %p620 = pneg %p82
        %p621 = pneg %p106
        %p622 = pneg %p103
        %p623 = scmp.lt.s32.totalorder %s36, 1
        %s624 = scalar_select %p623, %s36, 1
        %s625 = scalar_lea.vmem %s3, %s624
        %p626 = pneg %p132
        %p627 = pneg %p129
        %p628 = scmp.lt.s32.totalorder %s36, 1
        %s629 = scalar_select %p628, %s36, 1
        %s630 = scalar_lea.vmem %s4, %s629
        %p631 = pneg %p158
        %p632 = pneg %p155
        %p633 = scmp.lt.s32.totalorder %s36, 1
        %s634 = scalar_select %p633, %s36, 1
        %s635 = smul.addr %s634, 4
        %s636 = smul.addr %s635, 8
        %s637 = scalar_lea.vmem %s5, %s636
        %p638 = pneg %p184
        %p639 = pneg %p181
        %p640 = scmp.lt.s32.totalorder %s36, 1
        %s641 = scalar_select %p640, %s36, 1
        %s642 = scalar_lea.vmem %s6, %s641
        %p643 = pneg %p210
        %p644 = pneg %p207
        %p645 = scmp.lt.s32.totalorder %s36, 1
        %s646 = scalar_select %p645, %s36, 1
        %s647 = smul.addr %s646, 4
        %s648 = smul.addr %s647, 8
        %s649 = scalar_lea.vmem %s7, %s648
        %p650 = pneg %p236
        %p651 = pneg %p233
        %p652 = scmp.lt.s32.totalorder %s36, 1
        %s653 = scalar_select %p652, %s36, 1
        %s654 = scalar_lea.vmem %s8, %s653
        %p655 = pneg %p262
        %p656 = pneg %p259
        %p657 = scmp.lt.s32.totalorder %s36, 1
        %s658 = scalar_select %p657, %s36, 1
        %s659 = scalar_lea.vmem %s9, %s658
        %p660 = pneg %p288
        %p661 = pneg %p285
        %p662 = scmp.lt.s32.totalorder %s36, 1
        %s663 = scalar_select %p662, %s36, 1
        %s664 = scalar_lea.vmem %s10, %s663
        %p665 = pneg %p314
        %p666 = pneg %p311
        %p667 = scmp.lt.s32.totalorder %s36, 1
        %s668 = scalar_select %p667, %s36, 1
        %s669 = smul.addr %s668, 4
        %s670 = smul.addr %s669, 8
        %s671 = scalar_lea.vmem %s11, %s670
        %p672 = pneg %p340
        %p673 = pneg %p337
        %p674 = scmp.lt.s32.totalorder %s36, 1
        %s675 = scalar_select %p674, %s36, 1
        %s676 = scalar_lea.vmem %s12, %s675
        %p677 = pneg %p366
        %p678 = pneg %p363
        %p679 = scmp.lt.s32.totalorder %s36, 1
        %s680 = scalar_select %p679, %s36, 1
        %s681 = smul.addr %s680, 16
        %s682 = smul.addr %s681, 8
        %s683 = scalar_lea.vmem %s13, %s682
        %p684 = pneg %p392
        %p685 = pneg %p389
        %p686 = scmp.lt.s32.totalorder %s36, 1
        %s687 = scalar_select %p686, %s36, 1
        %s688 = scalar_lea.vmem %s14, %s687
        %p689 = pneg %p418
        %p690 = pneg %p415
        %p691 = pneg %p439
        %p692 = pneg %p436
        %p693 = pneg %p460
        %p694 = pneg %p457
        %p695 = pneg %p486
        %p696 = pneg %p483
        %s697 = sand.u32 %s473, 1
        %s698 = scalar_lea.sflag [#allocation4], %s697
        %s699 = sand.u32 %s473, 1
        %s700 = smul.addr %s699, 8
        %s701 = scalar_lea.vmem [#allocation3], %s700
        %p702 = scmp.lt.s32.totalorder %s35, 1
        %s703 = scalar_select %p702, %s35, 1
        %s704 = smul.addr %s703, 3
        %s705 = smul.addr %s704, 8
        %s706 = scalar_lea.vmem %s0, %s705
        %p707 = scmp.lt.s32.totalorder %s36, 1
        %s708 = scalar_select %p707, %s36, 1
        %s709 = scalar_lea.vmem %s3, %s708
        %p710 = scmp.lt.s32.totalorder %s36, 1
        %s711 = scalar_select %p710, %s36, 1
        %s712 = scalar_lea.vmem %s4, %s711
        %p713 = scmp.lt.s32.totalorder %s36, 1
        %s714 = scalar_select %p713, %s36, 1
        %s715 = smul.addr %s714, 4
        %s716 = smul.addr %s715, 8
        %s717 = scalar_lea.vmem %s5, %s716
        %p718 = scmp.lt.s32.totalorder %s36, 1
        %s719 = scalar_select %p718, %s36, 1
        %s720 = scalar_lea.vmem %s6, %s719
        %p721 = scmp.lt.s32.totalorder %s36, 1
        %s722 = scalar_select %p721, %s36, 1
        %s723 = smul.addr %s722, 4
        %s724 = smul.addr %s723, 8
        %s725 = scalar_lea.vmem %s7, %s724
        %p726 = scmp.lt.s32.totalorder %s36, 1
        %s727 = scalar_select %p726, %s36, 1
        %s728 = scalar_lea.vmem %s8, %s727
        %p729 = scmp.lt.s32.totalorder %s36, 1
        %s730 = scalar_select %p729, %s36, 1
        %s731 = scalar_lea.vmem %s9, %s730
        %p732 = scmp.lt.s32.totalorder %s36, 1
        %s733 = scalar_select %p732, %s36, 1
        %s734 = scalar_lea.vmem %s10, %s733
        %p735 = scmp.lt.s32.totalorder %s36, 1
        %s736 = scalar_select %p735, %s36, 1
        %s737 = smul.addr %s736, 4
        %s738 = smul.addr %s737, 8
        %s739 = scalar_lea.vmem %s11, %s738
        %p740 = scmp.lt.s32.totalorder %s36, 1
        %s741 = scalar_select %p740, %s36, 1
        %s742 = scalar_lea.vmem %s12, %s741
        %p743 = scmp.lt.s32.totalorder %s36, 1
        %s744 = scalar_select %p743, %s36, 1
        %s745 = smul.addr %s744, 16
        %s746 = smul.addr %s745, 8
        %s747 = scalar_lea.vmem %s13, %s746
        %p748 = scmp.lt.s32.totalorder %s36, 1
        %s749 = scalar_select %p748, %s36, 1
        %s750 = scalar_lea.vmem %s14, %s749
        %p751 = scmp.eq.s32.totalorder %s36, 0
        // Predicated region
        $region89: #{tpu_custom_call.1} parent=87 // pred_check
          %p752 = pneg %p751
        $region90: #{tpu_custom_call.1} parent=87 // pred_check_branch
          %754 = sbr.rel (%p752) target = $region92
        $region91: #{tpu_custom_call.1} parent=87 // pred_region
          %v755 = vld [vmem:[%s706] sm:$0xff]
          %v756 = vld [vmem:[%s706 + $0x8] sm:$0xff]
          %v757 = vld [vmem:[%s706 + $0x10] sm:$0xff]
          %v758 = vld [vmem:[%s1] sm:$0xff]
          %v759 = vld [vmem:[%s1 + $0x8] sm:$0xff]
          %v760 = vld [vmem:[%s2] sm:$0x1]
          %v762 = vlaneseq
          %v763 = vshrl.u32 %v762, 7
          %v764 = vsub.s32 0, %v763
          %v765 = vrot.slane %v760, %v764
          %vm767 = vcmask 130048
          %v769 = vsel %vm767, %v755, 0
          %v772 = vsel %vm767, %v756, 0
          %v775 = vsel %vm767, %v757, 0
          %777 = vmatprep.subr.mxu0 0.0
          %778 = vmatpush1.msra.mxu0 %v758
          %779 = vmatprep.subr.mxu0 0.0
          %780 = vmatpush1.msra.mxu0 %v759
          %781 = vmatprep.subr.mxu0 0.0
          %782 = vmatpush1.msra.mxu0 0.0
          %783 = vmatprep.subr.mxu0 0.0
          %784 = vmatpush1.msra.mxu0 0.0
          %785 = vmatprep.subr.mxu0 0.0
          %786 = vmatpush1.msra.mxu0 0.0
          %787 = vmatprep.subr.mxu0 0.0
          %788 = vmatpush1.msra.mxu0 0.0
          %789 = vmatprep.subr.mxu0 0.0
          %790 = vmatpush1.msra.mxu0 0.0
          %791 = vmatprep.subr.mxu0 0.0
          %792 = vmatpush1.msra.mxu0 0.0
          %793 = vmatprep.subr.mxu0 0.0
          %794 = vmatpush1.msra.mxu0 0.0
          %795 = vmatprep.subr.mxu0 0.0
          %796 = vmatpush1.msra.mxu0 0.0
          %797 = vmatprep.subr.mxu0 0.0
          %798 = vmatpush1.msra.mxu0 0.0
          %799 = vmatprep.subr.mxu0 0.0
          %800 = vmatpush1.msra.mxu0 0.0
          %801 = vmatprep.subr.mxu0 0.0
          %802 = vmatpush1.msra.mxu0 0.0
          %803 = vmatprep.subr.mxu0 0.0
          %804 = vmatpush1.msra.mxu0 0.0
          %805 = vmatprep.subr.mxu0 0.0
          %806 = vmatpush1.msra.mxu0 0.0
          %807 = vmatprep.subr.mxu0 0.0
          %808 = vmatpush1.msra.mxu0 0.0
          %809 = vmatprep.subr.mxu0 0.0
          %810 = vmatpush1.msra.mxu0 0.0
          %811 = vmatprep.subr.mxu0 0.0
          %812 = vmatpush1.msra.mxu0 0.0
          %813 = vmatprep.subr.mxu0 0.0
          %814 = vmatpush1.msra.mxu0 0.0
          %815 = vmatprep.subr.mxu0 0.0
          %816 = vmatpush1.msra.mxu0 0.0
          %817 = vmatprep.subr.mxu0 0.0
          %818 = vmatpush1.msra.mxu0 0.0
          %819 = vmatprep.subr.mxu0 0.0
          %820 = vmatpush1.msra.mxu0 0.0
          %821 = vmatprep.subr.mxu0 0.0
          %822 = vmatpush1.msra.mxu0 0.0
          %823 = vmatprep.subr.mxu0 0.0
          %824 = vmatpush1.msra.mxu0 0.0
          %825 = vmatprep.subr.mxu0 0.0
          %826 = vmatpush1.msra.mxu0 0.0
          %827 = vmatprep.subr.mxu0 0.0
          %828 = vmatpush1.msra.mxu0 0.0
          %829 = vmatprep.subr.mxu0 0.0
          %830 = vmatpush1.msra.mxu0 0.0
          %831 = vmatprep.subr.mxu0 0.0
          %832 = vmatpush1.msra.mxu0 0.0
          %833 = vmatprep.subr.mxu0 0.0
          %834 = vmatpush1.msra.mxu0 0.0
          %835 = vmatprep.subr.mxu0 0.0
          %836 = vmatpush1.msra.mxu0 0.0
          %837 = vmatprep.subr.mxu0 0.0
          %838 = vmatpush1.msra.mxu0 0.0
          %839 = vmatprep.subr.mxu0 0.0
          %840 = vmatpush1.msra.mxu0 0.0
          %841 = vmatprep.mubr.f32.mxu0 0.0
          %842 = vmatmul.mubr.f32.gmra.mrb[0].mxu0 %v769
          %v843 = vpop.f32.mrb[0].mxu0
          %v844 = vadd.f32 %v765, %v843
          %v845 = vpop.f32.mrb[0].mxu0
          %846 = vmatprep.mubr.f32.mxu0 0.0
          %847 = vmatmul.mubr.f32.gmra.mrb[0].mxu0 %v772
          %v848 = vpop.f32.mrb[0].mxu0
          %v849 = vadd.f32 %v765, %v848
          %v850 = vpop.f32.mrb[0].mxu0
          %851 = vmatprep.mubr.f32.mxu0 0.0
          %852 = vmatmul.mubr.f32.gmra.mrb[0].mxu0 %v775
          %v853 = vpop.f32.mrb[0].mxu0
          %v854 = vadd.f32 %v765, %v853
          %v855 = vpop.f32.mrb[0].mxu0
          %856 = vdwg.mxu0
          %vm857 = vcmask 261120
          %858 = vst.msk [vmem:[#allocation2] sm:$0xff] %vm857, %v844
          %859 = vst.msk [vmem:[#allocation2 + $0x8] sm:$0xff] %vm857, %v849
          %860 = vst.msk [vmem:[#allocation2 + $0x10] sm:$0xff] %vm857, %v854
        $region92: #{tpu_custom_call.1} parent=87 // pred_fallthru
          _
        %v861 = vld [vmem:[#allocation2] sm:$0xff]
        %v862 = vld [vmem:[#allocation2 + $0x8] sm:$0xff]
        %v863 = vld [vmem:[#allocation2 + $0x10] sm:$0xff]
        %v864 = vld [vmem:[%s709] sm:$0x1]
        %v865 = vld [vmem:[%s712] sm:$0x1]
        %vm866 = vcmask 261120
        %v867 = vsel %vm866, %v861, 0.0
        %868 = vadd.xlane.f32.xlu0 %v867
        %v869 = vpop.xlane.xlu0 %868
        %v870 = vsel %vm866, %v862, 0.0
        %871 = vadd.xlane.f32.xlu0 %v870
        %v872 = vpop.xlane.xlu0 %871
        %v873 = vsel %vm866, %v863, 0.0
        %874 = vadd.xlane.f32.xlu0 %v873
        %v875 = vpop.xlane.xlu0 %874
        %v876 = vrcp.pop 32.0
        %v877 = vmul.f32 %v869, %v876
        %v878 = vmul.f32 %v872, %v876
        %v879 = vmul.f32 %v875, %v876
        %v880 = vsub.f32 %v861, %v877
        %v881 = vsub.f32 %v862, %v878
        %v882 = vsub.f32 %v863, %v879
        %v883 = vmul.f32 %v880, %v880
        %v884 = vmul.f32 %v881, %v881
        %v885 = vmul.f32 %v882, %v882
        %v886 = vsel %vm866, %v883, 0.0
        %887 = vadd.xlane.f32.xlu0 %v886
        %v888 = vpop.xlane.xlu0 %887
        %v889 = vsel %vm866, %v884, 0.0
        %890 = vadd.xlane.f32.xlu0 %v889
        %v891 = vpop.xlane.xlu0 %890
        %v892 = vsel %vm866, %v885, 0.0
        %893 = vadd.xlane.f32.xlu0 %v892
        %v894 = vpop.xlane.xlu0 %893
        %v895 = vmul.f32 %v888, %v876
        %v896 = vmul.f32 %v891, %v876
        %v897 = vmul.f32 %v894, %v876
        %v898 = vadd.f32 %v895, 1e-05
        %v899 = vadd.f32 %v896, 1e-05
        %v900 = vadd.f32 %v897, 1e-05
        %v901 = vrsqrt.pop %v898
        %v902 = vrsqrt.pop %v899
        %v903 = vrsqrt.pop %v900
        %v904 = vmul.f32 %v880, %v901
        %v905 = vmul.f32 %v881, %v902
        %v906 = vmul.f32 %v882, %v903
        %v908 = vlaneseq
        %v909 = vshrl.u32 %v908, 7
        %v910 = vsub.s32 0, %v909
        %v911 = vrot.slane %v864, %v910
        %v913 = vmul.f32 %v904, %v911
        %v914 = vmul.f32 %v905, %v911
        %v915 = vmul.f32 %v906, %v911
        %v917 = vlaneseq
        %v918 = vshrl.u32 %v917, 7
        %v919 = vsub.s32 0, %v918
        %v920 = vrot.slane %v865, %v919
        %v922 = vadd.f32 %v913, %v920
        %v923 = vadd.f32 %v914, %v920
        %v924 = vadd.f32 %v915, %v920
        %v925 = vld [vmem:[%s717] sm:$0xff]
        %v926 = vld [vmem:[%s717 + $0x8] sm:$0xff]
        %v927 = vld [vmem:[%s717 + $0x10] sm:$0xff]
        %v928 = vld [vmem:[%s717 + $0x18] sm:$0xff]
        %v929 = vld [vmem:[%s720] sm:$0x1]
        %v931 = vlaneseq
        %v932 = vshrl.u32 %v931, 7
        %v933 = vsub.s32 0, %v932
        %v934 = vrot.slane %v929, %v933
        %v937 = vsel %vm866, %v922, 0
        %v940 = vsel %vm866, %v923, 0
        %v943 = vsel %vm866, %v924, 0
        %945 = vmatprep.subr.mxu0 0.0
        %946 = vmatpush1.msra.mxu0 %v925
        %947 = vmatprep.subr.mxu0 0.0
        %948 = vmatpush1.msra.mxu0 %v926
        %949 = vmatprep.subr.mxu0 0.0
        %950 = vmatpush1.msra.mxu0 %v927
        %951 = vmatprep.subr.mxu0 0.0
        %952 = vmatpush1.msra.mxu0 %v928
        %953 = vmatprep.subr.mxu0 0.0
        %954 = vmatpush1.msra.mxu0 0.0
        %955 = vmatprep.subr.mxu0 0.0
        %956 = vmatpush1.msra.mxu0 0.0
        %957 = vmatprep.subr.mxu0 0.0
        %958 = vmatpush1.msra.mxu0 0.0
        %959 = vmatprep.subr.mxu0 0.0
        %960 = vmatpush1.msra.mxu0 0.0
        %961 = vmatprep.subr.mxu0 0.0
        %962 = vmatpush1.msra.mxu0 0.0
        %963 = vmatprep.subr.mxu0 0.0
        %964 = vmatpush1.msra.mxu0 0.0
        %965 = vmatprep.subr.mxu0 0.0
        %966 = vmatpush1.msra.mxu0 0.0
        %967 = vmatprep.subr.mxu0 0.0
        %968 = vmatpush1.msra.mxu0 0.0
        %969 = vmatprep.subr.mxu0 0.0
        %970 = vmatpush1.msra.mxu0 0.0
        %971 = vmatprep.subr.mxu0 0.0
        %972 = vmatpush1.msra.mxu0 0.0
        %973 = vmatprep.subr.mxu0 0.0
        %974 = vmatpush1.msra.mxu0 0.0
        %975 = vmatprep.subr.mxu0 0.0
        %976 = vmatpush1.msra.mxu0 0.0
        %977 = vmatprep.subr.mxu0 0.0
        %978 = vmatpush1.msra.mxu0 0.0
        %979 = vmatprep.subr.mxu0 0.0
        %980 = vmatpush1.msra.mxu0 0.0
        %981 = vmatprep.subr.mxu0 0.0
        %982 = vmatpush1.msra.mxu0 0.0
        %983 = vmatprep.subr.mxu0 0.0
        %984 = vmatpush1.msra.mxu0 0.0
        %985 = vmatprep.subr.mxu0 0.0
        %986 = vmatpush1.msra.mxu0 0.0
        %987 = vmatprep.subr.mxu0 0.0
        %988 = vmatpush1.msra.mxu0 0.0
        %989 = vmatprep.subr.mxu0 0.0
        %990 = vmatpush1.msra.mxu0 0.0
        %991 = vmatprep.subr.mxu0 0.0
        %992 = vmatpush1.msra.mxu0 0.0
        %993 = vmatprep.subr.mxu0 0.0
        %994 = vmatpush1.msra.mxu0 0.0
        %995 = vmatprep.subr.mxu0 0.0
        %996 = vmatpush1.msra.mxu0 0.0
        %997 = vmatprep.subr.mxu0 0.0
        %998 = vmatpush1.msra.mxu0 0.0
        %999 = vmatprep.subr.mxu0 0.0
        %1000 = vmatpush1.msra.mxu0 0.0
        %1001 = vmatprep.subr.mxu0 0.0
        %1002 = vmatpush1.msra.mxu0 0.0
        %1003 = vmatprep.subr.mxu0 0.0
        %1004 = vmatpush1.msra.mxu0 0.0
        %1005 = vmatprep.subr.mxu0 0.0
        %1006 = vmatpush1.msra.mxu0 0.0
        %1007 = vmatprep.subr.mxu0 0.0
        %1008 = vmatpush1.msra.mxu0 0.0
        %1009 = vmatprep.mubr.f32.mxu0 0.0
        %1010 = vmatmul.mubr.f32.gmra.mrb[0].mxu0 %v937
        %v1011 = vpop.f32.mrb[0].mxu0
        %v1012 = vadd.f32 %v934, %v1011
        %v1013 = vpop.f32.mrb[0].mxu0
        %1014 = vmatprep.mubr.f32.mxu0 0.0
        %1015 = vmatmul.mubr.f32.gmra.mrb[0].mxu0 %v940
        %v1016 = vpop.f32.mrb[0].mxu0
        %v1017 = vadd.f32 %v934, %v1016
        %v1018 = vpop.f32.mrb[0].mxu0
        %1019 = vmatprep.mubr.f32.mxu0 0.0
        %1020 = vmatmul.mubr.f32.gmra.mrb[0].mxu0 %v943
        %v1021 = vpop.f32.mrb[0].mxu0
        %v1022 = vadd.f32 %v934, %v1021
        %v1023 = vpop.f32.mrb[0].mxu0
        %1024 = vdwg.mxu0
        %v1025 = vlaneseq
        %v1026 = vshrl.u32 %v1025, 7
        %v1027 = vadd.s32 %v1026, 8
        %v1028 = vadd.s32 %v1026, 16
        %v1029 = vlaneseq
        %v1030 = vand.u32 %v1029, 127
        %vm1031 = vcmp.le.s32.totalorder %v1030, %v1026
        %vm1032 = vcmp.le.s32.totalorder %v1030, %v1027
        %vm1033 = vcmp.le.s32.totalorder %v1030, %v1028
        %1037 = vrot.lane.b32.xlu0 %v1012, 96
        %v1038 = vpop.permute.xlu0 %1037
        %1039 = vrot.lane.b32.xlu0 %v1017, 96
        %v1040 = vpop.permute.xlu0 %1039
        %1041 = vrot.lane.b32.xlu0 %v1022, 96
        %v1042 = vpop.permute.xlu0 %1041
        %vm1043 = vcmask 64512
        %v1044 = vsel %vm1043, %v1012, 0
        %v1046 = vsel %vm1043, %v1017, 0
        %v1048 = vsel %vm1043, %v1022, 0
        %v1050 = vsel %vm1043, %v1038, 0
        %v1052 = vsel %vm1043, %v1040, 0
        %v1054 = vsel %vm1043, %v1042, 0
        %1056 = vmatprep.subr.mxu0 0.0
        %1057 = vmatpush1.xpose.msra.mxu0 %v1050
        %1058 = vmatprep.subr.mxu0 0.0
        %1059 = vmatpush1.xpose.msra.mxu0 %v1052
        %1060 = vmatprep.subr.mxu0 0.0
        %1061 = vmatpush1.xpose.msra.mxu0 %v1054
        %1062 = vmatprep.subr.mxu0 0.0
        %1063 = vmatpush1.xpose.msra.mxu0 0.0
        %1064 = vmatprep.subr.mxu0 0.0
        %1065 = vmatpush1.xpose.msra.mxu0 0.0
        %1066 = vmatprep.subr.mxu0 0.0
        %1067 = vmatpush1.xpose.msra.mxu0 0.0
        %1068 = vmatprep.subr.mxu0 0.0
        %1069 = vmatpush1.xpose.msra.mxu0 0.0
        %1070 = vmatprep.subr.mxu0 0.0
        %1071 = vmatpush1.xpose.msra.mxu0 0.0
        %1072 = vmatprep.subr.mxu0 0.0
        %1073 = vmatpush1.xpose.msra.mxu0 0.0
        %1074 = vmatprep.subr.mxu0 0.0
        %1075 = vmatpush1.xpose.msra.mxu0 0.0
        %1076 = vmatprep.subr.mxu0 0.0
        %1077 = vmatpush1.xpose.msra.mxu0 0.0
        %1078 = vmatprep.subr.mxu0 0.0
        %1079 = vmatpush1.xpose.msra.mxu0 0.0
        %1080 = vmatprep.subr.mxu0 0.0
        %1081 = vmatpush1.xpose.msra.mxu0 0.0
        %1082 = vmatprep.subr.mxu0 0.0
        %1083 = vmatpush1.xpose.msra.mxu0 0.0
        %1084 = vmatprep.subr.mxu0 0.0
        %1085 = vmatpush1.xpose.msra.mxu0 0.0
        %1086 = vmatprep.subr.mxu0 0.0
        %1087 = vmatpush1.xpose.msra.mxu0 0.0
        %1088 = vmatprep.subr.mxu0 0.0
        %1089 = vmatpush1.xpose.msra.mxu0 0.0
        %1090 = vmatprep.subr.mxu0 0.0
        %1091 = vmatpush1.xpose.msra.mxu0 0.0
        %1092 = vmatprep.subr.mxu0 0.0
        %1093 = vmatpush1.xpose.msra.mxu0 0.0
        %1094 = vmatprep.subr.mxu0 0.0
        %1095 = vmatpush1.xpose.msra.mxu0 0.0
        %1096 = vmatprep.subr.mxu0 0.0
        %1097 = vmatpush1.xpose.msra.mxu0 0.0
        %1098 = vmatprep.subr.mxu0 0.0
        %1099 = vmatpush1.xpose.msra.mxu0 0.0
        %1100 = vmatprep.subr.mxu0 0.0
        %1101 = vmatpush1.xpose.msra.mxu0 0.0
        %1102 = vmatprep.subr.mxu0 0.0
        %1103 = vmatpush1.xpose.msra.mxu0 0.0
        %1104 = vmatprep.subr.mxu0 0.0
        %1105 = vmatpush1.xpose.msra.mxu0 0.0
        %1106 = vmatprep.subr.mxu0 0.0
        %1107 = vmatpush1.xpose.msra.mxu0 0.0
        %1108 = vmatprep.subr.mxu0 0.0
        %1109 = vmatpush1.xpose.msra.mxu0 0.0
        %1110 = vmatprep.subr.mxu0 0.0
        %1111 = vmatpush1.xpose.msra.mxu0 0.0
        %1112 = vmatprep.subr.mxu0 0.0
        %1113 = vmatpush1.xpose.msra.mxu0 0.0
        %1114 = vmatprep.subr.mxu0 0.0
        %1115 = vmatpush1.xpose.msra.mxu0 0.0
        %1116 = vmatprep.subr.mxu0 0.0
        %1117 = vmatpush1.xpose.msra.mxu0 0.0
        %1118 = vmatprep.subr.mxu0 0.0
        %1119 = vmatpush1.xpose.msra.mxu0 0.0
        %1120 = vmatprep.mubr.f32.mxu0 0.0
        %1121 = vmatmul.mubr.f32.gmra.mrb[0].mxu0 %v1044
        %v1122 = vpop.f32.mrb[0].mxu0
        %v1123 = vadd.f32 0.0, %v1122
        %v1124 = vpop.f32.mrb[0].mxu0
        %1125 = vmatprep.mubr.f32.mxu0 0.0
        %1126 = vmatmul.mubr.f32.gmra.mrb[0].mxu0 %v1046
        %v1127 = vpop.f32.mrb[0].mxu0
        %v1128 = vadd.f32 0.0, %v1127
        %v1129 = vpop.f32.mrb[0].mxu0
        %1130 = vmatprep.mubr.f32.mxu0 0.0
        %1131 = vmatmul.mubr.f32.gmra.mrb[0].mxu0 %v1048
        %v1132 = vpop.f32.mrb[0].mxu0
        %v1133 = vadd.f32 0.0, %v1132
        %v1134 = vpop.f32.mrb[0].mxu0
        %1135 = vdwg.mxu0
        %v1136 = vmul.f32 %v1123, 0.35355338
        %v1137 = vmul.f32 %v1128, 0.35355338
        %v1138 = vmul.f32 %v1133, 0.35355338
        %v1139 = vsel %vm1031, %v1136, -1e+30
        %v1140 = vsel %vm1032, %v1137, -1e+30
        %v1141 = vsel %vm1033, %v1138, -1e+30
        %vm1142 = vcmask 195584
        %v1143 = vsel %vm1142, %v1139, -inf
        %1144 = vmax.xlane.f32.xlu0 %v1143
        %v1145 = vpop.xlane.xlu0 %1144
        %v1146 = vsel %vm1142, %v1140, -inf
        %1147 = vmax.xlane.f32.xlu0 %v1146
        %v1148 = vpop.xlane.xlu0 %1147
        %v1149 = vsel %vm1142, %v1141, -inf
        %1150 = vmax.xlane.f32.xlu0 %v1149
        %v1151 = vpop.xlane.xlu0 %1150
        %v1152 = vsub.f32 %v1139, %v1145
        %v1153 = vsub.f32 %v1140, %v1148
        %v1154 = vsub.f32 %v1141, %v1151
        %v1155 = vmul.f32 %v1152, 1.442695
        %v1156 = vpow.pop %v1155
        %v1157 = vmul.f32 %v1153, 1.442695
        %v1158 = vpow.pop %v1157
        %v1159 = vmul.f32 %v1154, 1.442695
        %v1160 = vpow.pop %v1159
        %v1161 = vsel %vm1142, %v1156, 0.0
        %1162 = vadd.xlane.f32.xlu0 %v1161
        %v1163 = vpop.xlane.xlu0 %1162
        %v1164 = vsel %vm1142, %v1158, 0.0
        %1165 = vadd.xlane.f32.xlu0 %v1164
        %v1166 = vpop.xlane.xlu0 %1165
        %v1167 = vsel %vm1142, %v1160, 0.0
        %1168 = vadd.xlane.f32.xlu0 %v1167
        %v1169 = vpop.xlane.xlu0 %1168
        %v1170 = vrcp.pop %v1163
        %v1171 = vrcp.pop %v1166
        %v1172 = vrcp.pop %v1169
        %v1173 = vmul.f32 %v1156, %v1170
        %v1174 = vmul.f32 %v1158, %v1171
        %v1175 = vmul.f32 %v1160, %v1172
        %1176 = vrot.lane.b32.xlu0 %v1012, 64
        %v1177 = vpop.permute.xlu0 %1176
        %1178 = vrot.lane.b32.xlu0 %v1017, 64
        %v1179 = vpop.permute.xlu0 %1178
        %1180 = vrot.lane.b32.xlu0 %v1022, 64
        %v1181 = vpop.permute.xlu0 %1180
        %v1186 = vsel %vm1142, %v1173, 0
        %v1189 = vsel %vm1142, %v1174, 0
        %v1192 = vsel %vm1142, %v1175, 0
        %1194 = vmatprep.subr.mxu0 0.0
        %1195 = vmatpush1.msra.mxu0 %v1177
        %1196 = vmatprep.subr.mxu0 0.0
        %1197 = vmatpush1.msra.mxu0 %v1179
        %1198 = vmatprep.subr.mxu0 0.0
        %1199 = vmatpush1.msra.mxu0 %v1181
        %1200 = vmatprep.subr.mxu0 0.0
        %1201 = vmatpush1.msra.mxu0 0.0
        %1202 = vmatprep.subr.mxu0 0.0
        %1203 = vmatpush1.msra.mxu0 0.0
        %1204 = vmatprep.subr.mxu0 0.0
        %1205 = vmatpush1.msra.mxu0 0.0
        %1206 = vmatprep.subr.mxu0 0.0
        %1207 = vmatpush1.msra.mxu0 0.0
        %1208 = vmatprep.subr.mxu0 0.0
        %1209 = vmatpush1.msra.mxu0 0.0
        %1210 = vmatprep.subr.mxu0 0.0
        %1211 = vmatpush1.msra.mxu0 0.0
        %1212 = vmatprep.subr.mxu0 0.0
        %1213 = vmatpush1.msra.mxu0 0.0
        %1214 = vmatprep.subr.mxu0 0.0
        %1215 = vmatpush1.msra.mxu0 0.0
        %1216 = vmatprep.subr.mxu0 0.0
        %1217 = vmatpush1.msra.mxu0 0.0
        %1218 = vmatprep.subr.mxu0 0.0
        %1219 = vmatpush1.msra.mxu0 0.0
        %1220 = vmatprep.subr.mxu0 0.0
        %1221 = vmatpush1.msra.mxu0 0.0
        %1222 = vmatprep.subr.mxu0 0.0
        %1223 = vmatpush1.msra.mxu0 0.0
        %1224 = vmatprep.subr.mxu0 0.0
        %1225 = vmatpush1.msra.mxu0 0.0
        %1226 = vmatprep.subr.mxu0 0.0
        %1227 = vmatpush1.msra.mxu0 0.0
        %1228 = vmatprep.subr.mxu0 0.0
        %1229 = vmatpush1.msra.mxu0 0.0
        %1230 = vmatprep.subr.mxu0 0.0
        %1231 = vmatpush1.msra.mxu0 0.0
        %1232 = vmatprep.subr.mxu0 0.0
        %1233 = vmatpush1.msra.mxu0 0.0
        %1234 = vmatprep.subr.mxu0 0.0
        %1235 = vmatpush1.msra.mxu0 0.0
        %1236 = vmatprep.subr.mxu0 0.0
        %1237 = vmatpush1.msra.mxu0 0.0
        %1238 = vmatprep.subr.mxu0 0.0
        %1239 = vmatpush1.msra.mxu0 0.0
        %1240 = vmatprep.subr.mxu0 0.0
        %1241 = vmatpush1.msra.mxu0 0.0
        %1242 = vmatprep.subr.mxu0 0.0
        %1243 = vmatpush1.msra.mxu0 0.0
        %1244 = vmatprep.subr.mxu0 0.0
        %1245 = vmatpush1.msra.mxu0 0.0
        %1246 = vmatprep.subr.mxu0 0.0
        %1247 = vmatpush1.msra.mxu0 0.0
        %1248 = vmatprep.subr.mxu0 0.0
        %1249 = vmatpush1.msra.mxu0 0.0
        %1250 = vmatprep.subr.mxu0 0.0
        %1251 = vmatpush1.msra.mxu0 0.0
        %1252 = vmatprep.subr.mxu0 0.0
        %1253 = vmatpush1.msra.mxu0 0.0
        %1254 = vmatprep.subr.mxu0 0.0
        %1255 = vmatpush1.msra.mxu0 0.0
        %1256 = vmatprep.subr.mxu0 0.0
        %1257 = vmatpush1.msra.mxu0 0.0
        %1258 = vmatprep.mubr.f32.mxu0 0.0
        %1259 = vmatmul.mubr.f32.gmra.mrb[0].mxu0 %v1186
        %v1260 = vpop.f32.mrb[0].mxu0
        %v1261 = vadd.f32 0.0, %v1260
        %v1262 = vpop.f32.mrb[0].mxu0
        %1263 = vmatprep.mubr.f32.mxu0 0.0
        %1264 = vmatmul.mubr.f32.gmra.mrb[0].mxu0 %v1189
        %v1265 = vpop.f32.mrb[0].mxu0
        %v1266 = vadd.f32 0.0, %v1265
        %v1267 = vpop.f32.mrb[0].mxu0
        %1268 = vmatprep.mubr.f32.mxu0 0.0
        %1269 = vmatmul.mubr.f32.gmra.mrb[0].mxu0 %v1192
        %v1270 = vpop.f32.mrb[0].mxu0
        %v1271 = vadd.f32 0.0, %v1270
        %v1272 = vpop.f32.mrb[0].mxu0
        %1273 = vdwg.mxu0
        %1274 = vrot.lane.b32.xlu0 %v1012, 120
        %v1275 = vpop.permute.xlu0 %1274
        %1276 = vrot.lane.b32.xlu0 %v1017, 120
        %v1277 = vpop.permute.xlu0 %1276
        %1278 = vrot.lane.b32.xlu0 %v1022, 120
        %v1279 = vpop.permute.xlu0 %1278
        %1280 = vrot.lane.b32.xlu0 %v1012, 88
        %v1281 = vpop.permute.xlu0 %1280
        %1282 = vrot.lane.b32.xlu0 %v1017, 88
        %v1283 = vpop.permute.xlu0 %1282
        %1284 = vrot.lane.b32.xlu0 %v1022, 88
        %v1285 = vpop.permute.xlu0 %1284
        %v1286 = vsel %vm1043, %v1275, 0
        %v1288 = vsel %vm1043, %v1277, 0
        %v1290 = vsel %vm1043, %v1279, 0
        %v1292 = vsel %vm1043, %v1281, 0
        %v1294 = vsel %vm1043, %v1283, 0
        %v1296 = vsel %vm1043, %v1285, 0
        %1298 = vmatprep.subr.mxu0 0.0
        %1299 = vmatpush1.xpose.msra.mxu0 %v1292
        %1300 = vmatprep.subr.mxu0 0.0
        %1301 = vmatpush1.xpose.msra.mxu0 %v1294
        %1302 = vmatprep.subr.mxu0 0.0
        %1303 = vmatpush1.xpose.msra.mxu0 %v1296
        %1304 = vmatprep.subr.mxu0 0.0
        %1305 = vmatpush1.xpose.msra.mxu0 0.0
        %1306 = vmatprep.subr.mxu0 0.0
        %1307 = vmatpush1.xpose.msra.mxu0 0.0
        %1308 = vmatprep.subr.mxu0 0.0
        %1309 = vmatpush1.xpose.msra.mxu0 0.0
        %1310 = vmatprep.subr.mxu0 0.0
        %1311 = vmatpush1.xpose.msra.mxu0 0.0
        %1312 = vmatprep.subr.mxu0 0.0
        %1313 = vmatpush1.xpose.msra.mxu0 0.0
        %1314 = vmatprep.subr.mxu0 0.0
        %1315 = vmatpush1.xpose.msra.mxu0 0.0
        %1316 = vmatprep.subr.mxu0 0.0
        %1317 = vmatpush1.xpose.msra.mxu0 0.0
        %1318 = vmatprep.subr.mxu0 0.0
        %1319 = vmatpush1.xpose.msra.mxu0 0.0
        %1320 = vmatprep.subr.mxu0 0.0
        %1321 = vmatpush1.xpose.msra.mxu0 0.0
        %1322 = vmatprep.subr.mxu0 0.0
        %1323 = vmatpush1.xpose.msra.mxu0 0.0
        %1324 = vmatprep.subr.mxu0 0.0
        %1325 = vmatpush1.xpose.msra.mxu0 0.0
        %1326 = vmatprep.subr.mxu0 0.0
        %1327 = vmatpush1.xpose.msra.mxu0 0.0
        %1328 = vmatprep.subr.mxu0 0.0
        %1329 = vmatpush1.xpose.msra.mxu0 0.0
        %1330 = vmatprep.subr.mxu0 0.0
        %1331 = vmatpush1.xpose.msra.mxu0 0.0
        %1332 = vmatprep.subr.mxu0 0.0
        %1333 = vmatpush1.xpose.msra.mxu0 0.0
        %1334 = vmatprep.subr.mxu0 0.0
        %1335 = vmatpush1.xpose.msra.mxu0 0.0
        %1336 = vmatprep.subr.mxu0 0.0
        %1337 = vmatpush1.xpose.msra.mxu0 0.0
        %1338 = vmatprep.subr.mxu0 0.0
        %1339 = vmatpush1.xpose.msra.mxu0 0.0
        %1340 = vmatprep.subr.mxu0 0.0
        %1341 = vmatpush1.xpose.msra.mxu0 0.0
        %1342 = vmatprep.subr.mxu0 0.0
        %1343 = vmatpush1.xpose.msra.mxu0 0.0
        %1344 = vmatprep.subr.mxu0 0.0
        %1345 = vmatpush1.xpose.msra.mxu0 0.0
        %1346 = vmatprep.subr.mxu0 0.0
        %1347 = vmatpush1.xpose.msra.mxu0 0.0
        %1348 = vmatprep.subr.mxu0 0.0
        %1349 = vmatpush1.xpose.msra.mxu0 0.0
        %1350 = vmatprep.subr.mxu0 0.0
        %1351 = vmatpush1.xpose.msra.mxu0 0.0
        %1352 = vmatprep.subr.mxu0 0.0
        %1353 = vmatpush1.xpose.msra.mxu0 0.0
        %1354 = vmatprep.subr.mxu0 0.0
        %1355 = vmatpush1.xpose.msra.mxu0 0.0
        %1356 = vmatprep.subr.mxu0 0.0
        %1357 = vmatpush1.xpose.msra.mxu0 0.0
        %1358 = vmatprep.subr.mxu0 0.0
        %1359 = vmatpush1.xpose.msra.mxu0 0.0
        %1360 = vmatprep.subr.mxu0 0.0
        %1361 = vmatpush1.xpose.msra.mxu0 0.0
        %1362 = vmatprep.mubr.f32.mxu0 0.0
        %1363 = vmatmul.mubr.f32.gmra.mrb[0].mxu0 %v1286
        %v1364 = vpop.f32.mrb[0].mxu0
        %v1365 = vadd.f32 0.0, %v1364
        %v1366 = vpop.f32.mrb[0].mxu0
        %1367 = vmatprep.mubr.f32.mxu0 0.0
        %1368 = vmatmul.mubr.f32.gmra.mrb[0].mxu0 %v1288
        %v1369 = vpop.f32.mrb[0].mxu0
        %v1370 = vadd.f32 0.0, %v1369
        %v1371 = vpop.f32.mrb[0].mxu0
        %1372 = vmatprep.mubr.f32.mxu0 0.0
        %1373 = vmatmul.mubr.f32.gmra.mrb[0].mxu0 %v1290
        %v1374 = vpop.f32.mrb[0].mxu0
        %v1375 = vadd.f32 0.0, %v1374
        %v1376 = vpop.f32.mrb[0].mxu0
        %1377 = vdwg.mxu0
        %v1378 = vmul.f32 %v1365, 0.35355338
        %v1379 = vmul.f32 %v1370, 0.35355338
        %v1380 = vmul.f32 %v1375, 0.35355338
        %v1381 = vsel %vm1031, %v1378, -1e+30
        %v1382 = vsel %vm1032, %v1379, -1e+30
        %v1383 = vsel %vm1033, %v1380, -1e+30
        %v1384 = vsel %vm1142, %v1381, -inf
        %1385 = vmax.xlane.f32.xlu0 %v1384
        %v1386 = vpop.xlane.xlu0 %1385
        %v1387 = vsel %vm1142, %v1382, -inf
        %1388 = vmax.xlane.f32.xlu0 %v1387
        %v1389 = vpop.xlane.xlu0 %1388
        %v1390 = vsel %vm1142, %v1383, -inf
        %1391 = vmax.xlane.f32.xlu0 %v1390
        %v1392 = vpop.xlane.xlu0 %1391
        %v1393 = vsub.f32 %v1381, %v1386
        %v1394 = vsub.f32 %v1382, %v1389
        %v1395 = vsub.f32 %v1383, %v1392
        %v1396 = vmul.f32 %v1393, 1.442695
        %v1397 = vpow.pop %v1396
        %v1398 = vmul.f32 %v1394, 1.442695
        %v1399 = vpow.pop %v1398
        %v1400 = vmul.f32 %v1395, 1.442695
        %v1401 = vpow.pop %v1400
        %v1402 = vsel %vm1142, %v1397, 0.0
        %1403 = vadd.xlane.f32.xlu0 %v1402
        %v1404 = vpop.xlane.xlu0 %1403
        %v1405 = vsel %vm1142, %v1399, 0.0
        %1406 = vadd.xlane.f32.xlu0 %v1405
        %v1407 = vpop.xlane.xlu0 %1406
        %v1408 = vsel %vm1142, %v1401, 0.0
        %1409 = vadd.xlane.f32.xlu0 %v1408
        %v1410 = vpop.xlane.xlu0 %1409
        %v1411 = vrcp.pop %v1404
        %v1412 = vrcp.pop %v1407
        %v1413 = vrcp.pop %v1410
        %v1414 = vmul.f32 %v1397, %v1411
        %v1415 = vmul.f32 %v1399, %v1412
        %v1416 = vmul.f32 %v1401, %v1413
        %1417 = vrot.lane.b32.xlu0 %v1012, 56
        %v1418 = vpop.permute.xlu0 %1417
        %1419 = vrot.lane.b32.xlu0 %v1017, 56
        %v1420 = vpop.permute.xlu0 %1419
        %1421 = vrot.lane.b32.xlu0 %v1022, 56
        %v1422 = vpop.permute.xlu0 %1421
        %v1427 = vsel %vm1142, %v1414, 0
        %v1430 = vsel %vm1142, %v1415, 0
        %v1433 = vsel %vm1142, %v1416, 0
        %1435 = vmatprep.subr.mxu0 0.0
        %1436 = vmatpush1.msra.mxu0 %v1418
        %1437 = vmatprep.subr.mxu0 0.0
        %1438 = vmatpush1.msra.mxu0 %v1420
        %1439 = vmatprep.subr.mxu0 0.0
        %1440 = vmatpush1.msra.mxu0 %v1422
        %1441 = vmatprep.subr.mxu0 0.0
        %1442 = vmatpush1.msra.mxu0 0.0
        %1443 = vmatprep.subr.mxu0 0.0
        %1444 = vmatpush1.msra.mxu0 0.0
        %1445 = vmatprep.subr.mxu0 0.0
        %1446 = vmatpush1.msra.mxu0 0.0
        %1447 = vmatprep.subr.mxu0 0.0
        %1448 = vmatpush1.msra.mxu0 0.0
        %1449 = vmatprep.subr.mxu0 0.0
        %1450 = vmatpush1.msra.mxu0 0.0
        %1451 = vmatprep.subr.mxu0 0.0
        %1452 = vmatpush1.msra.mxu0 0.0
        %1453 = vmatprep.subr.mxu0 0.0
        %1454 = vmatpush1.msra.mxu0 0.0
        %1455 = vmatprep.subr.mxu0 0.0
        %1456 = vmatpush1.msra.mxu0 0.0
        %1457 = vmatprep.subr.mxu0 0.0
        %1458 = vmatpush1.msra.mxu0 0.0
        %1459 = vmatprep.subr.mxu0 0.0
        %1460 = vmatpush1.msra.mxu0 0.0
        %1461 = vmatprep.subr.mxu0 0.0
        %1462 = vmatpush1.msra.mxu0 0.0
        %1463 = vmatprep.subr.mxu0 0.0
        %1464 = vmatpush1.msra.mxu0 0.0
        %1465 = vmatprep.subr.mxu0 0.0
        %1466 = vmatpush1.msra.mxu0 0.0
        %1467 = vmatprep.subr.mxu0 0.0
        %1468 = vmatpush1.msra.mxu0 0.0
        %1469 = vmatprep.subr.mxu0 0.0
        %1470 = vmatpush1.msra.mxu0 0.0
        %1471 = vmatprep.subr.mxu0 0.0
        %1472 = vmatpush1.msra.mxu0 0.0
        %1473 = vmatprep.subr.mxu0 0.0
        %1474 = vmatpush1.msra.mxu0 0.0
        %1475 = vmatprep.subr.mxu0 0.0
        %1476 = vmatpush1.msra.mxu0 0.0
        %1477 = vmatprep.subr.mxu0 0.0
        %1478 = vmatpush1.msra.mxu0 0.0
        %1479 = vmatprep.subr.mxu0 0.0
        %1480 = vmatpush1.msra.mxu0 0.0
        %1481 = vmatprep.subr.mxu0 0.0
        %1482 = vmatpush1.msra.mxu0 0.0
        %1483 = vmatprep.subr.mxu0 0.0
        %1484 = vmatpush1.msra.mxu0 0.0
        %1485 = vmatprep.subr.mxu0 0.0
        %1486 = vmatpush1.msra.mxu0 0.0
        %1487 = vmatprep.subr.mxu0 0.0
        %1488 = vmatpush1.msra.mxu0 0.0
        %1489 = vmatprep.subr.mxu0 0.0
        %1490 = vmatpush1.msra.mxu0 0.0
        %1491 = vmatprep.subr.mxu0 0.0
        %1492 = vmatpush1.msra.mxu0 0.0
        %1493 = vmatprep.subr.mxu0 0.0
        %1494 = vmatpush1.msra.mxu0 0.0
        %1495 = vmatprep.subr.mxu0 0.0
        %1496 = vmatpush1.msra.mxu0 0.0
        %1497 = vmatprep.subr.mxu0 0.0
        %1498 = vmatpush1.msra.mxu0 0.0
        %1499 = vmatprep.mubr.f32.mxu0 0.0
        %1500 = vmatmul.mubr.f32.gmra.mrb[0].mxu0 %v1427
        %v1501 = vpop.f32.mrb[0].mxu0
        %v1502 = vadd.f32 0.0, %v1501
        %v1503 = vpop.f32.mrb[0].mxu0
        %1504 = vmatprep.mubr.f32.mxu0 0.0
        %1505 = vmatmul.mubr.f32.gmra.mrb[0].mxu0 %v1430
        %v1506 = vpop.f32.mrb[0].mxu0
        %v1507 = vadd.f32 0.0, %v1506
        %v1508 = vpop.f32.mrb[0].mxu0
        %1509 = vmatprep.mubr.f32.mxu0 0.0
        %1510 = vmatmul.mubr.f32.gmra.mrb[0].mxu0 %v1433
        %v1511 = vpop.f32.mrb[0].mxu0
        %v1512 = vadd.f32 0.0, %v1511
        %v1513 = vpop.f32.mrb[0].mxu0
        %1514 = vdwg.mxu0
        %1515 = vrot.lane.b32.xlu0 %v1012, 112
        %v1516 = vpop.permute.xlu0 %1515
        %1517 = vrot.lane.b32.xlu0 %v1017, 112
        %v1518 = vpop.permute.xlu0 %1517
        %1519 = vrot.lane.b32.xlu0 %v1022, 112
        %v1520 = vpop.permute.xlu0 %1519
        %1521 = vrot.lane.b32.xlu0 %v1012, 80
        %v1522 = vpop.permute.xlu0 %1521
        %1523 = vrot.lane.b32.xlu0 %v1017, 80
        %v1524 = vpop.permute.xlu0 %1523
        %1525 = vrot.lane.b32.xlu0 %v1022, 80
        %v1526 = vpop.permute.xlu0 %1525
        %v1527 = vsel %vm1043, %v1516, 0
        %v1529 = vsel %vm1043, %v1518, 0
        %v1531 = vsel %vm1043, %v1520, 0
        %v1533 = vsel %vm1043, %v1522, 0
        %v1535 = vsel %vm1043, %v1524, 0
        %v1537 = vsel %vm1043, %v1526, 0
        %1539 = vmatprep.subr.mxu0 0.0
        %1540 = vmatpush1.xpose.msra.mxu0 %v1533
        %1541 = vmatprep.subr.mxu0 0.0
        %1542 = vmatpush1.xpose.msra.mxu0 %v1535
        %1543 = vmatprep.subr.mxu0 0.0
        %1544 = vmatpush1.xpose.msra.mxu0 %v1537
        %1545 = vmatprep.subr.mxu0 0.0
        %1546 = vmatpush1.xpose.msra.mxu0 0.0
        %1547 = vmatprep.subr.mxu0 0.0
        %1548 = vmatpush1.xpose.msra.mxu0 0.0
        %1549 = vmatprep.subr.mxu0 0.0
        %1550 = vmatpush1.xpose.msra.mxu0 0.0
        %1551 = vmatprep.subr.mxu0 0.0
        %1552 = vmatpush1.xpose.msra.mxu0 0.0
        %1553 = vmatprep.subr.mxu0 0.0
        %1554 = vmatpush1.xpose.msra.mxu0 0.0
        %1555 = vmatprep.subr.mxu0 0.0
        %1556 = vmatpush1.xpose.msra.mxu0 0.0
        %1557 = vmatprep.subr.mxu0 0.0
        %1558 = vmatpush1.xpose.msra.mxu0 0.0
        %1559 = vmatprep.subr.mxu0 0.0
        %1560 = vmatpush1.xpose.msra.mxu0 0.0
        %1561 = vmatprep.subr.mxu0 0.0
        %1562 = vmatpush1.xpose.msra.mxu0 0.0
        %1563 = vmatprep.subr.mxu0 0.0
        %1564 = vmatpush1.xpose.msra.mxu0 0.0
        %1565 = vmatprep.subr.mxu0 0.0
        %1566 = vmatpush1.xpose.msra.mxu0 0.0
        %1567 = vmatprep.subr.mxu0 0.0
        %1568 = vmatpush1.xpose.msra.mxu0 0.0
        %1569 = vmatprep.subr.mxu0 0.0
        %1570 = vmatpush1.xpose.msra.mxu0 0.0
        %1571 = vmatprep.subr.mxu0 0.0
        %1572 = vmatpush1.xpose.msra.mxu0 0.0
        %1573 = vmatprep.subr.mxu0 0.0
        %1574 = vmatpush1.xpose.msra.mxu0 0.0
        %1575 = vmatprep.subr.mxu0 0.0
        %1576 = vmatpush1.xpose.msra.mxu0 0.0
        %1577 = vmatprep.subr.mxu0 0.0
        %1578 = vmatpush1.xpose.msra.mxu0 0.0
        %1579 = vmatprep.subr.mxu0 0.0
        %1580 = vmatpush1.xpose.msra.mxu0 0.0
        %1581 = vmatprep.subr.mxu0 0.0
        %1582 = vmatpush1.xpose.msra.mxu0 0.0
        %1583 = vmatprep.subr.mxu0 0.0
        %1584 = vmatpush1.xpose.msra.mxu0 0.0
        %1585 = vmatprep.subr.mxu0 0.0
        %1586 = vmatpush1.xpose.msra.mxu0 0.0
        %1587 = vmatprep.subr.mxu0 0.0
        %1588 = vmatpush1.xpose.msra.mxu0 0.0
        %1589 = vmatprep.subr.mxu0 0.0
        %1590 = vmatpush1.xpose.msra.mxu0 0.0
        %1591 = vmatprep.subr.mxu0 0.0
        %1592 = vmatpush1.xpose.msra.mxu0 0.0
        %1593 = vmatprep.subr.mxu0 0.0
        %1594 = vmatpush1.xpose.msra.mxu0 0.0
        %1595 = vmatprep.subr.mxu0 0.0
        %1596 = vmatpush1.xpose.msra.mxu0 0.0
        %1597 = vmatprep.subr.mxu0 0.0
        %1598 = vmatpush1.xpose.msra.mxu0 0.0
        %1599 = vmatprep.subr.mxu0 0.0
        %1600 = vmatpush1.xpose.msra.mxu0 0.0
        %1601 = vmatprep.subr.mxu0 0.0
        %1602 = vmatpush1.xpose.msra.mxu0 0.0
        %1603 = vmatprep.mubr.f32.mxu0 0.0
        %1604 = vmatmul.mubr.f32.gmra.mrb[0].mxu0 %v1527
        %v1605 = vpop.f32.mrb[0].mxu0
        %v1606 = vadd.f32 0.0, %v1605
        %v1607 = vpop.f32.mrb[0].mxu0
        %1608 = vmatprep.mubr.f32.mxu0 0.0
        %1609 = vmatmul.mubr.f32.gmra.mrb[0].mxu0 %v1529
        %v1610 = vpop.f32.mrb[0].mxu0
        %v1611 = vadd.f32 0.0, %v1610
        %v1612 = vpop.f32.mrb[0].mxu0
        %1613 = vmatprep.mubr.f32.mxu0 0.0
        %1614 = vmatmul.mubr.f32.gmra.mrb[0].mxu0 %v1531
        %v1615 = vpop.f32.mrb[0].mxu0
        %v1616 = vadd.f32 0.0, %v1615
        %v1617 = vpop.f32.mrb[0].mxu0
        %1618 = vdwg.mxu0
        %v1619 = vmul.f32 %v1606, 0.35355338
        %v1620 = vmul.f32 %v1611, 0.35355338
        %v1621 = vmul.f32 %v1616, 0.35355338
        %v1622 = vsel %vm1031, %v1619, -1e+30
        %v1623 = vsel %vm1032, %v1620, -1e+30
        %v1624 = vsel %vm1033, %v1621, -1e+30
        %v1625 = vsel %vm1142, %v1622, -inf
        %1626 = vmax.xlane.f32.xlu0 %v1625
        %v1627 = vpop.xlane.xlu0 %1626
        %v1628 = vsel %vm1142, %v1623, -inf
        %1629 = vmax.xlane.f32.xlu0 %v1628
        %v1630 = vpop.xlane.xlu0 %1629
        %v1631 = vsel %vm1142, %v1624, -inf
        %1632 = vmax.xlane.f32.xlu0 %v1631
        %v1633 = vpop.xlane.xlu0 %1632
        %v1634 = vsub.f32 %v1622, %v1627
        %v1635 = vsub.f32 %v1623, %v1630
        %v1636 = vsub.f32 %v1624, %v1633
        %v1637 = vmul.f32 %v1634, 1.442695
        %v1638 = vpow.pop %v1637
        %v1639 = vmul.f32 %v1635, 1.442695
        %v1640 = vpow.pop %v1639
        %v1641 = vmul.f32 %v1636, 1.442695
        %v1642 = vpow.pop %v1641
        %v1643 = vsel %vm1142, %v1638, 0.0
        %1644 = vadd.xlane.f32.xlu0 %v1643
        %v1645 = vpop.xlane.xlu0 %1644
        %v1646 = vsel %vm1142, %v1640, 0.0
        %1647 = vadd.xlane.f32.xlu0 %v1646
        %v1648 = vpop.xlane.xlu0 %1647
        %v1649 = vsel %vm1142, %v1642, 0.0
        %1650 = vadd.xlane.f32.xlu0 %v1649
        %v1651 = vpop.xlane.xlu0 %1650
        %v1652 = vrcp.pop %v1645
        %v1653 = vrcp.pop %v1648
        %v1654 = vrcp.pop %v1651
        %v1655 = vmul.f32 %v1638, %v1652
        %v1656 = vmul.f32 %v1640, %v1653
        %v1657 = vmul.f32 %v1642, %v1654
        %1658 = vrot.lane.b32.xlu0 %v1012, 48
        %v1659 = vpop.permute.xlu0 %1658
        %1660 = vrot.lane.b32.xlu0 %v1017, 48
        %v1661 = vpop.permute.xlu0 %1660
        %1662 = vrot.lane.b32.xlu0 %v1022, 48
        %v1663 = vpop.permute.xlu0 %1662
        %v1668 = vsel %vm1142, %v1655, 0
        %v1671 = vsel %vm1142, %v1656, 0
        %v1674 = vsel %vm1142, %v1657, 0
        %1676 = vmatprep.subr.mxu0 0.0
        %1677 = vmatpush1.msra.mxu0 %v1659
        %1678 = vmatprep.subr.mxu0 0.0
        %1679 = vmatpush1.msra.mxu0 %v1661
        %1680 = vmatprep.subr.mxu0 0.0
        %1681 = vmatpush1.msra.mxu0 %v1663
        %1682 = vmatprep.subr.mxu0 0.0
        %1683 = vmatpush1.msra.mxu0 0.0
        %1684 = vmatprep.subr.mxu0 0.0
        %1685 = vmatpush1.msra.mxu0 0.0
        %1686 = vmatprep.subr.mxu0 0.0
        %1687 = vmatpush1.msra.mxu0 0.0
        %1688 = vmatprep.subr.mxu0 0.0
        %1689 = vmatpush1.msra.mxu0 0.0
        %1690 = vmatprep.subr.mxu0 0.0
        %1691 = vmatpush1.msra.mxu0 0.0
        %1692 = vmatprep.subr.mxu0 0.0
        %1693 = vmatpush1.msra.mxu0 0.0
        %1694 = vmatprep.subr.mxu0 0.0
        %1695 = vmatpush1.msra.mxu0 0.0
        %1696 = vmatprep.subr.mxu0 0.0
        %1697 = vmatpush1.msra.mxu0 0.0
        %1698 = vmatprep.subr.mxu0 0.0
        %1699 = vmatpush1.msra.mxu0 0.0
        %1700 = vmatprep.subr.mxu0 0.0
        %1701 = vmatpush1.msra.mxu0 0.0
        %1702 = vmatprep.subr.mxu0 0.0
        %1703 = vmatpush1.msra.mxu0 0.0
        %1704 = vmatprep.subr.mxu0 0.0
        %1705 = vmatpush1.msra.mxu0 0.0
        %1706 = vmatprep.subr.mxu0 0.0
        %1707 = vmatpush1.msra.mxu0 0.0
        %1708 = vmatprep.subr.mxu0 0.0
        %1709 = vmatpush1.msra.mxu0 0.0
        %1710 = vmatprep.subr.mxu0 0.0
        %1711 = vmatpush1.msra.mxu0 0.0
        %1712 = vmatprep.subr.mxu0 0.0
        %1713 = vmatpush1.msra.mxu0 0.0
        %1714 = vmatprep.subr.mxu0 0.0
        %1715 = vmatpush1.msra.mxu0 0.0
        %1716 = vmatprep.subr.mxu0 0.0
        %1717 = vmatpush1.msra.mxu0 0.0
        %1718 = vmatprep.subr.mxu0 0.0
        %1719 = vmatpush1.msra.mxu0 0.0
        %1720 = vmatprep.subr.mxu0 0.0
        %1721 = vmatpush1.msra.mxu0 0.0
        %1722 = vmatprep.subr.mxu0 0.0
        %1723 = vmatpush1.msra.mxu0 0.0
        %1724 = vmatprep.subr.mxu0 0.0
        %1725 = vmatpush1.msra.mxu0 0.0
        %1726 = vmatprep.subr.mxu0 0.0
        %1727 = vmatpush1.msra.mxu0 0.0
        %1728 = vmatprep.subr.mxu0 0.0
        %1729 = vmatpush1.msra.mxu0 0.0
        %1730 = vmatprep.subr.mxu0 0.0
        %1731 = vmatpush1.msra.mxu0 0.0
        %1732 = vmatprep.subr.mxu0 0.0
        %1733 = vmatpush1.msra.mxu0 0.0
        %1734 = vmatprep.subr.mxu0 0.0
        %1735 = vmatpush1.msra.mxu0 0.0
        %1736 = vmatprep.subr.mxu0 0.0
        %1737 = vmatpush1.msra.mxu0 0.0
        %1738 = vmatprep.subr.mxu0 0.0
        %1739 = vmatpush1.msra.mxu0 0.0
        %1740 = vmatprep.mubr.f32.mxu0 0.0
        %1741 = vmatmul.mubr.f32.gmra.mrb[0].mxu0 %v1668
        %v1742 = vpop.f32.mrb[0].mxu0
        %v1743 = vadd.f32 0.0, %v1742
        %v1744 = vpop.f32.mrb[0].mxu0
        %1745 = vmatprep.mubr.f32.mxu0 0.0
        %1746 = vmatmul.mubr.f32.gmra.mrb[0].mxu0 %v1671
        %v1747 = vpop.f32.mrb[0].mxu0
        %v1748 = vadd.f32 0.0, %v1747
        %v1749 = vpop.f32.mrb[0].mxu0
        %1750 = vmatprep.mubr.f32.mxu0 0.0
        %1751 = vmatmul.mubr.f32.gmra.mrb[0].mxu0 %v1674
        %v1752 = vpop.f32.mrb[0].mxu0
        %v1753 = vadd.f32 0.0, %v1752
        %v1754 = vpop.f32.mrb[0].mxu0
        %1755 = vdwg.mxu0
        %1756 = vrot.lane.b32.xlu0 %v1012, 104
        %v1757 = vpop.permute.xlu0 %1756
        %1758 = vrot.lane.b32.xlu0 %v1017, 104
        %v1759 = vpop.permute.xlu0 %1758
        %1760 = vrot.lane.b32.xlu0 %v1022, 104
        %v1761 = vpop.permute.xlu0 %1760
        %1762 = vrot.lane.b32.xlu0 %v1012, 72
        %v1763 = vpop.permute.xlu0 %1762
        %1764 = vrot.lane.b32.xlu0 %v1017, 72
        %v1765 = vpop.permute.xlu0 %1764
        %1766 = vrot.lane.b32.xlu0 %v1022, 72
        %v1767 = vpop.permute.xlu0 %1766
        %v1768 = vsel %vm1043, %v1757, 0
        %v1770 = vsel %vm1043, %v1759, 0
        %v1772 = vsel %vm1043, %v1761, 0
        %v1774 = vsel %vm1043, %v1763, 0
        %v1776 = vsel %vm1043, %v1765, 0
        %v1778 = vsel %vm1043, %v1767, 0
        %1780 = vmatprep.subr.mxu0 0.0
        %1781 = vmatpush1.xpose.msra.mxu0 %v1774
        %1782 = vmatprep.subr.mxu0 0.0
        %1783 = vmatpush1.xpose.msra.mxu0 %v1776
        %1784 = vmatprep.subr.mxu0 0.0
        %1785 = vmatpush1.xpose.msra.mxu0 %v1778
        %1786 = vmatprep.subr.mxu0 0.0
        %1787 = vmatpush1.xpose.msra.mxu0 0.0
        %1788 = vmatprep.subr.mxu0 0.0
        %1789 = vmatpush1.xpose.msra.mxu0 0.0
        %1790 = vmatprep.subr.mxu0 0.0
        %1791 = vmatpush1.xpose.msra.mxu0 0.0
        %1792 = vmatprep.subr.mxu0 0.0
        %1793 = vmatpush1.xpose.msra.mxu0 0.0
        %1794 = vmatprep.subr.mxu0 0.0
        %1795 = vmatpush1.xpose.msra.mxu0 0.0
        %1796 = vmatprep.subr.mxu0 0.0
        %1797 = vmatpush1.xpose.msra.mxu0 0.0
        %1798 = vmatprep.subr.mxu0 0.0
        %1799 = vmatpush1.xpose.msra.mxu0 0.0
        %1800 = vmatprep.subr.mxu0 0.0
        %1801 = vmatpush1.xpose.msra.mxu0 0.0
        %1802 = vmatprep.subr.mxu0 0.0
        %1803 = vmatpush1.xpose.msra.mxu0 0.0
        %1804 = vmatprep.subr.mxu0 0.0
        %1805 = vmatpush1.xpose.msra.mxu0 0.0
        %1806 = vmatprep.subr.mxu0 0.0
        %1807 = vmatpush1.xpose.msra.mxu0 0.0
        %1808 = vmatprep.subr.mxu0 0.0
        %1809 = vmatpush1.xpose.msra.mxu0 0.0
        %1810 = vmatprep.subr.mxu0 0.0
        %1811 = vmatpush1.xpose.msra.mxu0 0.0
        %1812 = vmatprep.subr.mxu0 0.0
        %1813 = vmatpush1.xpose.msra.mxu0 0.0
        %1814 = vmatprep.subr.mxu0 0.0
        %1815 = vmatpush1.xpose.msra.mxu0 0.0
        %1816 = vmatprep.subr.mxu0 0.0
        %1817 = vmatpush1.xpose.msra.mxu0 0.0
        %1818 = vmatprep.subr.mxu0 0.0
        %1819 = vmatpush1.xpose.msra.mxu0 0.0
        %1820 = vmatprep.subr.mxu0 0.0
        %1821 = vmatpush1.xpose.msra.mxu0 0.0
        %1822 = vmatprep.subr.mxu0 0.0
        %1823 = vmatpush1.xpose.msra.mxu0 0.0
        %1824 = vmatprep.subr.mxu0 0.0
        %1825 = vmatpush1.xpose.msra.mxu0 0.0
        %1826 = vmatprep.subr.mxu0 0.0
        %1827 = vmatpush1.xpose.msra.mxu0 0.0
        %1828 = vmatprep.subr.mxu0 0.0
        %1829 = vmatpush1.xpose.msra.mxu0 0.0
        %1830 = vmatprep.subr.mxu0 0.0
        %1831 = vmatpush1.xpose.msra.mxu0 0.0
        %1832 = vmatprep.subr.mxu0 0.0
        %1833 = vmatpush1.xpose.msra.mxu0 0.0
        %1834 = vmatprep.subr.mxu0 0.0
        %1835 = vmatpush1.xpose.msra.mxu0 0.0
        %1836 = vmatprep.subr.mxu0 0.0
        %1837 = vmatpush1.xpose.msra.mxu0 0.0
        %1838 = vmatprep.subr.mxu0 0.0
        %1839 = vmatpush1.xpose.msra.mxu0 0.0
        %1840 = vmatprep.subr.mxu0 0.0
        %1841 = vmatpush1.xpose.msra.mxu0 0.0
        %1842 = vmatprep.subr.mxu0 0.0
        %1843 = vmatpush1.xpose.msra.mxu0 0.0
        %1844 = vmatprep.mubr.f32.mxu0 0.0
        %1845 = vmatmul.mubr.f32.gmra.mrb[0].mxu0 %v1768
        %v1846 = vpop.f32.mrb[0].mxu0
        %v1847 = vadd.f32 0.0, %v1846
        %v1848 = vpop.f32.mrb[0].mxu0
        %1849 = vmatprep.mubr.f32.mxu0 0.0
        %1850 = vmatmul.mubr.f32.gmra.mrb[0].mxu0 %v1770
        %v1851 = vpop.f32.mrb[0].mxu0
        %v1852 = vadd.f32 0.0, %v1851
        %v1853 = vpop.f32.mrb[0].mxu0
        %1854 = vmatprep.mubr.f32.mxu0 0.0
        %1855 = vmatmul.mubr.f32.gmra.mrb[0].mxu0 %v1772
        %v1856 = vpop.f32.mrb[0].mxu0
        %v1857 = vadd.f32 0.0, %v1856
        %v1858 = vpop.f32.mrb[0].mxu0
        %1859 = vdwg.mxu0
        %v1860 = vmul.f32 %v1847, 0.35355338
        %v1861 = vmul.f32 %v1852, 0.35355338
        %v1862 = vmul.f32 %v1857, 0.35355338
        %v1863 = vsel %vm1031, %v1860, -1e+30
        %v1864 = vsel %vm1032, %v1861, -1e+30
        %v1865 = vsel %vm1033, %v1862, -1e+30
        %v1866 = vsel %vm1142, %v1863, -inf
        %1867 = vmax.xlane.f32.xlu0 %v1866
        %v1868 = vpop.xlane.xlu0 %1867
        %v1869 = vsel %vm1142, %v1864, -inf
        %1870 = vmax.xlane.f32.xlu0 %v1869
        %v1871 = vpop.xlane.xlu0 %1870
        %v1872 = vsel %vm1142, %v1865, -inf
        %1873 = vmax.xlane.f32.xlu0 %v1872
        %v1874 = vpop.xlane.xlu0 %1873
        %v1875 = vsub.f32 %v1863, %v1868
        %v1876 = vsub.f32 %v1864, %v1871
        %v1877 = vsub.f32 %v1865, %v1874
        %v1878 = vmul.f32 %v1875, 1.442695
        %v1879 = vpow.pop %v1878
        %v1880 = vmul.f32 %v1876, 1.442695
        %v1881 = vpow.pop %v1880
        %v1882 = vmul.f32 %v1877, 1.442695
        %v1883 = vpow.pop %v1882
        %v1884 = vsel %vm1142, %v1879, 0.0
        %1885 = vadd.xlane.f32.xlu0 %v1884
        %v1886 = vpop.xlane.xlu0 %1885
        %v1887 = vsel %vm1142, %v1881, 0.0
        %1888 = vadd.xlane.f32.xlu0 %v1887
        %v1889 = vpop.xlane.xlu0 %1888
        %v1890 = vsel %vm1142, %v1883, 0.0
        %1891 = vadd.xlane.f32.xlu0 %v1890
        %v1892 = vpop.xlane.xlu0 %1891
        %v1893 = vrcp.pop %v1886
        %v1894 = vrcp.pop %v1889
        %v1895 = vrcp.pop %v1892
        %v1896 = vmul.f32 %v1879, %v1893
        %v1897 = vmul.f32 %v1881, %v1894
        %v1898 = vmul.f32 %v1883, %v1895
        %1899 = vrot.lane.b32.xlu0 %v1012, 40
        %v1900 = vpop.permute.xlu0 %1899
        %1901 = vrot.lane.b32.xlu0 %v1017, 40
        %v1902 = vpop.permute.xlu0 %1901
        %1903 = vrot.lane.b32.xlu0 %v1022, 40
        %v1904 = vpop.permute.xlu0 %1903
        %v1909 = vsel %vm1142, %v1896, 0
        %v1912 = vsel %vm1142, %v1897, 0
        %v1915 = vsel %vm1142, %v1898, 0
        %1917 = vmatprep.subr.mxu0 0.0
        %1918 = vmatpush1.msra.mxu0 %v1900
        %1919 = vmatprep.subr.mxu0 0.0
        %1920 = vmatpush1.msra.mxu0 %v1902
        %1921 = vmatprep.subr.mxu0 0.0
        %1922 = vmatpush1.msra.mxu0 %v1904
        %1923 = vmatprep.subr.mxu0 0.0
        %1924 = vmatpush1.msra.mxu0 0.0
        %1925 = vmatprep.subr.mxu0 0.0
        %1926 = vmatpush1.msra.mxu0 0.0
        %1927 = vmatprep.subr.mxu0 0.0
        %1928 = vmatpush1.msra.mxu0 0.0
        %1929 = vmatprep.subr.mxu0 0.0
        %1930 = vmatpush1.msra.mxu0 0.0
        %1931 = vmatprep.subr.mxu0 0.0
        %1932 = vmatpush1.msra.mxu0 0.0
        %1933 = vmatprep.subr.mxu0 0.0
        %1934 = vmatpush1.msra.mxu0 0.0
        %1935 = vmatprep.subr.mxu0 0.0
        %1936 = vmatpush1.msra.mxu0 0.0
        %1937 = vmatprep.subr.mxu0 0.0
        %1938 = vmatpush1.msra.mxu0 0.0
        %1939 = vmatprep.subr.mxu0 0.0
        %1940 = vmatpush1.msra.mxu0 0.0
        %1941 = vmatprep.subr.mxu0 0.0
        %1942 = vmatpush1.msra.mxu0 0.0
        %1943 = vmatprep.subr.mxu0 0.0
        %1944 = vmatpush1.msra.mxu0 0.0
        %1945 = vmatprep.subr.mxu0 0.0
        %1946 = vmatpush1.msra.mxu0 0.0
        %1947 = vmatprep.subr.mxu0 0.0
        %1948 = vmatpush1.msra.mxu0 0.0
        %1949 = vmatprep.subr.mxu0 0.0
        %1950 = vmatpush1.msra.mxu0 0.0
        %1951 = vmatprep.subr.mxu0 0.0
        %1952 = vmatpush1.msra.mxu0 0.0
        %1953 = vmatprep.subr.mxu0 0.0
        %1954 = vmatpush1.msra.mxu0 0.0
        %1955 = vmatprep.subr.mxu0 0.0
        %1956 = vmatpush1.msra.mxu0 0.0
        %1957 = vmatprep.subr.mxu0 0.0
        %1958 = vmatpush1.msra.mxu0 0.0
        %1959 = vmatprep.subr.mxu0 0.0
        %1960 = vmatpush1.msra.mxu0 0.0
        %1961 = vmatprep.subr.mxu0 0.0
        %1962 = vmatpush1.msra.mxu0 0.0
        %1963 = vmatprep.subr.mxu0 0.0
        %1964 = vmatpush1.msra.mxu0 0.0
        %1965 = vmatprep.subr.mxu0 0.0
        %1966 = vmatpush1.msra.mxu0 0.0
        %1967 = vmatprep.subr.mxu0 0.0
        %1968 = vmatpush1.msra.mxu0 0.0
        %1969 = vmatprep.subr.mxu0 0.0
        %1970 = vmatpush1.msra.mxu0 0.0
        %1971 = vmatprep.subr.mxu0 0.0
        %1972 = vmatpush1.msra.mxu0 0.0
        %1973 = vmatprep.subr.mxu0 0.0
        %1974 = vmatpush1.msra.mxu0 0.0
        %1975 = vmatprep.subr.mxu0 0.0
        %1976 = vmatpush1.msra.mxu0 0.0
        %1977 = vmatprep.subr.mxu0 0.0
        %1978 = vmatpush1.msra.mxu0 0.0
        %1979 = vmatprep.subr.mxu0 0.0
        %1980 = vmatpush1.msra.mxu0 0.0
        %1981 = vmatprep.mubr.f32.mxu0 0.0
        %1982 = vmatmul.mubr.f32.gmra.mrb[0].mxu0 %v1909
        %v1983 = vpop.f32.mrb[0].mxu0
        %v1984 = vadd.f32 0.0, %v1983
        %v1985 = vpop.f32.mrb[0].mxu0
        %1986 = vmatprep.mubr.f32.mxu0 0.0
        %1987 = vmatmul.mubr.f32.gmra.mrb[0].mxu0 %v1912
        %v1988 = vpop.f32.mrb[0].mxu0
        %v1989 = vadd.f32 0.0, %v1988
        %v1990 = vpop.f32.mrb[0].mxu0
        %1991 = vmatprep.mubr.f32.mxu0 0.0
        %1992 = vmatmul.mubr.f32.gmra.mrb[0].mxu0 %v1915
        %v1993 = vpop.f32.mrb[0].mxu0
        %v1994 = vadd.f32 0.0, %v1993
        %v1995 = vpop.f32.mrb[0].mxu0
        %1996 = vdwg.mxu0
        %2000 = vrot.lane.b32.xlu0 %v1502, 8
        %v2001 = vpop.permute.xlu0 %2000
        %2002 = vrot.lane.b32.xlu0 %v1507, 8
        %v2003 = vpop.permute.xlu0 %2002
        %2004 = vrot.lane.b32.xlu0 %v1512, 8
        %v2005 = vpop.permute.xlu0 %2004
        %2012 = vrot.lane.b32.xlu0 %v1743, 16
        %v2013 = vpop.permute.xlu0 %2012
        %2014 = vrot.lane.b32.xlu0 %v1748, 16
        %v2015 = vpop.permute.xlu0 %2014
        %2016 = vrot.lane.b32.xlu0 %v1753, 16
        %v2017 = vpop.permute.xlu0 %2016
        %2024 = vrot.lane.b32.xlu0 %v1984, 24
        %v2025 = vpop.permute.xlu0 %2024
        %2026 = vrot.lane.b32.xlu0 %v1989, 24
        %v2027 = vpop.permute.xlu0 %2026
        %2028 = vrot.lane.b32.xlu0 %v1994, 24
        %v2029 = vpop.permute.xlu0 %2028
        %v2033 = vsel %vm1043, %v1261, %v2001
        %v2034 = vsel %vm1043, %v1266, %v2003
        %v2035 = vsel %vm1043, %v1271, %v2005
        %vm2036 = vcmask 130048
        %v2037 = vsel %vm2036, %v2033, %v2013
        %v2038 = vsel %vm2036, %v2034, %v2015
        %v2039 = vsel %vm2036, %v2035, %v2017
        %v2040 = vsel %vm1142, %v2037, %v2025
        %v2041 = vsel %vm1142, %v2038, %v2027
        %v2042 = vsel %vm1142, %v2039, %v2029
        %v2043 = vld [vmem:[%s725] sm:$0xff]
        %v2044 = vld [vmem:[%s725 + $0x8] sm:$0xff]
        %v2045 = vld [vmem:[%s725 + $0x10] sm:$0xff]
        %v2046 = vld [vmem:[%s725 + $0x18] sm:$0xff]
        %v2047 = vld [vmem:[%s728] sm:$0x1]
        %v2049 = vlaneseq
        %v2050 = vshrl.u32 %v2049, 7
        %v2051 = vsub.s32 0, %v2050
        %v2052 = vrot.slane %v2047, %v2051
        %v2055 = vsel %vm866, %v2040, 0
        %v2058 = vsel %vm866, %v2041, 0
        %v2061 = vsel %vm866, %v2042, 0
        %2063 = vmatprep.subr.mxu0 0.0
        %2064 = vmatpush1.msra.mxu0 %v2043
        %2065 = vmatprep.subr.mxu0 0.0
        %2066 = vmatpush1.msra.mxu0 %v2044
        %2067 = vmatprep.subr.mxu0 0.0
        %2068 = vmatpush1.msra.mxu0 %v2045
        %2069 = vmatprep.subr.mxu0 0.0
        %2070 = vmatpush1.msra.mxu0 %v2046
        %2071 = vmatprep.subr.mxu0 0.0
        %2072 = vmatpush1.msra.mxu0 0.0
        %2073 = vmatprep.subr.mxu0 0.0
        %2074 = vmatpush1.msra.mxu0 0.0
        %2075 = vmatprep.subr.mxu0 0.0
        %2076 = vmatpush1.msra.mxu0 0.0
        %2077 = vmatprep.subr.mxu0 0.0
        %2078 = vmatpush1.msra.mxu0 0.0
        %2079 = vmatprep.subr.mxu0 0.0
        %2080 = vmatpush1.msra.mxu0 0.0
        %2081 = vmatprep.subr.mxu0 0.0
        %2082 = vmatpush1.msra.mxu0 0.0
        %2083 = vmatprep.subr.mxu0 0.0
        %2084 = vmatpush1.msra.mxu0 0.0
        %2085 = vmatprep.subr.mxu0 0.0
        %2086 = vmatpush1.msra.mxu0 0.0
        %2087 = vmatprep.subr.mxu0 0.0
        %2088 = vmatpush1.msra.mxu0 0.0
        %2089 = vmatprep.subr.mxu0 0.0
        %2090 = vmatpush1.msra.mxu0 0.0
        %2091 = vmatprep.subr.mxu0 0.0
        %2092 = vmatpush1.msra.mxu0 0.0
        %2093 = vmatprep.subr.mxu0 0.0
        %2094 = vmatpush1.msra.mxu0 0.0
        %2095 = vmatprep.subr.mxu0 0.0
        %2096 = vmatpush1.msra.mxu0 0.0
        %2097 = vmatprep.subr.mxu0 0.0
        %2098 = vmatpush1.msra.mxu0 0.0
        %2099 = vmatprep.subr.mxu0 0.0
        %2100 = vmatpush1.msra.mxu0 0.0
        %2101 = vmatprep.subr.mxu0 0.0
        %2102 = vmatpush1.msra.mxu0 0.0
        %2103 = vmatprep.subr.mxu0 0.0
        %2104 = vmatpush1.msra.mxu0 0.0
        %2105 = vmatprep.subr.mxu0 0.0
        %2106 = vmatpush1.msra.mxu0 0.0
        %2107 = vmatprep.subr.mxu0 0.0
        %2108 = vmatpush1.msra.mxu0 0.0
        %2109 = vmatprep.subr.mxu0 0.0
        %2110 = vmatpush1.msra.mxu0 0.0
        %2111 = vmatprep.subr.mxu0 0.0
        %2112 = vmatpush1.msra.mxu0 0.0
        %2113 = vmatprep.subr.mxu0 0.0
        %2114 = vmatpush1.msra.mxu0 0.0
        %2115 = vmatprep.subr.mxu0 0.0
        %2116 = vmatpush1.msra.mxu0 0.0
        %2117 = vmatprep.subr.mxu0 0.0
        %2118 = vmatpush1.msra.mxu0 0.0
        %2119 = vmatprep.subr.mxu0 0.0
        %2120 = vmatpush1.msra.mxu0 0.0
        %2121 = vmatprep.subr.mxu0 0.0
        %2122 = vmatpush1.msra.mxu0 0.0
        %2123 = vmatprep.subr.mxu0 0.0
        %2124 = vmatpush1.msra.mxu0 0.0
        %2125 = vmatprep.subr.mxu0 0.0
        %2126 = vmatpush1.msra.mxu0 0.0
        %2127 = vmatprep.mubr.f32.mxu0 0.0
        %2128 = vmatmul.mubr.f32.gmra.mrb[0].mxu0 %v2055
        %v2129 = vpop.f32.mrb[0].mxu0
        %v2130 = vadd.f32 %v2052, %v2129
        %v2131 = vpop.f32.mrb[0].mxu0
        %2132 = vmatprep.mubr.f32.mxu0 0.0
        %2133 = vmatmul.mubr.f32.gmra.mrb[0].mxu0 %v2058
        %v2134 = vpop.f32.mrb[0].mxu0
        %v2135 = vadd.f32 %v2052, %v2134
        %v2136 = vpop.f32.mrb[0].mxu0
        %2137 = vmatprep.mubr.f32.mxu0 0.0
        %2138 = vmatmul.mubr.f32.gmra.mrb[0].mxu0 %v2061
        %v2139 = vpop.f32.mrb[0].mxu0
        %v2140 = vadd.f32 %v2052, %v2139
        %v2141 = vpop.f32.mrb[0].mxu0
        %2142 = vdwg.mxu0
        %v2143 = vadd.f32 %v861, %v2130
        %v2144 = vadd.f32 %v862, %v2135
        %v2145 = vadd.f32 %v863, %v2140
        %v2146 = vld [vmem:[%s731] sm:$0x1]
        %v2147 = vld [vmem:[%s734] sm:$0x1]
        %v2148 = vsel %vm866, %v2143, 0.0
        %2149 = vadd.xlane.f32.xlu0 %v2148
        %v2150 = vpop.xlane.xlu0 %2149
        %v2151 = vsel %vm866, %v2144, 0.0
        %2152 = vadd.xlane.f32.xlu0 %v2151
        %v2153 = vpop.xlane.xlu0 %2152
        %v2154 = vsel %vm866, %v2145, 0.0
        %2155 = vadd.xlane.f32.xlu0 %v2154
        %v2156 = vpop.xlane.xlu0 %2155
        %v2157 = vmul.f32 %v2150, %v876
        %v2158 = vmul.f32 %v2153, %v876
        %v2159 = vmul.f32 %v2156, %v876
        %v2160 = vsub.f32 %v2143, %v2157
        %v2161 = vsub.f32 %v2144, %v2158
        %v2162 = vsub.f32 %v2145, %v2159
        %v2163 = vmul.f32 %v2160, %v2160
        %v2164 = vmul.f32 %v2161, %v2161
        %v2165 = vmul.f32 %v2162, %v2162
        %v2166 = vsel %vm866, %v2163, 0.0
        %2167 = vadd.xlane.f32.xlu0 %v2166
        %v2168 = vpop.xlane.xlu0 %2167
        %v2169 = vsel %vm866, %v2164, 0.0
        %2170 = vadd.xlane.f32.xlu0 %v2169
        %v2171 = vpop.xlane.xlu0 %2170
        %v2172 = vsel %vm866, %v2165, 0.0
        %2173 = vadd.xlane.f32.xlu0 %v2172
        %v2174 = vpop.xlane.xlu0 %2173
        %v2175 = vmul.f32 %v2168, %v876
        %v2176 = vmul.f32 %v2171, %v876
        %v2177 = vmul.f32 %v2174, %v876
        %v2178 = vadd.f32 %v2175, 1e-05
        %v2179 = vadd.f32 %v2176, 1e-05
        %v2180 = vadd.f32 %v2177, 1e-05
        %v2181 = vrsqrt.pop %v2178
        %v2182 = vrsqrt.pop %v2179
        %v2183 = vrsqrt.pop %v2180
        %v2184 = vmul.f32 %v2160, %v2181
        %v2185 = vmul.f32 %v2161, %v2182
        %v2186 = vmul.f32 %v2162, %v2183
        %v2188 = vlaneseq
        %v2189 = vshrl.u32 %v2188, 7
        %v2190 = vsub.s32 0, %v2189
        %v2191 = vrot.slane %v2146, %v2190
        %v2193 = vmul.f32 %v2184, %v2191
        %v2194 = vmul.f32 %v2185, %v2191
        %v2195 = vmul.f32 %v2186, %v2191
        %v2197 = vlaneseq
        %v2198 = vshrl.u32 %v2197, 7
        %v2199 = vsub.s32 0, %v2198
        %v2200 = vrot.slane %v2147, %v2199
        %v2202 = vadd.f32 %v2193, %v2200
        %v2203 = vadd.f32 %v2194, %v2200
        %v2204 = vadd.f32 %v2195, %v2200
        %v2205 = vld [vmem:[%s739] sm:$0xff]
        %v2206 = vld [vmem:[%s739 + $0x8] sm:$0xff]
        %v2207 = vld [vmem:[%s739 + $0x10] sm:$0xff]
        %v2208 = vld [vmem:[%s739 + $0x18] sm:$0xff]
        %v2209 = vld [vmem:[%s742] sm:$0x1]
        %v2211 = vlaneseq
        %v2212 = vshrl.u32 %v2211, 7
        %v2213 = vsub.s32 0, %v2212
        %v2214 = vrot.slane %v2209, %v2213
        %v2217 = vsel %vm866, %v2202, 0
        %v2220 = vsel %vm866, %v2203, 0
        %v2223 = vsel %vm866, %v2204, 0
        %2225 = vmatprep.subr.mxu0 0.0
        %2226 = vmatpush1.msra.mxu0 %v2205
        %2227 = vmatprep.subr.mxu0 0.0
        %2228 = vmatpush1.msra.mxu0 %v2206
        %2229 = vmatprep.subr.mxu0 0.0
        %2230 = vmatpush1.msra.mxu0 %v2207
        %2231 = vmatprep.subr.mxu0 0.0
        %2232 = vmatpush1.msra.mxu0 %v2208
        %2233 = vmatprep.subr.mxu0 0.0
        %2234 = vmatpush1.msra.mxu0 0.0
        %2235 = vmatprep.subr.mxu0 0.0
        %2236 = vmatpush1.msra.mxu0 0.0
        %2237 = vmatprep.subr.mxu0 0.0
        %2238 = vmatpush1.msra.mxu0 0.0
        %2239 = vmatprep.subr.mxu0 0.0
        %2240 = vmatpush1.msra.mxu0 0.0
        %2241 = vmatprep.subr.mxu0 0.0
        %2242 = vmatpush1.msra.mxu0 0.0
        %2243 = vmatprep.subr.mxu0 0.0
        %2244 = vmatpush1.msra.mxu0 0.0
        %2245 = vmatprep.subr.mxu0 0.0
        %2246 = vmatpush1.msra.mxu0 0.0
        %2247 = vmatprep.subr.mxu0 0.0
        %2248 = vmatpush1.msra.mxu0 0.0
        %2249 = vmatprep.subr.mxu0 0.0
        %2250 = vmatpush1.msra.mxu0 0.0
        %2251 = vmatprep.subr.mxu0 0.0
        %2252 = vmatpush1.msra.mxu0 0.0
        %2253 = vmatprep.subr.mxu0 0.0
        %2254 = vmatpush1.msra.mxu0 0.0
        %2255 = vmatprep.subr.mxu0 0.0
        %2256 = vmatpush1.msra.mxu0 0.0
        %2257 = vmatprep.subr.mxu0 0.0
        %2258 = vmatpush1.msra.mxu0 0.0
        %2259 = vmatprep.subr.mxu0 0.0
        %2260 = vmatpush1.msra.mxu0 0.0
        %2261 = vmatprep.subr.mxu0 0.0
        %2262 = vmatpush1.msra.mxu0 0.0
        %2263 = vmatprep.subr.mxu0 0.0
        %2264 = vmatpush1.msra.mxu0 0.0
        %2265 = vmatprep.subr.mxu0 0.0
        %2266 = vmatpush1.msra.mxu0 0.0
        %2267 = vmatprep.subr.mxu0 0.0
        %2268 = vmatpush1.msra.mxu0 0.0
        %2269 = vmatprep.subr.mxu0 0.0
        %2270 = vmatpush1.msra.mxu0 0.0
        %2271 = vmatprep.subr.mxu0 0.0
        %2272 = vmatpush1.msra.mxu0 0.0
        %2273 = vmatprep.subr.mxu0 0.0
        %2274 = vmatpush1.msra.mxu0 0.0
        %2275 = vmatprep.subr.mxu0 0.0
        %2276 = vmatpush1.msra.mxu0 0.0
        %2277 = vmatprep.subr.mxu0 0.0
        %2278 = vmatpush1.msra.mxu0 0.0
        %2279 = vmatprep.subr.mxu0 0.0
        %2280 = vmatpush1.msra.mxu0 0.0
        %2281 = vmatprep.subr.mxu0 0.0
        %2282 = vmatpush1.msra.mxu0 0.0
        %2283 = vmatprep.subr.mxu0 0.0
        %2284 = vmatpush1.msra.mxu0 0.0
        %2285 = vmatprep.subr.mxu0 0.0
        %2286 = vmatpush1.msra.mxu0 0.0
        %2287 = vmatprep.subr.mxu0 0.0
        %2288 = vmatpush1.msra.mxu0 0.0
        %2289 = vmatprep.mubr.f32.mxu0 0.0
        %2290 = vmatmul.mubr.f32.gmra.mrb[0].mxu0 %v2217
        %v2291 = vpop.f32.mrb[0].mxu0
        %v2292 = vadd.f32 %v2214, %v2291
        %v2293 = vpop.f32.mrb[0].mxu0
        %2294 = vmatprep.mubr.f32.mxu0 0.0
        %2295 = vmatmul.mubr.f32.gmra.mrb[0].mxu0 %v2220
        %v2296 = vpop.f32.mrb[0].mxu0
        %v2297 = vadd.f32 %v2214, %v2296
        %v2298 = vpop.f32.mrb[0].mxu0
        %2299 = vmatprep.mubr.f32.mxu0 0.0
        %2300 = vmatmul.mubr.f32.gmra.mrb[0].mxu0 %v2223
        %v2301 = vpop.f32.mrb[0].mxu0
        %v2302 = vadd.f32 %v2214, %v2301
        %v2303 = vpop.f32.mrb[0].mxu0
        %2304 = vdwg.mxu0
        %v2305 = vmul.f32 %v2292, 0.5
        %v2306 = vmul.f32 %v2297, 0.5
        %v2307 = vmul.f32 %v2302, 0.5
        %v2308 = vmul.f32 %v2292, 0.70710677
        %v2309 = vmul.f32 %v2297, 0.70710677
        %v2310 = vmul.f32 %v2302, 0.70710677
        %v2311 = vand.u32 2147483647, %v2308
        %v2312 = vand.u32 2147483647, %v2309
        %v2313 = vand.u32 2147483647, %v2310
        %v2314 = vmul.f32 %v2311, 0.3275911
        %v2315 = vmul.f32 %v2312, 0.3275911
        %v2316 = vmul.f32 %v2313, 0.3275911
        %v2317 = vadd.f32 %v2314, 1.0
        %v2318 = vadd.f32 %v2315, 1.0
        %v2319 = vadd.f32 %v2316, 1.0
        %v2320 = vrcp.pop %v2317
        %v2321 = vmul.f32 1.0, %v2320
        %v2322 = vrcp.pop %v2318
        %v2323 = vmul.f32 1.0, %v2322
        %v2324 = vrcp.pop %v2319
        %v2325 = vmul.f32 1.0, %v2324
        %v2326 = vmul.f32 %v2321, 1.0614054
        %v2327 = vmul.f32 %v2323, 1.0614054
        %v2328 = vmul.f32 %v2325, 1.0614054
        %v2329 = vsub.f32 %v2326, 1.4531521
        %v2330 = vsub.f32 %v2327, 1.4531521
        %v2331 = vsub.f32 %v2328, 1.4531521
        %v2332 = vmul.f32 %v2329, %v2321
        %v2333 = vmul.f32 %v2330, %v2323
        %v2334 = vmul.f32 %v2331, %v2325
        %v2335 = vadd.f32 %v2332, 1.4214138
        %v2336 = vadd.f32 %v2333, 1.4214138
        %v2337 = vadd.f32 %v2334, 1.4214138
        %v2338 = vmul.f32 %v2335, %v2321
        %v2339 = vmul.f32 %v2336, %v2323
        %v2340 = vmul.f32 %v2337, %v2325
        %v2341 = vsub.f32 %v2338, 0.28449672
        %v2342 = vsub.f32 %v2339, 0.28449672
        %v2343 = vsub.f32 %v2340, 0.28449672
        %v2344 = vmul.f32 %v2341, %v2321
        %v2345 = vmul.f32 %v2342, %v2323
        %v2346 = vmul.f32 %v2343, %v2325
        %v2347 = vadd.f32 %v2344, 0.2548296
        %v2348 = vadd.f32 %v2345, 0.2548296
        %v2349 = vadd.f32 %v2346, 0.2548296
        %v2350 = vmul.f32 %v2347, %v2321
        %v2351 = vmul.f32 %v2348, %v2323
        %v2352 = vmul.f32 %v2349, %v2325
        %v2353 = vsub.f32 0.0, %v2308
        %v2354 = vsub.f32 0.0, %v2309
        %v2355 = vsub.f32 0.0, %v2310
        %v2356 = vmul.f32 %v2353, %v2308
        %v2357 = vmul.f32 %v2354, %v2309
        %v2358 = vmul.f32 %v2355, %v2310
        %v2359 = vmul.f32 %v2356, 1.442695
        %v2360 = vpow.pop %v2359
        %v2361 = vmul.f32 %v2357, 1.442695
        %v2362 = vpow.pop %v2361
        %v2363 = vmul.f32 %v2358, 1.442695
        %v2364 = vpow.pop %v2363
        %v2365 = vmul.f32 %v2350, %v2360
        %v2366 = vmul.f32 %v2351, %v2362
        %v2367 = vmul.f32 %v2352, %v2364
        %v2368 = vsub.f32 1.0, %v2365
        %v2369 = vsub.f32 1.0, %v2366
        %v2370 = vsub.f32 1.0, %v2367
        %vm2371 = vcmp.ge.f32.partialorder %v2308, 0.0
        %vm2372 = vcmp.ge.f32.partialorder %v2309, 0.0
        %vm2373 = vcmp.ge.f32.partialorder %v2310, 0.0
        %v2374 = vsub.f32 0.0, %v2368
        %v2375 = vsub.f32 0.0, %v2369
        %v2376 = vsub.f32 0.0, %v2370
        %v2377 = vsel %vm2371, %v2368, %v2374
        %v2378 = vsel %vm2372, %v2369, %v2375
        %v2379 = vsel %vm2373, %v2370, %v2376
        %v2380 = vadd.f32 %v2377, 1.0
        %v2381 = vadd.f32 %v2378, 1.0
        %v2382 = vadd.f32 %v2379, 1.0
        %v2383 = vmul.f32 %v2305, %v2380
        %v2384 = vmul.f32 %v2306, %v2381
        %v2385 = vmul.f32 %v2307, %v2382
        %v2386 = vld [vmem:[%s747] sm:$0xff]
        %v2387 = vld [vmem:[%s747 + $0x8] sm:$0xff]
        %v2388 = vld [vmem:[%s747 + $0x10] sm:$0xff]
        %v2389 = vld [vmem:[%s747 + $0x18] sm:$0xff]
        %v2390 = vld [vmem:[%s747 + $0x20] sm:$0xff]
        %v2391 = vld [vmem:[%s747 + $0x28] sm:$0xff]
        %v2392 = vld [vmem:[%s747 + $0x30] sm:$0xff]
        %v2393 = vld [vmem:[%s747 + $0x38] sm:$0xff]
        %v2394 = vld [vmem:[%s747 + $0x40] sm:$0xff]
        %v2395 = vld [vmem:[%s747 + $0x48] sm:$0xff]
        %v2396 = vld [vmem:[%s747 + $0x50] sm:$0xff]
        %v2397 = vld [vmem:[%s747 + $0x58] sm:$0xff]
        %v2398 = vld [vmem:[%s747 + $0x60] sm:$0xff]
        %v2399 = vld [vmem:[%s747 + $0x68] sm:$0xff]
        %v2400 = vld [vmem:[%s747 + $0x70] sm:$0xff]
        %v2401 = vld [vmem:[%s747 + $0x78] sm:$0xff]
        %v2402 = vld [vmem:[%s750] sm:$0x1]
        %v2404 = vlaneseq
        %v2405 = vshrl.u32 %v2404, 7
        %v2406 = vsub.s32 0, %v2405
        %v2407 = vrot.slane %v2402, %v2406
        %2409 = vmatprep.subr.mxu0 0.0
        %2410 = vmatpush1.msra.mxu0 %v2386
        %2411 = vmatprep.subr.mxu0 0.0
        %2412 = vmatpush1.msra.mxu0 %v2387
        %2413 = vmatprep.subr.mxu0 0.0
        %2414 = vmatpush1.msra.mxu0 %v2388
        %2415 = vmatprep.subr.mxu0 0.0
        %2416 = vmatpush1.msra.mxu0 %v2389
        %2417 = vmatprep.subr.mxu0 0.0
        %2418 = vmatpush1.msra.mxu0 %v2390
        %2419 = vmatprep.subr.mxu0 0.0
        %2420 = vmatpush1.msra.mxu0 %v2391
        %2421 = vmatprep.subr.mxu0 0.0
        %2422 = vmatpush1.msra.mxu0 %v2392
        %2423 = vmatprep.subr.mxu0 0.0
        %2424 = vmatpush1.msra.mxu0 %v2393
        %2425 = vmatprep.subr.mxu0 0.0
        %2426 = vmatpush1.msra.mxu0 %v2394
        %2427 = vmatprep.subr.mxu0 0.0
        %2428 = vmatpush1.msra.mxu0 %v2395
        %2429 = vmatprep.subr.mxu0 0.0
        %2430 = vmatpush1.msra.mxu0 %v2396
        %2431 = vmatprep.subr.mxu0 0.0
        %2432 = vmatpush1.msra.mxu0 %v2397
        %2433 = vmatprep.subr.mxu0 0.0
        %2434 = vmatpush1.msra.mxu0 %v2398
        %2435 = vmatprep.subr.mxu0 0.0
        %2436 = vmatpush1.msra.mxu0 %v2399
        %2437 = vmatprep.subr.mxu0 0.0
        %2438 = vmatpush1.msra.mxu0 %v2400
        %2439 = vmatprep.subr.mxu0 0.0
        %2440 = vmatpush1.msra.mxu0 %v2401
        %2441 = vmatprep.subr.mxu0 0.0
        %2442 = vmatpush1.msra.mxu0 0.0
        %2443 = vmatprep.subr.mxu0 0.0
        %2444 = vmatpush1.msra.mxu0 0.0
        %2445 = vmatprep.subr.mxu0 0.0
        %2446 = vmatpush1.msra.mxu0 0.0
        %2447 = vmatprep.subr.mxu0 0.0
        %2448 = vmatpush1.msra.mxu0 0.0
        %2449 = vmatprep.subr.mxu0 0.0
        %2450 = vmatpush1.msra.mxu0 0.0
        %2451 = vmatprep.subr.mxu0 0.0
        %2452 = vmatpush1.msra.mxu0 0.0
        %2453 = vmatprep.subr.mxu0 0.0
        %2454 = vmatpush1.msra.mxu0 0.0
        %2455 = vmatprep.subr.mxu0 0.0
        %2456 = vmatpush1.msra.mxu0 0.0
        %2457 = vmatprep.subr.mxu0 0.0
        %2458 = vmatpush1.msra.mxu0 0.0
        %2459 = vmatprep.subr.mxu0 0.0
        %2460 = vmatpush1.msra.mxu0 0.0
        %2461 = vmatprep.subr.mxu0 0.0
        %2462 = vmatpush1.msra.mxu0 0.0
        %2463 = vmatprep.subr.mxu0 0.0
        %2464 = vmatpush1.msra.mxu0 0.0
        %2465 = vmatprep.subr.mxu0 0.0
        %2466 = vmatpush1.msra.mxu0 0.0
        %2467 = vmatprep.subr.mxu0 0.0
        %2468 = vmatpush1.msra.mxu0 0.0
        %2469 = vmatprep.subr.mxu0 0.0
        %2470 = vmatpush1.msra.mxu0 0.0
        %2471 = vmatprep.subr.mxu0 0.0
        %2472 = vmatpush1.msra.mxu0 0.0
        %2473 = vmatprep.mubr.f32.mxu0 0.0
        %2474 = vmatmul.mubr.f32.gmra.mrb[0].mxu0 %v2383
        %v2475 = vpop.f32.mrb[0].mxu0
        %v2476 = vadd.f32 %v2407, %v2475
        %v2477 = vpop.f32.mrb[0].mxu0
        %2478 = vmatprep.mubr.f32.mxu0 0.0
        %2479 = vmatmul.mubr.f32.gmra.mrb[0].mxu0 %v2384
        %v2480 = vpop.f32.mrb[0].mxu0
        %v2481 = vadd.f32 %v2407, %v2480
        %v2482 = vpop.f32.mrb[0].mxu0
        %2483 = vmatprep.mubr.f32.mxu0 0.0
        %2484 = vmatmul.mubr.f32.gmra.mrb[0].mxu0 %v2385
        %v2485 = vpop.f32.mrb[0].mxu0
        %v2486 = vadd.f32 %v2407, %v2485
        %v2487 = vpop.f32.mrb[0].mxu0
        %2488 = vdwg.mxu0
        %v2489 = vadd.f32 %v2143, %v2476
        %v2490 = vadd.f32 %v2144, %v2481
        %v2491 = vadd.f32 %v2145, %v2486
        %2492 = vst.msk [vmem:[#allocation2] sm:$0xff] %vm866, %v2489
        %2493 = vst.msk [vmem:[#allocation2 + $0x8] sm:$0xff] %vm866, %v2490
        %2494 = vst.msk [vmem:[#allocation2 + $0x10] sm:$0xff] %vm866, %v2491
        %p2495 = scmp.eq.s32.totalorder %s36, 1
        // Predicated region
        $region93: #{tpu_custom_call.1} parent=87 // pred_check
          %p2496 = pneg %p2495
        $region94: #{tpu_custom_call.1} parent=87 // pred_check_branch
          %2498 = sbr.rel (%p2496) target = $region96
        $region95: #{tpu_custom_call.1} parent=87 // pred_region
          %v2499 = vmul.u32 %v1026, 3
          %vm2500 = vcmp.eq.s32.totalorder %v1030, %v2499
          %v2501 = vsel %vm2500, 1, 0
          %v2502 = vcvt.s32.f32 %v2501
          %v2504 = vsel %vm1142, %v2502, 0
          %2506 = vmatprep.subr.mxu0 0.0
          %2507 = vmatpush1.msra.mxu0 %v2489
          %2508 = vmatprep.subr.mxu0 0.0
          %2509 = vmatpush1.msra.mxu0 %v2490
          %2510 = vmatprep.subr.mxu0 0.0
          %2511 = vmatpush1.msra.mxu0 %v2491
          %2512 = vmatprep.subr.mxu0 0.0
          %2513 = vmatpush1.msra.mxu0 0.0
          %2514 = vmatprep.subr.mxu0 0.0
          %2515 = vmatpush1.msra.mxu0 0.0
          %2516 = vmatprep.subr.mxu0 0.0
          %2517 = vmatpush1.msra.mxu0 0.0
          %2518 = vmatprep.subr.mxu0 0.0
          %2519 = vmatpush1.msra.mxu0 0.0
          %2520 = vmatprep.subr.mxu0 0.0
          %2521 = vmatpush1.msra.mxu0 0.0
          %2522 = vmatprep.subr.mxu0 0.0
          %2523 = vmatpush1.msra.mxu0 0.0
          %2524 = vmatprep.subr.mxu0 0.0
          %2525 = vmatpush1.msra.mxu0 0.0
          %2526 = vmatprep.subr.mxu0 0.0
          %2527 = vmatpush1.msra.mxu0 0.0
          %2528 = vmatprep.subr.mxu0 0.0
          %2529 = vmatpush1.msra.mxu0 0.0
          %2530 = vmatprep.subr.mxu0 0.0
          %2531 = vmatpush1.msra.mxu0 0.0
          %2532 = vmatprep.subr.mxu0 0.0
          %2533 = vmatpush1.msra.mxu0 0.0
          %2534 = vmatprep.subr.mxu0 0.0
          %2535 = vmatpush1.msra.mxu0 0.0
          %2536 = vmatprep.subr.mxu0 0.0
          %2537 = vmatpush1.msra.mxu0 0.0
          %2538 = vmatprep.subr.mxu0 0.0
          %2539 = vmatpush1.msra.mxu0 0.0
          %2540 = vmatprep.subr.mxu0 0.0
          %2541 = vmatpush1.msra.mxu0 0.0
          %2542 = vmatprep.subr.mxu0 0.0
          %2543 = vmatpush1.msra.mxu0 0.0
          %2544 = vmatprep.subr.mxu0 0.0
          %2545 = vmatpush1.msra.mxu0 0.0
          %2546 = vmatprep.subr.mxu0 0.0
          %2547 = vmatpush1.msra.mxu0 0.0
          %2548 = vmatprep.subr.mxu0 0.0
          %2549 = vmatpush1.msra.mxu0 0.0
          %2550 = vmatprep.subr.mxu0 0.0
          %2551 = vmatpush1.msra.mxu0 0.0
          %2552 = vmatprep.subr.mxu0 0.0
          %2553 = vmatpush1.msra.mxu0 0.0
          %2554 = vmatprep.subr.mxu0 0.0
          %2555 = vmatpush1.msra.mxu0 0.0
          %2556 = vmatprep.subr.mxu0 0.0
          %2557 = vmatpush1.msra.mxu0 0.0
          %2558 = vmatprep.subr.mxu0 0.0
          %2559 = vmatpush1.msra.mxu0 0.0
          %2560 = vmatprep.subr.mxu0 0.0
          %2561 = vmatpush1.msra.mxu0 0.0
          %2562 = vmatprep.subr.mxu0 0.0
          %2563 = vmatpush1.msra.mxu0 0.0
          %2564 = vmatprep.subr.mxu0 0.0
          %2565 = vmatpush1.msra.mxu0 0.0
          %2566 = vmatprep.subr.mxu0 0.0
          %2567 = vmatpush1.msra.mxu0 0.0
          %2568 = vmatprep.subr.mxu0 0.0
          %2569 = vmatpush1.msra.mxu0 0.0
          %2570 = vmatprep.mubr.f32.mxu0 0.0
          %2571 = vmatmul.mubr.f32.gmra.mrb[0].mxu0 %v2504
          %v2572 = vpop.f32.mrb[0].mxu0
          %v2573 = vadd.f32 0.0, %v2572
          %v2574 = vpop.f32.mrb[0].mxu0
          %2575 = vdwg.mxu0
          %v2576 = vld [vmem:[%s15] sm:$0xff]
          %v2577 = vld [vmem:[%s15 + $0x8] sm:$0xff]
          %v2578 = vld [vmem:[%s15 + $0x10] sm:$0xff]
          %v2579 = vld [vmem:[%s15 + $0x18] sm:$0xff]
          %v2580 = vld [vmem:[%s16] sm:$0x1]
          %v2582 = vlaneseq
          %v2583 = vshrl.u32 %v2582, 7
          %v2584 = vsub.s32 0, %v2583
          %v2585 = vrot.slane %v2580, %v2584
          %v2588 = vsel %vm866, %v2573, 0
          %2590 = vmatprep.subr.mxu0 0.0
          %2591 = vmatpush1.msra.mxu0 %v2576
          %2592 = vmatprep.subr.mxu0 0.0
          %2593 = vmatpush1.msra.mxu0 %v2577
          %2594 = vmatprep.subr.mxu0 0.0
          %2595 = vmatpush1.msra.mxu0 %v2578
          %2596 = vmatprep.subr.mxu0 0.0
          %2597 = vmatpush1.msra.mxu0 %v2579
          %2598 = vmatprep.subr.mxu0 0.0
          %2599 = vmatpush1.msra.mxu0 0.0
          %2600 = vmatprep.subr.mxu0 0.0
          %2601 = vmatpush1.msra.mxu0 0.0
          %2602 = vmatprep.subr.mxu0 0.0
          %2603 = vmatpush1.msra.mxu0 0.0
          %2604 = vmatprep.subr.mxu0 0.0
          %2605 = vmatpush1.msra.mxu0 0.0
          %2606 = vmatprep.subr.mxu0 0.0
          %2607 = vmatpush1.msra.mxu0 0.0
          %2608 = vmatprep.subr.mxu0 0.0
          %2609 = vmatpush1.msra.mxu0 0.0
          %2610 = vmatprep.subr.mxu0 0.0
          %2611 = vmatpush1.msra.mxu0 0.0
          %2612 = vmatprep.subr.mxu0 0.0
          %2613 = vmatpush1.msra.mxu0 0.0
          %2614 = vmatprep.subr.mxu0 0.0
          %2615 = vmatpush1.msra.mxu0 0.0
          %2616 = vmatprep.subr.mxu0 0.0
          %2617 = vmatpush1.msra.mxu0 0.0
          %2618 = vmatprep.subr.mxu0 0.0
          %2619 = vmatpush1.msra.mxu0 0.0
          %2620 = vmatprep.subr.mxu0 0.0
          %2621 = vmatpush1.msra.mxu0 0.0
          %2622 = vmatprep.subr.mxu0 0.0
          %2623 = vmatpush1.msra.mxu0 0.0
          %2624 = vmatprep.subr.mxu0 0.0
          %2625 = vmatpush1.msra.mxu0 0.0
          %2626 = vmatprep.subr.mxu0 0.0
          %2627 = vmatpush1.msra.mxu0 0.0
          %2628 = vmatprep.subr.mxu0 0.0
          %2629 = vmatpush1.msra.mxu0 0.0
          %2630 = vmatprep.subr.mxu0 0.0
          %2631 = vmatpush1.msra.mxu0 0.0
          %2632 = vmatprep.subr.mxu0 0.0
          %2633 = vmatpush1.msra.mxu0 0.0
          %2634 = vmatprep.subr.mxu0 0.0
          %2635 = vmatpush1.msra.mxu0 0.0
          %2636 = vmatprep.subr.mxu0 0.0
          %2637 = vmatpush1.msra.mxu0 0.0
          %2638 = vmatprep.subr.mxu0 0.0
          %2639 = vmatpush1.msra.mxu0 0.0
          %2640 = vmatprep.subr.mxu0 0.0
          %2641 = vmatpush1.msra.mxu0 0.0
          %2642 = vmatprep.subr.mxu0 0.0
          %2643 = vmatpush1.msra.mxu0 0.0
          %2644 = vmatprep.subr.mxu0 0.0
          %2645 = vmatpush1.msra.mxu0 0.0
          %2646 = vmatprep.subr.mxu0 0.0
          %2647 = vmatpush1.msra.mxu0 0.0
          %2648 = vmatprep.subr.mxu0 0.0
          %2649 = vmatpush1.msra.mxu0 0.0
          %2650 = vmatprep.subr.mxu0 0.0
          %2651 = vmatpush1.msra.mxu0 0.0
          %2652 = vmatprep.subr.mxu0 0.0
          %2653 = vmatpush1.msra.mxu0 0.0
          %2654 = vmatprep.mubr.f32.mxu0 0.0
          %2655 = vmatmul.mubr.f32.gmra.mrb[0].mxu0 %v2588
          %v2656 = vpop.f32.mrb[0].mxu0
          %v2657 = vadd.f32 %v2585, %v2656
          %v2658 = vpop.f32.mrb[0].mxu0
          %2659 = vdwg.mxu0
          %2660 = vst [vmem:[%s701] sm:$0xff] %v2657
        $region96: #{tpu_custom_call.1} parent=87 // pred_fallthru
          _
        %s2661 = sand.u32 %s473, 1
        %s2662 = scalar_lea.sflag [#allocation4], %s2661
        %s2663 = sand.u32 %s473, 1
        %s2664 = smul.addr %s2663, 8
        %s2665 = scalar_lea.vmem [#allocation3], %s2664
        // Predicated region
        $region97: #{tpu_custom_call.1} parent=87 // pred_check
          %p2666 = pneg %p483
        $region98: #{tpu_custom_call.1} parent=87 // pred_check_branch
          %2668 = sbr.rel (%p2666) target = $region100
        $region99: #{tpu_custom_call.1} parent=87 // pred_region
          %s2670 = ssub.s32 128, 128
          %2671 = vsyncadd %s2662, %s2670
          %s2672 = smul.addr %s35, 128
          %s2673 = scalar_lea.hbm %s17, %s2672
          %s2675 = sshll.u32 %s2665, 4
          %s2676 = int_to_ptr.vmem [resolvable:$true] %s2675
          %2678 = dma.vmem_to_hbm [thread:$0]  %s2676, 128, %s2673, %s2662
        $region100: #{tpu_custom_call.1} parent=87 // pred_fallthru
          _
      $region88: #{tpu_custom_call.1} parent=5 // pred_fallthru
        _
      %p2679 = scmp.le.s32.totalorder 2, %s26
      // Predicated region
      $region101: #{tpu_custom_call.1} parent=5 // pred_check
        %p2680 = pneg %p2679
      $region102: #{tpu_custom_call.1} parent=5 // pred_check_branch
        %2682 = sbr.rel (%p2680) target = $region104
      $region103: #{tpu_custom_call.1} parent=5 // pred_region
        %s2683 = ssub.s32 %s26, 2
        // Predicated region
        $region105: #{tpu_custom_call.1} parent=103 // pred_check
          %p2684 = pneg %p489
        $region106: #{tpu_custom_call.1} parent=103 // pred_check_branch
          %2686 = sbr.rel (%p2684) target = $region108
        $region107: #{tpu_custom_call.1} parent=103 // pred_region
          %s2687 = sand.u32 %s474, 1
          %s2688 = scalar_lea.sflag [#allocation4], %s2687
          %s2689 = sand.u32 %s474, 1
          %s2690 = smul.addr %s2689, 8
          %s2691 = scalar_lea.vmem [#allocation3], %s2690
          %2692 = dma.done %s2688, 128
        $region108: #{tpu_custom_call.1} parent=103 // pred_fallthru
          _
      $region104: #{tpu_custom_call.1} parent=5 // pred_fallthru
        _
    $region6: #{tpu_custom_call.1} parent=1 // loop_footer
      %s30 = sadd.s32 1, %s26
    $region7: #{tpu_custom_call.1} parent=1 // loop_footer_branch
      %25 = sbr.rel target = $region3
    $region8: #{tpu_custom_call.1} parent=1 // loop_exit
      _
    %2693 = vsyncpa [#allocation4], 1
    %s2694 = scalar_lea.sflag [#allocation4], 1
    %2695 = vsyncpa %s2694, 1

</llo_original>
